<compile_context>
chip_gen: v7x
topology: tpu7x:2x2x1
jax: 0.10.0
libtpu: 0.0.40
codegen_flags: <defaults>
</compile_context>

<pallas_src>
import jax
import jax.numpy as jnp
import numpy as np
from jax.experimental import pallas as pl
from jax.experimental.pallas import tpu as pltpu

SIZE = 15
CIN = 8
C1, C2, C3 = 256, 32, 16
K = 3
L1, L2, L3 = SIZE - 2, SIZE - 4, SIZE - 6     # 13, 11, 9
EPS = 1e-5


def cnn_kernel(x_ref,
               w1_ref, b1_ref,
               w2_ref, b2_ref,
               w3_ref, b3_ref,
               wfca_ref, wfcb_ref, bfc_ref,
               out_ref):
    """One batch tile.  x_ref: (L1, BT, 3*CIN) bf16, position-major im2col input."""
    w1 = w1_ref[...]            # (3*CIN, C1) bf16  (BN1 folded in)
    b1 = b1_ref[...]            # (1, C1) f32
    b2 = b2_ref[...]            # (1, C2) f32
    b3 = b3_ref[...]            # (1, C3) f32
    wfca = wfca_ref[...]        # (C2, 2) bf16
    wfcb = wfcb_ref[...]        # (C3, 2) bf16
    bfc = bfc_ref[...]          # (1, 2) f32

    # ---- conv1 (+ folded BN1) + ReLU ---------------------------------------
    # One (BT, 24) x (24, 256) matmul per output position; identical RHS across
    # positions lets the MXU keep the weights staged.
    h1 = []
    for l in range(L1):
        a = jnp.dot(x_ref[l], w1, preferred_element_type=jnp.float32)
        h1.append(jnp.maximum(a + b1, 0.0).astype(jnp.bfloat16))      # (BT, C1)

    # ---- conv2 (+ folded BN2) + ReLU ---------------------------------------
    # k-outer / position-inner: each tap's (C1, C2) weight feeds 11 consecutive
    # (BT, 256) x (256, 32) matmuls.
    acc2 = [None] * L2
    for k in range(K):
        w2k = w2_ref[k]                                               # (C1, C2) bf16
        for j in range(L2):
            d = jnp.dot(h1[j + k], w2k, preferred_element_type=jnp.float32)
            acc2[j] = d if k == 0 else acc2[j] + d
    h2 = [jnp.maximum(a + b2, 0.0) for a in acc2]                     # (BT, C2) f32

    # max_pool1d(kernel_size=SIZE-4) == max over the whole conv2 length.
    x1 = h2[0]
    for j in range(1, L2):
        x1 = jnp.maximum(x1, h2[j])                                   # (BT, C2)

    # ---- conv3 (+ folded BN3) + ReLU ---------------------------------------
    h2b = [h.astype(jnp.bfloat16) for h in h2]
    acc3 = [None] * L3
    for k in range(K):
        w3k = w3_ref[k]                                               # (C2, C3) bf16
        for j in range(L3):
            d = jnp.dot(h2b[j + k], w3k, preferred_element_type=jnp.float32)
            acc3[j] = d if k == 0 else acc3[j] + d
    h3 = [jnp.maximum(a + b3, 0.0) for a in acc3]                     # (BT, C3) f32

    # max_pool1d(kernel_size=SIZE-6)
    x2 = h3[0]
    for j in range(1, L3):
        x2 = jnp.maximum(x2, h3[j])                                   # (BT, C3)

    # ---- fc on concat([x1, x2]) as a split matmul; one dense block store ----
    out = (jnp.dot(x1.astype(jnp.bfloat16), wfca, preferred_element_type=jnp.float32)
           + jnp.dot(x2.astype(jnp.bfloat16), wfcb, preferred_element_type=jnp.float32)
           + bfc)
    out_ref[...] = out                                                # (BT, 2)


def _fold_bn(gamma, beta, mean, var):
    scale = gamma / jnp.sqrt(var + EPS)
    shift = beta - mean * scale
    return scale, shift


def _round_up(x, m):
    return (x + m - 1) // m * m


def cnn_forward(x_ncl, params, bt=None):
    """x_ncl: (B, 8, 15) float32 (PyTorch NCL layout). Returns (B, 2) float32."""
    B = x_ncl.shape[0]
    if bt is None:
        bt = min(256, _round_up(max(B, 1), 8))    # biggest sane tile; VMEM use is tiny
    bt = _round_up(bt, 8)
    Bp = _round_up(max(B, 1), bt)

    # Fold eval-mode BatchNorm into the conv weights / biases.
    s1, t1 = _fold_bn(params['g1'], params['be1'], params['m1'], params['v1'])
    s2, t2 = _fold_bn(params['g2'], params['be2'], params['m2'], params['v2'])
    s3, t3 = _fold_bn(params['g3'], params['be3'], params['m3'], params['v3'])

    w1 = (params['w1'] * s1[None, None, :]).reshape(K * CIN, C1).astype(jnp.bfloat16)
    b1 = (params['b1'] * s1[None, :] + t1[None, :]).astype(jnp.float32)       # (1, C1)
    w2 = (params['w2'] * s2[None, None, :]).astype(jnp.bfloat16)              # (3, C1, C2)
    b2 = (params['b2'] * s2[None, :] + t2[None, :]).astype(jnp.float32)       # (1, C2)
    w3 = (params['w3'] * s3[None, None, :]).astype(jnp.bfloat16)              # (3, C2, C3)
    b3 = (params['b3'] * s3[None, :] + t3[None, :]).astype(jnp.float32)       # (1, C3)
    wfca = params['wfc'][:C2].astype(jnp.bfloat16)                            # (C2, 2)
    wfcb = params['wfc'][C2:].astype(jnp.bfloat16)                            # (C3, 2)
    bfc = params['bfc'].astype(jnp.float32)                                   # (1, 2)

    # NCL -> NLC, pad batch to a tile multiple, conv1 im2col, position-major so
    # the kernel indexes output positions along the free leading axis.
    xt = jnp.transpose(x_ncl, (0, 2, 1)).astype(jnp.float32)                  # (B, 15, 8)
    xt = jnp.pad(xt, ((0, Bp - B), (0, 0), (0, 0)))
    xcol = jnp.concatenate([xt[:, k:k + L1, :] for k in range(K)], axis=2)    # (Bp, 13, 24)
    xpm = jnp.transpose(xcol, (1, 0, 2)).astype(jnp.bfloat16)                 # (13, Bp, 24)

    def const(shape):
        return pl.BlockSpec(shape, lambda i, _n=len(shape): (0,) * _n)

    out = pl.pallas_call(
        cnn_kernel,
        out_shape=jax.ShapeDtypeStruct((Bp, 2), jnp.float32),
        grid=(Bp // bt,),
        in_specs=[
            pl.BlockSpec((L1, bt, K * CIN), lambda i: (0, i, 0)),   # x: tiled over batch
            const(w1.shape), const(b1.shape),
            const(w2.shape), const(b2.shape),
            const(w3.shape), const(b3.shape),
            const(wfca.shape), const(wfcb.shape), const(bfc.shape),
        ],
        out_specs=pl.BlockSpec((bt, 2), lambda i: (i, 0)),
        compiler_params=pltpu.CompilerParams(
            dimension_semantics=("parallel",)),
    )(xpm, w1, b1, w2, b2, w3, b3, wfca, wfcb, bfc)
    return out[:B]


def make_params(key):
    ks = jax.random.split(key, 20)

    def nrm(k, shape, scale):
        return scale * jax.random.normal(k, shape, jnp.float32)

    p = {}
    p['w1'] = nrm(ks[0], (3, CIN, C1), 1.0 / np.sqrt(3 * CIN))
    p['b1'] = nrm(ks[1], (1, C1), 0.1)
    p['w2'] = nrm(ks[2], (3, C1, C2), 1.0 / np.sqrt(3 * C1))
    p['b2'] = nrm(ks[3], (1, C2), 0.1)
    p['w3'] = nrm(ks[4], (3, C2, C3), 1.0 / np.sqrt(3 * C2))
    p['b3'] = nrm(ks[5], (1, C3), 0.1)
    p['wfc'] = nrm(ks[6], (C2 + C3, 2), 1.0 / np.sqrt(C2 + C3))
    p['bfc'] = nrm(ks[7], (1, 2), 0.1)
    # BatchNorm (eval-mode running statistics)
    p['g1'] = 1.0 + nrm(ks[8], (C1,), 0.1)
    p['be1'] = nrm(ks[9], (C1,), 0.1)
    p['m1'] = nrm(ks[10], (C1,), 0.1)
    p['v1'] = 1.0 + 0.1 * jnp.abs(jax.random.normal(ks[11], (C1,), jnp.float32))
    p['g2'] = 1.0 + nrm(ks[12], (C2,), 0.1)
    p['be2'] = nrm(ks[13], (C2,), 0.1)
    p['m2'] = nrm(ks[14], (C2,), 0.1)
    p['v2'] = 1.0 + 0.1 * jnp.abs(jax.random.normal(ks[15], (C2,), jnp.float32))
    p['g3'] = 1.0 + nrm(ks[16], (C3,), 0.1)
    p['be3'] = nrm(ks[17], (C3,), 0.1)
    p['m3'] = nrm(ks[18], (C3,), 0.1)
    p['v3'] = 1.0 + 0.1 * jnp.abs(jax.random.normal(ks[19], (C3,), jnp.float32))
    return p


def reference_forward(x_ncl, p):
    """Pure-JAX f32 reference mirroring the PyTorch CNN_ forward (eval-mode BN)."""
    def conv1d(a, w, b):   # a: (B, Cin, L), w: (K, Cin, Cout), b: (1, Cout)
        kk = w.shape[0]
        Lo = a.shape[-1] - kk + 1
        out = jnp.zeros((a.shape[0], w.shape[2], Lo), jnp.float32) + b[0][None, :, None]
        for k in range(kk):
            out = out + jnp.einsum('bcl,cd->bdl', a[:, :, k:k + Lo], w[k])
        return out

    def bn(a, g, be, m, v):
        return ((a - m[None, :, None]) / jnp.sqrt(v[None, :, None] + EPS)
                * g[None, :, None] + be[None, :, None])

    h = jax.nn.relu(bn(conv1d(x_ncl, p['w1'], p['b1']),
                       p['g1'], p['be1'], p['m1'], p['v1']))
    h = jax.nn.relu(bn(conv1d(h, p['w2'], p['b2']),
                       p['g2'], p['be2'], p['m2'], p['v2']))
    x1 = jnp.max(h, axis=-1)                       # max_pool1d(k=SIZE-4)
    h = jax.nn.relu(bn(conv1d(h, p['w3'], p['b3']),
                       p['g3'], p['be3'], p['m3'], p['v3']))
    x2 = jnp.max(h, axis=-1)                       # max_pool1d(k=SIZE-6)
    feat = jnp.concatenate([x1, x2], axis=1)       # (B, 48)
    return feat @ p['wfc'] + p['bfc']


if __name__ == "__main__":
    key = jax.random.PRNGKey(0)
    kx, kp = jax.random.split(key)
    params = make_params(kp)

    # Small demo batch, explicit tile of 16 -> a 4-step batch grid.
    B = 64
    x = jax.random.normal(kx, (B, CIN, SIZE), jnp.float32)   # NCL, like PyTorch
    out = cnn_forward(x, params, bt=16)
    jax.block_until_ready(out)
    ref = reference_forward(x, params)
    assert out.shape == (B, 2)
    np.testing.assert_allclose(np.asarray(out), np.asarray(ref), rtol=2e-2, atol=2e-2)

    # Also exercise the batch-padding path (B not a multiple of the tile).
    x2 = jax.random.normal(jax.random.PRNGKey(1), (2, CIN, SIZE), jnp.float32)
    out2 = cnn_forward(x2, params)
    jax.block_until_ready(out2)
    ref2 = reference_forward(x2, params)
    np.testing.assert_allclose(np.asarray(out2), np.asarray(ref2), rtol=2e-2, atol=2e-2)

    print("KERNEL_OK")
</pallas_src>

<mosaic_0001>
module attributes {stable_mosaic.version = 11 : i64} {
  func.func @cnn_kernel(%arg0: i32, %arg1: memref<13x16x24xbf16, #tpu.memory_space<vmem>>, %arg2: memref<24x256xbf16, #tpu.memory_space<vmem>>, %arg3: memref<1x256xf32, #tpu.memory_space<vmem>>, %arg4: memref<3x256x32xbf16, #tpu.memory_space<vmem>>, %arg5: memref<1x32xf32, #tpu.memory_space<vmem>>, %arg6: memref<3x32x16xbf16, #tpu.memory_space<vmem>>, %arg7: memref<1x16xf32, #tpu.memory_space<vmem>>, %arg8: memref<32x2xbf16, #tpu.memory_space<vmem>>, %arg9: memref<16x2xbf16, #tpu.memory_space<vmem>>, %arg10: memref<1x2xf32, #tpu.memory_space<vmem>>, %arg11: memref<16x2xf32, #tpu.memory_space<vmem>>) attributes {dimension_semantics = [#tpu.dimension_semantics<parallel>], iteration_bounds = array<i64: 4>, scalar_prefetch = 0 : i64, scratch_operands = 0 : i64, tpu.core_type = #tpu.core_type<tc>, window_params = [{transform_indices = @transform_0, window_bounds = array<i64: 13, 16, 24>}, {pipeline_mode = #tpu.pipeline_mode<synchronous>, transform_indices = @transform_1, window_bounds = array<i64: 24, 256>}, {pipeline_mode = #tpu.pipeline_mode<synchronous>, transform_indices = @transform_2, window_bounds = array<i64: 1, 256>}, {pipeline_mode = #tpu.pipeline_mode<synchronous>, transform_indices = @transform_3, window_bounds = array<i64: 3, 256, 32>}, {pipeline_mode = #tpu.pipeline_mode<synchronous>, transform_indices = @transform_4, window_bounds = array<i64: 1, 32>}, {pipeline_mode = #tpu.pipeline_mode<synchronous>, transform_indices = @transform_5, window_bounds = array<i64: 3, 32, 16>}, {pipeline_mode = #tpu.pipeline_mode<synchronous>, transform_indices = @transform_6, window_bounds = array<i64: 1, 16>}, {pipeline_mode = #tpu.pipeline_mode<synchronous>, transform_indices = @transform_7, window_bounds = array<i64: 32, 2>}, {pipeline_mode = #tpu.pipeline_mode<synchronous>, transform_indices = @transform_8, window_bounds = array<i64: 16, 2>}, {pipeline_mode = #tpu.pipeline_mode<synchronous>, transform_indices = @transform_9, window_bounds = array<i64: 1, 2>}, {transform_indices = @transform_10, window_bounds = array<i64: 16, 2>}]} {
    %c0 = arith.constant 0 : index
    %c0_0 = arith.constant 0 : index
    %0 = vector.load %arg2[%c0, %c0_0] : memref<24x256xbf16, #tpu.memory_space<vmem>>, vector<24x256xbf16>
    %c0_1 = arith.constant 0 : index
    %c0_2 = arith.constant 0 : index
    %1 = vector.load %arg3[%c0_1, %c0_2] : memref<1x256xf32, #tpu.memory_space<vmem>>, vector<1x256xf32>
    %c0_3 = arith.constant 0 : index
    %c0_4 = arith.constant 0 : index
    %2 = vector.load %arg5[%c0_3, %c0_4] : memref<1x32xf32, #tpu.memory_space<vmem>>, vector<1x32xf32>
    %c0_5 = arith.constant 0 : index
    %c0_6 = arith.constant 0 : index
    %3 = vector.load %arg7[%c0_5, %c0_6] : memref<1x16xf32, #tpu.memory_space<vmem>>, vector<1x16xf32>
    %c0_7 = arith.constant 0 : index
    %c0_8 = arith.constant 0 : index
    %4 = vector.load %arg8[%c0_7, %c0_8] : memref<32x2xbf16, #tpu.memory_space<vmem>>, vector<32x2xbf16>
    %c0_9 = arith.constant 0 : index
    %c0_10 = arith.constant 0 : index
    %5 = vector.load %arg9[%c0_9, %c0_10] : memref<16x2xbf16, #tpu.memory_space<vmem>>, vector<16x2xbf16>
    %c0_11 = arith.constant 0 : index
    %c0_12 = arith.constant 0 : index
    %6 = vector.load %arg10[%c0_11, %c0_12] : memref<1x2xf32, #tpu.memory_space<vmem>>, vector<1x2xf32>
    %c0_13 = arith.constant 0 : index
    %c0_14 = arith.constant 0 : index
    %c0_15 = arith.constant 0 : index
    %7 = vector.load %arg1[%c0_13, %c0_14, %c0_15] : memref<13x16x24xbf16, #tpu.memory_space<vmem>>, vector<1x16x24xbf16>
    %8 = vector.shape_cast %7 : vector<1x16x24xbf16> to vector<16x24xbf16>
    %cst = arith.constant dense<0.000000e+00> : vector<16x256xf32>
    %9 = tpu.matmul %8, %0, %cst {dimension_numbers = #tpu.dot_dimension_numbers<[1], [0], [0], [1], [0, 0, 1, 1], [], []>} : vector<16x24xbf16>, vector<24x256xbf16>, vector<16x256xf32> -> vector<16x256xf32>
    %10 = vector.broadcast %1 : vector<1x256xf32> to vector<16x256xf32>
    %11 = arith.addf %9, %10 : vector<16x256xf32>
    %cst_16 = arith.constant 0.000000e+00 : f32
    %12 = vector.broadcast %cst_16 : f32 to vector<16x256xf32>
    %13 = arith.maximumf %11, %12 : vector<16x256xf32>
    %14 = arith.truncf %13 : vector<16x256xf32> to vector<16x256xbf16>
    %c1 = arith.constant 1 : index
    %c0_17 = arith.constant 0 : index
    %c0_18 = arith.constant 0 : index
    %15 = vector.load %arg1[%c1, %c0_17, %c0_18] : memref<13x16x24xbf16, #tpu.memory_space<vmem>>, vector<1x16x24xbf16>
    %16 = vector.shape_cast %15 : vector<1x16x24xbf16> to vector<16x24xbf16>
    %cst_19 = arith.constant dense<0.000000e+00> : vector<16x256xf32>
    %17 = tpu.matmul %16, %0, %cst_19 {dimension_numbers = #tpu.dot_dimension_numbers<[1], [0], [0], [1], [0, 0, 1, 1], [], []>} : vector<16x24xbf16>, vector<24x256xbf16>, vector<16x256xf32> -> vector<16x256xf32>
    %18 = vector.broadcast %1 : vector<1x256xf32> to vector<16x256xf32>
    %19 = arith.addf %17, %18 : vector<16x256xf32>
    %cst_20 = arith.constant 0.000000e+00 : f32
    %20 = vector.broadcast %cst_20 : f32 to vector<16x256xf32>
    %21 = arith.maximumf %19, %20 : vector<16x256xf32>
    %22 = arith.truncf %21 : vector<16x256xf32> to vector<16x256xbf16>
    %c2 = arith.constant 2 : index
    %c0_21 = arith.constant 0 : index
    %c0_22 = arith.constant 0 : index
    %23 = vector.load %arg1[%c2, %c0_21, %c0_22] : memref<13x16x24xbf16, #tpu.memory_space<vmem>>, vector<1x16x24xbf16>
    %24 = vector.shape_cast %23 : vector<1x16x24xbf16> to vector<16x24xbf16>
    %cst_23 = arith.constant dense<0.000000e+00> : vector<16x256xf32>
    %25 = tpu.matmul %24, %0, %cst_23 {dimension_numbers = #tpu.dot_dimension_numbers<[1], [0], [0], [1], [0, 0, 1, 1], [], []>} : vector<16x24xbf16>, vector<24x256xbf16>, vector<16x256xf32> -> vector<16x256xf32>
    %26 = vector.broadcast %1 : vector<1x256xf32> to vector<16x256xf32>
    %27 = arith.addf %25, %26 : vector<16x256xf32>
    %cst_24 = arith.constant 0.000000e+00 : f32
    %28 = vector.broadcast %cst_24 : f32 to vector<16x256xf32>
    %29 = arith.maximumf %27, %28 : vector<16x256xf32>
    %30 = arith.truncf %29 : vector<16x256xf32> to vector<16x256xbf16>
    %c3 = arith.constant 3 : index
    %c0_25 = arith.constant 0 : index
    %c0_26 = arith.constant 0 : index
    %31 = vector.load %arg1[%c3, %c0_25, %c0_26] : memref<13x16x24xbf16, #tpu.memory_space<vmem>>, vector<1x16x24xbf16>
    %32 = vector.shape_cast %31 : vector<1x16x24xbf16> to vector<16x24xbf16>
    %cst_27 = arith.constant dense<0.000000e+00> : vector<16x256xf32>
    %33 = tpu.matmul %32, %0, %cst_27 {dimension_numbers = #tpu.dot_dimension_numbers<[1], [0], [0], [1], [0, 0, 1, 1], [], []>} : vector<16x24xbf16>, vector<24x256xbf16>, vector<16x256xf32> -> vector<16x256xf32>
    %34 = vector.broadcast %1 : vector<1x256xf32> to vector<16x256xf32>
    %35 = arith.addf %33, %34 : vector<16x256xf32>
    %cst_28 = arith.constant 0.000000e+00 : f32
    %36 = vector.broadcast %cst_28 : f32 to vector<16x256xf32>
    %37 = arith.maximumf %35, %36 : vector<16x256xf32>
    %38 = arith.truncf %37 : vector<16x256xf32> to vector<16x256xbf16>
    %c4 = arith.constant 4 : index
    %c0_29 = arith.constant 0 : index
    %c0_30 = arith.constant 0 : index
    %39 = vector.load %arg1[%c4, %c0_29, %c0_30] : memref<13x16x24xbf16, #tpu.memory_space<vmem>>, vector<1x16x24xbf16>
    %40 = vector.shape_cast %39 : vector<1x16x24xbf16> to vector<16x24xbf16>
    %cst_31 = arith.constant dense<0.000000e+00> : vector<16x256xf32>
    %41 = tpu.matmul %40, %0, %cst_31 {dimension_numbers = #tpu.dot_dimension_numbers<[1], [0], [0], [1], [0, 0, 1, 1], [], []>} : vector<16x24xbf16>, vector<24x256xbf16>, vector<16x256xf32> -> vector<16x256xf32>
    %42 = vector.broadcast %1 : vector<1x256xf32> to vector<16x256xf32>
    %43 = arith.addf %41, %42 : vector<16x256xf32>
    %cst_32 = arith.constant 0.000000e+00 : f32
    %44 = vector.broadcast %cst_32 : f32 to vector<16x256xf32>
    %45 = arith.maximumf %43, %44 : vector<16x256xf32>
    %46 = arith.truncf %45 : vector<16x256xf32> to vector<16x256xbf16>
    %c5 = arith.constant 5 : index
    %c0_33 = arith.constant 0 : index
    %c0_34 = arith.constant 0 : index
    %47 = vector.load %arg1[%c5, %c0_33, %c0_34] : memref<13x16x24xbf16, #tpu.memory_space<vmem>>, vector<1x16x24xbf16>
    %48 = vector.shape_cast %47 : vector<1x16x24xbf16> to vector<16x24xbf16>
    %cst_35 = arith.constant dense<0.000000e+00> : vector<16x256xf32>
    %49 = tpu.matmul %48, %0, %cst_35 {dimension_numbers = #tpu.dot_dimension_numbers<[1], [0], [0], [1], [0, 0, 1, 1], [], []>} : vector<16x24xbf16>, vector<24x256xbf16>, vector<16x256xf32> -> vector<16x256xf32>
    %50 = vector.broadcast %1 : vector<1x256xf32> to vector<16x256xf32>
    %51 = arith.addf %49, %50 : vector<16x256xf32>
    %cst_36 = arith.constant 0.000000e+00 : f32
    %52 = vector.broadcast %cst_36 : f32 to vector<16x256xf32>
    %53 = arith.maximumf %51, %52 : vector<16x256xf32>
    %54 = arith.truncf %53 : vector<16x256xf32> to vector<16x256xbf16>
    %c6 = arith.constant 6 : index
    %c0_37 = arith.constant 0 : index
    %c0_38 = arith.constant 0 : index
    %55 = vector.load %arg1[%c6, %c0_37, %c0_38] : memref<13x16x24xbf16, #tpu.memory_space<vmem>>, vector<1x16x24xbf16>
    %56 = vector.shape_cast %55 : vector<1x16x24xbf16> to vector<16x24xbf16>
    %cst_39 = arith.constant dense<0.000000e+00> : vector<16x256xf32>
    %57 = tpu.matmul %56, %0, %cst_39 {dimension_numbers = #tpu.dot_dimension_numbers<[1], [0], [0], [1], [0, 0, 1, 1], [], []>} : vector<16x24xbf16>, vector<24x256xbf16>, vector<16x256xf32> -> vector<16x256xf32>
    %58 = vector.broadcast %1 : vector<1x256xf32> to vector<16x256xf32>
    %59 = arith.addf %57, %58 : vector<16x256xf32>
    %cst_40 = arith.constant 0.000000e+00 : f32
    %60 = vector.broadcast %cst_40 : f32 to vector<16x256xf32>
    %61 = arith.maximumf %59, %60 : vector<16x256xf32>
    %62 = arith.truncf %61 : vector<16x256xf32> to vector<16x256xbf16>
    %c7 = arith.constant 7 : index
    %c0_41 = arith.constant 0 : index
    %c0_42 = arith.constant 0 : index
    %63 = vector.load %arg1[%c7, %c0_41, %c0_42] : memref<13x16x24xbf16, #tpu.memory_space<vmem>>, vector<1x16x24xbf16>
    %64 = vector.shape_cast %63 : vector<1x16x24xbf16> to vector<16x24xbf16>
    %cst_43 = arith.constant dense<0.000000e+00> : vector<16x256xf32>
    %65 = tpu.matmul %64, %0, %cst_43 {dimension_numbers = #tpu.dot_dimension_numbers<[1], [0], [0], [1], [0, 0, 1, 1], [], []>} : vector<16x24xbf16>, vector<24x256xbf16>, vector<16x256xf32> -> vector<16x256xf32>
    %66 = vector.broadcast %1 : vector<1x256xf32> to vector<16x256xf32>
    %67 = arith.addf %65, %66 : vector<16x256xf32>
    %cst_44 = arith.constant 0.000000e+00 : f32
    %68 = vector.broadcast %cst_44 : f32 to vector<16x256xf32>
    %69 = arith.maximumf %67, %68 : vector<16x256xf32>
    %70 = arith.truncf %69 : vector<16x256xf32> to vector<16x256xbf16>
    %c8 = arith.constant 8 : index
    %c0_45 = arith.constant 0 : index
    %c0_46 = arith.constant 0 : index
    %71 = vector.load %arg1[%c8, %c0_45, %c0_46] : memref<13x16x24xbf16, #tpu.memory_space<vmem>>, vector<1x16x24xbf16>
    %72 = vector.shape_cast %71 : vector<1x16x24xbf16> to vector<16x24xbf16>
    %cst_47 = arith.constant dense<0.000000e+00> : vector<16x256xf32>
    %73 = tpu.matmul %72, %0, %cst_47 {dimension_numbers = #tpu.dot_dimension_numbers<[1], [0], [0], [1], [0, 0, 1, 1], [], []>} : vector<16x24xbf16>, vector<24x256xbf16>, vector<16x256xf32> -> vector<16x256xf32>
    %74 = vector.broadcast %1 : vector<1x256xf32> to vector<16x256xf32>
    %75 = arith.addf %73, %74 : vector<16x256xf32>
    %cst_48 = arith.constant 0.000000e+00 : f32
    %76 = vector.broadcast %cst_48 : f32 to vector<16x256xf32>
    %77 = arith.maximumf %75, %76 : vector<16x256xf32>
    %78 = arith.truncf %77 : vector<16x256xf32> to vector<16x256xbf16>
    %c9 = arith.constant 9 : index
    %c0_49 = arith.constant 0 : index
    %c0_50 = arith.constant 0 : index
    %79 = vector.load %arg1[%c9, %c0_49, %c0_50] : memref<13x16x24xbf16, #tpu.memory_space<vmem>>, vector<1x16x24xbf16>
    %80 = vector.shape_cast %79 : vector<1x16x24xbf16> to vector<16x24xbf16>
    %cst_51 = arith.constant dense<0.000000e+00> : vector<16x256xf32>
    %81 = tpu.matmul %80, %0, %cst_51 {dimension_numbers = #tpu.dot_dimension_numbers<[1], [0], [0], [1], [0, 0, 1, 1], [], []>} : vector<16x24xbf16>, vector<24x256xbf16>, vector<16x256xf32> -> vector<16x256xf32>
    %82 = vector.broadcast %1 : vector<1x256xf32> to vector<16x256xf32>
    %83 = arith.addf %81, %82 : vector<16x256xf32>
    %cst_52 = arith.constant 0.000000e+00 : f32
    %84 = vector.broadcast %cst_52 : f32 to vector<16x256xf32>
    %85 = arith.maximumf %83, %84 : vector<16x256xf32>
    %86 = arith.truncf %85 : vector<16x256xf32> to vector<16x256xbf16>
    %c10 = arith.constant 10 : index
    %c0_53 = arith.constant 0 : index
    %c0_54 = arith.constant 0 : index
    %87 = vector.load %arg1[%c10, %c0_53, %c0_54] : memref<13x16x24xbf16, #tpu.memory_space<vmem>>, vector<1x16x24xbf16>
    %88 = vector.shape_cast %87 : vector<1x16x24xbf16> to vector<16x24xbf16>
    %cst_55 = arith.constant dense<0.000000e+00> : vector<16x256xf32>
    %89 = tpu.matmul %88, %0, %cst_55 {dimension_numbers = #tpu.dot_dimension_numbers<[1], [0], [0], [1], [0, 0, 1, 1], [], []>} : vector<16x24xbf16>, vector<24x256xbf16>, vector<16x256xf32> -> vector<16x256xf32>
    %90 = vector.broadcast %1 : vector<1x256xf32> to vector<16x256xf32>
    %91 = arith.addf %89, %90 : vector<16x256xf32>
    %cst_56 = arith.constant 0.000000e+00 : f32
    %92 = vector.broadcast %cst_56 : f32 to vector<16x256xf32>
    %93 = arith.maximumf %91, %92 : vector<16x256xf32>
    %94 = arith.truncf %93 : vector<16x256xf32> to vector<16x256xbf16>
    %c11 = arith.constant 11 : index
    %c0_57 = arith.constant 0 : index
    %c0_58 = arith.constant 0 : index
    %95 = vector.load %arg1[%c11, %c0_57, %c0_58] : memref<13x16x24xbf16, #tpu.memory_space<vmem>>, vector<1x16x24xbf16>
    %96 = vector.shape_cast %95 : vector<1x16x24xbf16> to vector<16x24xbf16>
    %cst_59 = arith.constant dense<0.000000e+00> : vector<16x256xf32>
    %97 = tpu.matmul %96, %0, %cst_59 {dimension_numbers = #tpu.dot_dimension_numbers<[1], [0], [0], [1], [0, 0, 1, 1], [], []>} : vector<16x24xbf16>, vector<24x256xbf16>, vector<16x256xf32> -> vector<16x256xf32>
    %98 = vector.broadcast %1 : vector<1x256xf32> to vector<16x256xf32>
    %99 = arith.addf %97, %98 : vector<16x256xf32>
    %cst_60 = arith.constant 0.000000e+00 : f32
    %100 = vector.broadcast %cst_60 : f32 to vector<16x256xf32>
    %101 = arith.maximumf %99, %100 : vector<16x256xf32>
    %102 = arith.truncf %101 : vector<16x256xf32> to vector<16x256xbf16>
    %c12 = arith.constant 12 : index
    %c0_61 = arith.constant 0 : index
    %c0_62 = arith.constant 0 : index
    %103 = vector.load %arg1[%c12, %c0_61, %c0_62] : memref<13x16x24xbf16, #tpu.memory_space<vmem>>, vector<1x16x24xbf16>
    %104 = vector.shape_cast %103 : vector<1x16x24xbf16> to vector<16x24xbf16>
    %cst_63 = arith.constant dense<0.000000e+00> : vector<16x256xf32>
    %105 = tpu.matmul %104, %0, %cst_63 {dimension_numbers = #tpu.dot_dimension_numbers<[1], [0], [0], [1], [0, 0, 1, 1], [], []>} : vector<16x24xbf16>, vector<24x256xbf16>, vector<16x256xf32> -> vector<16x256xf32>
    %106 = vector.broadcast %1 : vector<1x256xf32> to vector<16x256xf32>
    %107 = arith.addf %105, %106 : vector<16x256xf32>
    %cst_64 = arith.constant 0.000000e+00 : f32
    %108 = vector.broadcast %cst_64 : f32 to vector<16x256xf32>
    %109 = arith.maximumf %107, %108 : vector<16x256xf32>
    %110 = arith.truncf %109 : vector<16x256xf32> to vector<16x256xbf16>
    %c0_65 = arith.constant 0 : index
    %c0_66 = arith.constant 0 : index
    %c0_67 = arith.constant 0 : index
    %111 = vector.load %arg4[%c0_65, %c0_66, %c0_67] : memref<3x256x32xbf16, #tpu.memory_space<vmem>>, vector<1x256x32xbf16>
    %112 = vector.shape_cast %111 : vector<1x256x32xbf16> to vector<256x32xbf16>
    %cst_68 = arith.constant dense<0.000000e+00> : vector<16x32xf32>
    %113 = tpu.matmul %14, %112, %cst_68 {dimension_numbers = #tpu.dot_dimension_numbers<[1], [0], [0], [1], [0, 0, 1, 1], [], []>} : vector<16x256xbf16>, vector<256x32xbf16>, vector<16x32xf32> -> vector<16x32xf32>
    %cst_69 = arith.constant dense<0.000000e+00> : vector<16x32xf32>
    %114 = tpu.matmul %22, %112, %cst_69 {dimension_numbers = #tpu.dot_dimension_numbers<[1], [0], [0], [1], [0, 0, 1, 1], [], []>} : vector<16x256xbf16>, vector<256x32xbf16>, vector<16x32xf32> -> vector<16x32xf32>
    %cst_70 = arith.constant dense<0.000000e+00> : vector<16x32xf32>
    %115 = tpu.matmul %30, %112, %cst_70 {dimension_numbers = #tpu.dot_dimension_numbers<[1], [0], [0], [1], [0, 0, 1, 1], [], []>} : vector<16x256xbf16>, vector<256x32xbf16>, vector<16x32xf32> -> vector<16x32xf32>
    %cst_71 = arith.constant dense<0.000000e+00> : vector<16x32xf32>
    %116 = tpu.matmul %38, %112, %cst_71 {dimension_numbers = #tpu.dot_dimension_numbers<[1], [0], [0], [1], [0, 0, 1, 1], [], []>} : vector<16x256xbf16>, vector<256x32xbf16>, vector<16x32xf32> -> vector<16x32xf32>
    %cst_72 = arith.constant dense<0.000000e+00> : vector<16x32xf32>
    %117 = tpu.matmul %46, %112, %cst_72 {dimension_numbers = #tpu.dot_dimension_numbers<[1], [0], [0], [1], [0, 0, 1, 1], [], []>} : vector<16x256xbf16>, vector<256x32xbf16>, vector<16x32xf32> -> vector<16x32xf32>
    %cst_73 = arith.constant dense<0.000000e+00> : vector<16x32xf32>
    %118 = tpu.matmul %54, %112, %cst_73 {dimension_numbers = #tpu.dot_dimension_numbers<[1], [0], [0], [1], [0, 0, 1, 1], [], []>} : vector<16x256xbf16>, vector<256x32xbf16>, vector<16x32xf32> -> vector<16x32xf32>
    %cst_74 = arith.constant dense<0.000000e+00> : vector<16x32xf32>
    %119 = tpu.matmul %62, %112, %cst_74 {dimension_numbers = #tpu.dot_dimension_numbers<[1], [0], [0], [1], [0, 0, 1, 1], [], []>} : vector<16x256xbf16>, vector<256x32xbf16>, vector<16x32xf32> -> vector<16x32xf32>
    %cst_75 = arith.constant dense<0.000000e+00> : vector<16x32xf32>
    %120 = tpu.matmul %70, %112, %cst_75 {dimension_numbers = #tpu.dot_dimension_numbers<[1], [0], [0], [1], [0, 0, 1, 1], [], []>} : vector<16x256xbf16>, vector<256x32xbf16>, vector<16x32xf32> -> vector<16x32xf32>
    %cst_76 = arith.constant dense<0.000000e+00> : vector<16x32xf32>
    %121 = tpu.matmul %78, %112, %cst_76 {dimension_numbers = #tpu.dot_dimension_numbers<[1], [0], [0], [1], [0, 0, 1, 1], [], []>} : vector<16x256xbf16>, vector<256x32xbf16>, vector<16x32xf32> -> vector<16x32xf32>
    %cst_77 = arith.constant dense<0.000000e+00> : vector<16x32xf32>
    %122 = tpu.matmul %86, %112, %cst_77 {dimension_numbers = #tpu.dot_dimension_numbers<[1], [0], [0], [1], [0, 0, 1, 1], [], []>} : vector<16x256xbf16>, vector<256x32xbf16>, vector<16x32xf32> -> vector<16x32xf32>
    %cst_78 = arith.constant dense<0.000000e+00> : vector<16x32xf32>
    %123 = tpu.matmul %94, %112, %cst_78 {dimension_numbers = #tpu.dot_dimension_numbers<[1], [0], [0], [1], [0, 0, 1, 1], [], []>} : vector<16x256xbf16>, vector<256x32xbf16>, vector<16x32xf32> -> vector<16x32xf32>
    %c1_79 = arith.constant 1 : index
    %c0_80 = arith.constant 0 : index
    %c0_81 = arith.constant 0 : index
    %124 = vector.load %arg4[%c1_79, %c0_80, %c0_81] : memref<3x256x32xbf16, #tpu.memory_space<vmem>>, vector<1x256x32xbf16>
    %125 = vector.shape_cast %124 : vector<1x256x32xbf16> to vector<256x32xbf16>
    %cst_82 = arith.constant dense<0.000000e+00> : vector<16x32xf32>
    %126 = tpu.matmul %22, %125, %cst_82 {dimension_numbers = #tpu.dot_dimension_numbers<[1], [0], [0], [1], [0, 0, 1, 1], [], []>} : vector<16x256xbf16>, vector<256x32xbf16>, vector<16x32xf32> -> vector<16x32xf32>
    %127 = arith.addf %113, %126 : vector<16x32xf32>
    %cst_83 = arith.constant dense<0.000000e+00> : vector<16x32xf32>
    %128 = tpu.matmul %30, %125, %cst_83 {dimension_numbers = #tpu.dot_dimension_numbers<[1], [0], [0], [1], [0, 0, 1, 1], [], []>} : vector<16x256xbf16>, vector<256x32xbf16>, vector<16x32xf32> -> vector<16x32xf32>
    %129 = arith.addf %114, %128 : vector<16x32xf32>
    %cst_84 = arith.constant dense<0.000000e+00> : vector<16x32xf32>
    %130 = tpu.matmul %38, %125, %cst_84 {dimension_numbers = #tpu.dot_dimension_numbers<[1], [0], [0], [1], [0, 0, 1, 1], [], []>} : vector<16x256xbf16>, vector<256x32xbf16>, vector<16x32xf32> -> vector<16x32xf32>
    %131 = arith.addf %115, %130 : vector<16x32xf32>
    %cst_85 = arith.constant dense<0.000000e+00> : vector<16x32xf32>
    %132 = tpu.matmul %46, %125, %cst_85 {dimension_numbers = #tpu.dot_dimension_numbers<[1], [0], [0], [1], [0, 0, 1, 1], [], []>} : vector<16x256xbf16>, vector<256x32xbf16>, vector<16x32xf32> -> vector<16x32xf32>
    %133 = arith.addf %116, %132 : vector<16x32xf32>
    %cst_86 = arith.constant dense<0.000000e+00> : vector<16x32xf32>
    %134 = tpu.matmul %54, %125, %cst_86 {dimension_numbers = #tpu.dot_dimension_numbers<[1], [0], [0], [1], [0, 0, 1, 1], [], []>} : vector<16x256xbf16>, vector<256x32xbf16>, vector<16x32xf32> -> vector<16x32xf32>
    %135 = arith.addf %117, %134 : vector<16x32xf32>
    %cst_87 = arith.constant dense<0.000000e+00> : vector<16x32xf32>
    %136 = tpu.matmul %62, %125, %cst_87 {dimension_numbers = #tpu.dot_dimension_numbers<[1], [0], [0], [1], [0, 0, 1, 1], [], []>} : vector<16x256xbf16>, vector<256x32xbf16>, vector<16x32xf32> -> vector<16x32xf32>
    %137 = arith.addf %118, %136 : vector<16x32xf32>
    %cst_88 = arith.constant dense<0.000000e+00> : vector<16x32xf32>
    %138 = tpu.matmul %70, %125, %cst_88 {dimension_numbers = #tpu.dot_dimension_numbers<[1], [0], [0], [1], [0, 0, 1, 1], [], []>} : vector<16x256xbf16>, vector<256x32xbf16>, vector<16x32xf32> -> vector<16x32xf32>
    %139 = arith.addf %119, %138 : vector<16x32xf32>
    %cst_89 = arith.constant dense<0.000000e+00> : vector<16x32xf32>
    %140 = tpu.matmul %78, %125, %cst_89 {dimension_numbers = #tpu.dot_dimension_numbers<[1], [0], [0], [1], [0, 0, 1, 1], [], []>} : vector<16x256xbf16>, vector<256x32xbf16>, vector<16x32xf32> -> vector<16x32xf32>
    %141 = arith.addf %120, %140 : vector<16x32xf32>
    %cst_90 = arith.constant dense<0.000000e+00> : vector<16x32xf32>
    %142 = tpu.matmul %86, %125, %cst_90 {dimension_numbers = #tpu.dot_dimension_numbers<[1], [0], [0], [1], [0, 0, 1, 1], [], []>} : vector<16x256xbf16>, vector<256x32xbf16>, vector<16x32xf32> -> vector<16x32xf32>
    %143 = arith.addf %121, %142 : vector<16x32xf32>
    %cst_91 = arith.constant dense<0.000000e+00> : vector<16x32xf32>
    %144 = tpu.matmul %94, %125, %cst_91 {dimension_numbers = #tpu.dot_dimension_numbers<[1], [0], [0], [1], [0, 0, 1, 1], [], []>} : vector<16x256xbf16>, vector<256x32xbf16>, vector<16x32xf32> -> vector<16x32xf32>
    %145 = arith.addf %122, %144 : vector<16x32xf32>
    %cst_92 = arith.constant dense<0.000000e+00> : vector<16x32xf32>
    %146 = tpu.matmul %102, %125, %cst_92 {dimension_numbers = #tpu.dot_dimension_numbers<[1], [0], [0], [1], [0, 0, 1, 1], [], []>} : vector<16x256xbf16>, vector<256x32xbf16>, vector<16x32xf32> -> vector<16x32xf32>
    %147 = arith.addf %123, %146 : vector<16x32xf32>
    %c2_93 = arith.constant 2 : index
    %c0_94 = arith.constant 0 : index
    %c0_95 = arith.constant 0 : index
    %148 = vector.load %arg4[%c2_93, %c0_94, %c0_95] : memref<3x256x32xbf16, #tpu.memory_space<vmem>>, vector<1x256x32xbf16>
    %149 = vector.shape_cast %148 : vector<1x256x32xbf16> to vector<256x32xbf16>
    %cst_96 = arith.constant dense<0.000000e+00> : vector<16x32xf32>
    %150 = tpu.matmul %30, %149, %cst_96 {dimension_numbers = #tpu.dot_dimension_numbers<[1], [0], [0], [1], [0, 0, 1, 1], [], []>} : vector<16x256xbf16>, vector<256x32xbf16>, vector<16x32xf32> -> vector<16x32xf32>
    %151 = arith.addf %127, %150 : vector<16x32xf32>
    %cst_97 = arith.constant dense<0.000000e+00> : vector<16x32xf32>
    %152 = tpu.matmul %38, %149, %cst_97 {dimension_numbers = #tpu.dot_dimension_numbers<[1], [0], [0], [1], [0, 0, 1, 1], [], []>} : vector<16x256xbf16>, vector<256x32xbf16>, vector<16x32xf32> -> vector<16x32xf32>
    %153 = arith.addf %129, %152 : vector<16x32xf32>
    %cst_98 = arith.constant dense<0.000000e+00> : vector<16x32xf32>
    %154 = tpu.matmul %46, %149, %cst_98 {dimension_numbers = #tpu.dot_dimension_numbers<[1], [0], [0], [1], [0, 0, 1, 1], [], []>} : vector<16x256xbf16>, vector<256x32xbf16>, vector<16x32xf32> -> vector<16x32xf32>
    %155 = arith.addf %131, %154 : vector<16x32xf32>
    %cst_99 = arith.constant dense<0.000000e+00> : vector<16x32xf32>
    %156 = tpu.matmul %54, %149, %cst_99 {dimension_numbers = #tpu.dot_dimension_numbers<[1], [0], [0], [1], [0, 0, 1, 1], [], []>} : vector<16x256xbf16>, vector<256x32xbf16>, vector<16x32xf32> -> vector<16x32xf32>
    %157 = arith.addf %133, %156 : vector<16x32xf32>
    %cst_100 = arith.constant dense<0.000000e+00> : vector<16x32xf32>
    %158 = tpu.matmul %62, %149, %cst_100 {dimension_numbers = #tpu.dot_dimension_numbers<[1], [0], [0], [1], [0, 0, 1, 1], [], []>} : vector<16x256xbf16>, vector<256x32xbf16>, vector<16x32xf32> -> vector<16x32xf32>
    %159 = arith.addf %135, %158 : vector<16x32xf32>
    %cst_101 = arith.constant dense<0.000000e+00> : vector<16x32xf32>
    %160 = tpu.matmul %70, %149, %cst_101 {dimension_numbers = #tpu.dot_dimension_numbers<[1], [0], [0], [1], [0, 0, 1, 1], [], []>} : vector<16x256xbf16>, vector<256x32xbf16>, vector<16x32xf32> -> vector<16x32xf32>
    %161 = arith.addf %137, %160 : vector<16x32xf32>
    %cst_102 = arith.constant dense<0.000000e+00> : vector<16x32xf32>
    %162 = tpu.matmul %78, %149, %cst_102 {dimension_numbers = #tpu.dot_dimension_numbers<[1], [0], [0], [1], [0, 0, 1, 1], [], []>} : vector<16x256xbf16>, vector<256x32xbf16>, vector<16x32xf32> -> vector<16x32xf32>
    %163 = arith.addf %139, %162 : vector<16x32xf32>
    %cst_103 = arith.constant dense<0.000000e+00> : vector<16x32xf32>
    %164 = tpu.matmul %86, %149, %cst_103 {dimension_numbers = #tpu.dot_dimension_numbers<[1], [0], [0], [1], [0, 0, 1, 1], [], []>} : vector<16x256xbf16>, vector<256x32xbf16>, vector<16x32xf32> -> vector<16x32xf32>
    %165 = arith.addf %141, %164 : vector<16x32xf32>
    %cst_104 = arith.constant dense<0.000000e+00> : vector<16x32xf32>
    %166 = tpu.matmul %94, %149, %cst_104 {dimension_numbers = #tpu.dot_dimension_numbers<[1], [0], [0], [1], [0, 0, 1, 1], [], []>} : vector<16x256xbf16>, vector<256x32xbf16>, vector<16x32xf32> -> vector<16x32xf32>
    %167 = arith.addf %143, %166 : vector<16x32xf32>
    %cst_105 = arith.constant dense<0.000000e+00> : vector<16x32xf32>
    %168 = tpu.matmul %102, %149, %cst_105 {dimension_numbers = #tpu.dot_dimension_numbers<[1], [0], [0], [1], [0, 0, 1, 1], [], []>} : vector<16x256xbf16>, vector<256x32xbf16>, vector<16x32xf32> -> vector<16x32xf32>
    %169 = arith.addf %145, %168 : vector<16x32xf32>
    %cst_106 = arith.constant dense<0.000000e+00> : vector<16x32xf32>
    %170 = tpu.matmul %110, %149, %cst_106 {dimension_numbers = #tpu.dot_dimension_numbers<[1], [0], [0], [1], [0, 0, 1, 1], [], []>} : vector<16x256xbf16>, vector<256x32xbf16>, vector<16x32xf32> -> vector<16x32xf32>
    %171 = arith.addf %147, %170 : vector<16x32xf32>
    %172 = vector.broadcast %2 : vector<1x32xf32> to vector<16x32xf32>
    %173 = arith.addf %151, %172 : vector<16x32xf32>
    %cst_107 = arith.constant 0.000000e+00 : f32
    %174 = vector.broadcast %cst_107 : f32 to vector<16x32xf32>
    %175 = arith.maximumf %173, %174 : vector<16x32xf32>
    %176 = vector.broadcast %2 : vector<1x32xf32> to vector<16x32xf32>
    %177 = arith.addf %153, %176 : vector<16x32xf32>
    %cst_108 = arith.constant 0.000000e+00 : f32
    %178 = vector.broadcast %cst_108 : f32 to vector<16x32xf32>
    %179 = arith.maximumf %177, %178 : vector<16x32xf32>
    %180 = vector.broadcast %2 : vector<1x32xf32> to vector<16x32xf32>
    %181 = arith.addf %155, %180 : vector<16x32xf32>
    %cst_109 = arith.constant 0.000000e+00 : f32
    %182 = vector.broadcast %cst_109 : f32 to vector<16x32xf32>
    %183 = arith.maximumf %181, %182 : vector<16x32xf32>
    %184 = vector.broadcast %2 : vector<1x32xf32> to vector<16x32xf32>
    %185 = arith.addf %157, %184 : vector<16x32xf32>
    %cst_110 = arith.constant 0.000000e+00 : f32
    %186 = vector.broadcast %cst_110 : f32 to vector<16x32xf32>
    %187 = arith.maximumf %185, %186 : vector<16x32xf32>
    %188 = vector.broadcast %2 : vector<1x32xf32> to vector<16x32xf32>
    %189 = arith.addf %159, %188 : vector<16x32xf32>
    %cst_111 = arith.constant 0.000000e+00 : f32
    %190 = vector.broadcast %cst_111 : f32 to vector<16x32xf32>
    %191 = arith.maximumf %189, %190 : vector<16x32xf32>
    %192 = vector.broadcast %2 : vector<1x32xf32> to vector<16x32xf32>
    %193 = arith.addf %161, %192 : vector<16x32xf32>
    %cst_112 = arith.constant 0.000000e+00 : f32
    %194 = vector.broadcast %cst_112 : f32 to vector<16x32xf32>
    %195 = arith.maximumf %193, %194 : vector<16x32xf32>
    %196 = vector.broadcast %2 : vector<1x32xf32> to vector<16x32xf32>
    %197 = arith.addf %163, %196 : vector<16x32xf32>
    %cst_113 = arith.constant 0.000000e+00 : f32
    %198 = vector.broadcast %cst_113 : f32 to vector<16x32xf32>
    %199 = arith.maximumf %197, %198 : vector<16x32xf32>
    %200 = vector.broadcast %2 : vector<1x32xf32> to vector<16x32xf32>
    %201 = arith.addf %165, %200 : vector<16x32xf32>
    %cst_114 = arith.constant 0.000000e+00 : f32
    %202 = vector.broadcast %cst_114 : f32 to vector<16x32xf32>
    %203 = arith.maximumf %201, %202 : vector<16x32xf32>
    %204 = vector.broadcast %2 : vector<1x32xf32> to vector<16x32xf32>
    %205 = arith.addf %167, %204 : vector<16x32xf32>
    %cst_115 = arith.constant 0.000000e+00 : f32
    %206 = vector.broadcast %cst_115 : f32 to vector<16x32xf32>
    %207 = arith.maximumf %205, %206 : vector<16x32xf32>
    %208 = vector.broadcast %2 : vector<1x32xf32> to vector<16x32xf32>
    %209 = arith.addf %169, %208 : vector<16x32xf32>
    %cst_116 = arith.constant 0.000000e+00 : f32
    %210 = vector.broadcast %cst_116 : f32 to vector<16x32xf32>
    %211 = arith.maximumf %209, %210 : vector<16x32xf32>
    %212 = vector.broadcast %2 : vector<1x32xf32> to vector<16x32xf32>
    %213 = arith.addf %171, %212 : vector<16x32xf32>
    %cst_117 = arith.constant 0.000000e+00 : f32
    %214 = vector.broadcast %cst_117 : f32 to vector<16x32xf32>
    %215 = arith.maximumf %213, %214 : vector<16x32xf32>
    %216 = arith.maximumf %175, %179 : vector<16x32xf32>
    %217 = arith.maximumf %216, %183 : vector<16x32xf32>
    %218 = arith.maximumf %217, %187 : vector<16x32xf32>
    %219 = arith.maximumf %218, %191 : vector<16x32xf32>
    %220 = arith.maximumf %219, %195 : vector<16x32xf32>
    %221 = arith.maximumf %220, %199 : vector<16x32xf32>
    %222 = arith.maximumf %221, %203 : vector<16x32xf32>
    %223 = arith.maximumf %222, %207 : vector<16x32xf32>
    %224 = arith.maximumf %223, %211 : vector<16x32xf32>
    %225 = arith.maximumf %224, %215 : vector<16x32xf32>
    %226 = arith.truncf %175 : vector<16x32xf32> to vector<16x32xbf16>
    %227 = arith.truncf %179 : vector<16x32xf32> to vector<16x32xbf16>
    %228 = arith.truncf %183 : vector<16x32xf32> to vector<16x32xbf16>
    %229 = arith.truncf %187 : vector<16x32xf32> to vector<16x32xbf16>
    %230 = arith.truncf %191 : vector<16x32xf32> to vector<16x32xbf16>
    %231 = arith.truncf %195 : vector<16x32xf32> to vector<16x32xbf16>
    %232 = arith.truncf %199 : vector<16x32xf32> to vector<16x32xbf16>
    %233 = arith.truncf %203 : vector<16x32xf32> to vector<16x32xbf16>
    %234 = arith.truncf %207 : vector<16x32xf32> to vector<16x32xbf16>
    %235 = arith.truncf %211 : vector<16x32xf32> to vector<16x32xbf16>
    %236 = arith.truncf %215 : vector<16x32xf32> to vector<16x32xbf16>
    %c0_118 = arith.constant 0 : index
    %c0_119 = arith.constant 0 : index
    %c0_120 = arith.constant 0 : index
    %237 = vector.load %arg6[%c0_118, %c0_119, %c0_120] : memref<3x32x16xbf16, #tpu.memory_space<vmem>>, vector<1x32x16xbf16>
    %238 = vector.shape_cast %237 : vector<1x32x16xbf16> to vector<32x16xbf16>
    %cst_121 = arith.constant dense<0.000000e+00> : vector<16x16xf32>
    %239 = tpu.matmul %226, %238, %cst_121 {dimension_numbers = #tpu.dot_dimension_numbers<[1], [0], [0], [1], [0, 0, 1, 1], [], []>} : vector<16x32xbf16>, vector<32x16xbf16>, vector<16x16xf32> -> vector<16x16xf32>
    %cst_122 = arith.constant dense<0.000000e+00> : vector<16x16xf32>
    %240 = tpu.matmul %227, %238, %cst_122 {dimension_numbers = #tpu.dot_dimension_numbers<[1], [0], [0], [1], [0, 0, 1, 1], [], []>} : vector<16x32xbf16>, vector<32x16xbf16>, vector<16x16xf32> -> vector<16x16xf32>
    %cst_123 = arith.constant dense<0.000000e+00> : vector<16x16xf32>
    %241 = tpu.matmul %228, %238, %cst_123 {dimension_numbers = #tpu.dot_dimension_numbers<[1], [0], [0], [1], [0, 0, 1, 1], [], []>} : vector<16x32xbf16>, vector<32x16xbf16>, vector<16x16xf32> -> vector<16x16xf32>
    %cst_124 = arith.constant dense<0.000000e+00> : vector<16x16xf32>
    %242 = tpu.matmul %229, %238, %cst_124 {dimension_numbers = #tpu.dot_dimension_numbers<[1], [0], [0], [1], [0, 0, 1, 1], [], []>} : vector<16x32xbf16>, vector<32x16xbf16>, vector<16x16xf32> -> vector<16x16xf32>
    %cst_125 = arith.constant dense<0.000000e+00> : vector<16x16xf32>
    %243 = tpu.matmul %230, %238, %cst_125 {dimension_numbers = #tpu.dot_dimension_numbers<[1], [0], [0], [1], [0, 0, 1, 1], [], []>} : vector<16x32xbf16>, vector<32x16xbf16>, vector<16x16xf32> -> vector<16x16xf32>
    %cst_126 = arith.constant dense<0.000000e+00> : vector<16x16xf32>
    %244 = tpu.matmul %231, %238, %cst_126 {dimension_numbers = #tpu.dot_dimension_numbers<[1], [0], [0], [1], [0, 0, 1, 1], [], []>} : vector<16x32xbf16>, vector<32x16xbf16>, vector<16x16xf32> -> vector<16x16xf32>
    %cst_127 = arith.constant dense<0.000000e+00> : vector<16x16xf32>
    %245 = tpu.matmul %232, %238, %cst_127 {dimension_numbers = #tpu.dot_dimension_numbers<[1], [0], [0], [1], [0, 0, 1, 1], [], []>} : vector<16x32xbf16>, vector<32x16xbf16>, vector<16x16xf32> -> vector<16x16xf32>
    %cst_128 = arith.constant dense<0.000000e+00> : vector<16x16xf32>
    %246 = tpu.matmul %233, %238, %cst_128 {dimension_numbers = #tpu.dot_dimension_numbers<[1], [0], [0], [1], [0, 0, 1, 1], [], []>} : vector<16x32xbf16>, vector<32x16xbf16>, vector<16x16xf32> -> vector<16x16xf32>
    %cst_129 = arith.constant dense<0.000000e+00> : vector<16x16xf32>
    %247 = tpu.matmul %234, %238, %cst_129 {dimension_numbers = #tpu.dot_dimension_numbers<[1], [0], [0], [1], [0, 0, 1, 1], [], []>} : vector<16x32xbf16>, vector<32x16xbf16>, vector<16x16xf32> -> vector<16x16xf32>
    %c1_130 = arith.constant 1 : index
    %c0_131 = arith.constant 0 : index
    %c0_132 = arith.constant 0 : index
    %248 = vector.load %arg6[%c1_130, %c0_131, %c0_132] : memref<3x32x16xbf16, #tpu.memory_space<vmem>>, vector<1x32x16xbf16>
    %249 = vector.shape_cast %248 : vector<1x32x16xbf16> to vector<32x16xbf16>
    %cst_133 = arith.constant dense<0.000000e+00> : vector<16x16xf32>
    %250 = tpu.matmul %227, %249, %cst_133 {dimension_numbers = #tpu.dot_dimension_numbers<[1], [0], [0], [1], [0, 0, 1, 1], [], []>} : vector<16x32xbf16>, vector<32x16xbf16>, vector<16x16xf32> -> vector<16x16xf32>
    %251 = arith.addf %239, %250 : vector<16x16xf32>
    %cst_134 = arith.constant dense<0.000000e+00> : vector<16x16xf32>
    %252 = tpu.matmul %228, %249, %cst_134 {dimension_numbers = #tpu.dot_dimension_numbers<[1], [0], [0], [1], [0, 0, 1, 1], [], []>} : vector<16x32xbf16>, vector<32x16xbf16>, vector<16x16xf32> -> vector<16x16xf32>
    %253 = arith.addf %240, %252 : vector<16x16xf32>
    %cst_135 = arith.constant dense<0.000000e+00> : vector<16x16xf32>
    %254 = tpu.matmul %229, %249, %cst_135 {dimension_numbers = #tpu.dot_dimension_numbers<[1], [0], [0], [1], [0, 0, 1, 1], [], []>} : vector<16x32xbf16>, vector<32x16xbf16>, vector<16x16xf32> -> vector<16x16xf32>
    %255 = arith.addf %241, %254 : vector<16x16xf32>
    %cst_136 = arith.constant dense<0.000000e+00> : vector<16x16xf32>
    %256 = tpu.matmul %230, %249, %cst_136 {dimension_numbers = #tpu.dot_dimension_numbers<[1], [0], [0], [1], [0, 0, 1, 1], [], []>} : vector<16x32xbf16>, vector<32x16xbf16>, vector<16x16xf32> -> vector<16x16xf32>
    %257 = arith.addf %242, %256 : vector<16x16xf32>
    %cst_137 = arith.constant dense<0.000000e+00> : vector<16x16xf32>
    %258 = tpu.matmul %231, %249, %cst_137 {dimension_numbers = #tpu.dot_dimension_numbers<[1], [0], [0], [1], [0, 0, 1, 1], [], []>} : vector<16x32xbf16>, vector<32x16xbf16>, vector<16x16xf32> -> vector<16x16xf32>
    %259 = arith.addf %243, %258 : vector<16x16xf32>
    %cst_138 = arith.constant dense<0.000000e+00> : vector<16x16xf32>
    %260 = tpu.matmul %232, %249, %cst_138 {dimension_numbers = #tpu.dot_dimension_numbers<[1], [0], [0], [1], [0, 0, 1, 1], [], []>} : vector<16x32xbf16>, vector<32x16xbf16>, vector<16x16xf32> -> vector<16x16xf32>
    %261 = arith.addf %244, %260 : vector<16x16xf32>
    %cst_139 = arith.constant dense<0.000000e+00> : vector<16x16xf32>
    %262 = tpu.matmul %233, %249, %cst_139 {dimension_numbers = #tpu.dot_dimension_numbers<[1], [0], [0], [1], [0, 0, 1, 1], [], []>} : vector<16x32xbf16>, vector<32x16xbf16>, vector<16x16xf32> -> vector<16x16xf32>
    %263 = arith.addf %245, %262 : vector<16x16xf32>
    %cst_140 = arith.constant dense<0.000000e+00> : vector<16x16xf32>
    %264 = tpu.matmul %234, %249, %cst_140 {dimension_numbers = #tpu.dot_dimension_numbers<[1], [0], [0], [1], [0, 0, 1, 1], [], []>} : vector<16x32xbf16>, vector<32x16xbf16>, vector<16x16xf32> -> vector<16x16xf32>
    %265 = arith.addf %246, %264 : vector<16x16xf32>
    %cst_141 = arith.constant dense<0.000000e+00> : vector<16x16xf32>
    %266 = tpu.matmul %235, %249, %cst_141 {dimension_numbers = #tpu.dot_dimension_numbers<[1], [0], [0], [1], [0, 0, 1, 1], [], []>} : vector<16x32xbf16>, vector<32x16xbf16>, vector<16x16xf32> -> vector<16x16xf32>
    %267 = arith.addf %247, %266 : vector<16x16xf32>
    %c2_142 = arith.constant 2 : index
    %c0_143 = arith.constant 0 : index
    %c0_144 = arith.constant 0 : index
    %268 = vector.load %arg6[%c2_142, %c0_143, %c0_144] : memref<3x32x16xbf16, #tpu.memory_space<vmem>>, vector<1x32x16xbf16>
    %269 = vector.shape_cast %268 : vector<1x32x16xbf16> to vector<32x16xbf16>
    %cst_145 = arith.constant dense<0.000000e+00> : vector<16x16xf32>
    %270 = tpu.matmul %228, %269, %cst_145 {dimension_numbers = #tpu.dot_dimension_numbers<[1], [0], [0], [1], [0, 0, 1, 1], [], []>} : vector<16x32xbf16>, vector<32x16xbf16>, vector<16x16xf32> -> vector<16x16xf32>
    %271 = arith.addf %251, %270 : vector<16x16xf32>
    %cst_146 = arith.constant dense<0.000000e+00> : vector<16x16xf32>
    %272 = tpu.matmul %229, %269, %cst_146 {dimension_numbers = #tpu.dot_dimension_numbers<[1], [0], [0], [1], [0, 0, 1, 1], [], []>} : vector<16x32xbf16>, vector<32x16xbf16>, vector<16x16xf32> -> vector<16x16xf32>
    %273 = arith.addf %253, %272 : vector<16x16xf32>
    %cst_147 = arith.constant dense<0.000000e+00> : vector<16x16xf32>
    %274 = tpu.matmul %230, %269, %cst_147 {dimension_numbers = #tpu.dot_dimension_numbers<[1], [0], [0], [1], [0, 0, 1, 1], [], []>} : vector<16x32xbf16>, vector<32x16xbf16>, vector<16x16xf32> -> vector<16x16xf32>
    %275 = arith.addf %255, %274 : vector<16x16xf32>
    %cst_148 = arith.constant dense<0.000000e+00> : vector<16x16xf32>
    %276 = tpu.matmul %231, %269, %cst_148 {dimension_numbers = #tpu.dot_dimension_numbers<[1], [0], [0], [1], [0, 0, 1, 1], [], []>} : vector<16x32xbf16>, vector<32x16xbf16>, vector<16x16xf32> -> vector<16x16xf32>
    %277 = arith.addf %257, %276 : vector<16x16xf32>
    %cst_149 = arith.constant dense<0.000000e+00> : vector<16x16xf32>
    %278 = tpu.matmul %232, %269, %cst_149 {dimension_numbers = #tpu.dot_dimension_numbers<[1], [0], [0], [1], [0, 0, 1, 1], [], []>} : vector<16x32xbf16>, vector<32x16xbf16>, vector<16x16xf32> -> vector<16x16xf32>
    %279 = arith.addf %259, %278 : vector<16x16xf32>
    %cst_150 = arith.constant dense<0.000000e+00> : vector<16x16xf32>
    %280 = tpu.matmul %233, %269, %cst_150 {dimension_numbers = #tpu.dot_dimension_numbers<[1], [0], [0], [1], [0, 0, 1, 1], [], []>} : vector<16x32xbf16>, vector<32x16xbf16>, vector<16x16xf32> -> vector<16x16xf32>
    %281 = arith.addf %261, %280 : vector<16x16xf32>
    %cst_151 = arith.constant dense<0.000000e+00> : vector<16x16xf32>
    %282 = tpu.matmul %234, %269, %cst_151 {dimension_numbers = #tpu.dot_dimension_numbers<[1], [0], [0], [1], [0, 0, 1, 1], [], []>} : vector<16x32xbf16>, vector<32x16xbf16>, vector<16x16xf32> -> vector<16x16xf32>
    %283 = arith.addf %263, %282 : vector<16x16xf32>
    %cst_152 = arith.constant dense<0.000000e+00> : vector<16x16xf32>
    %284 = tpu.matmul %235, %269, %cst_152 {dimension_numbers = #tpu.dot_dimension_numbers<[1], [0], [0], [1], [0, 0, 1, 1], [], []>} : vector<16x32xbf16>, vector<32x16xbf16>, vector<16x16xf32> -> vector<16x16xf32>
    %285 = arith.addf %265, %284 : vector<16x16xf32>
    %cst_153 = arith.constant dense<0.000000e+00> : vector<16x16xf32>
    %286 = tpu.matmul %236, %269, %cst_153 {dimension_numbers = #tpu.dot_dimension_numbers<[1], [0], [0], [1], [0, 0, 1, 1], [], []>} : vector<16x32xbf16>, vector<32x16xbf16>, vector<16x16xf32> -> vector<16x16xf32>
    %287 = arith.addf %267, %286 : vector<16x16xf32>
    %288 = vector.broadcast %3 : vector<1x16xf32> to vector<16x16xf32>
    %289 = arith.addf %271, %288 : vector<16x16xf32>
    %cst_154 = arith.constant 0.000000e+00 : f32
    %290 = vector.broadcast %cst_154 : f32 to vector<16x16xf32>
    %291 = arith.maximumf %289, %290 : vector<16x16xf32>
    %292 = vector.broadcast %3 : vector<1x16xf32> to vector<16x16xf32>
    %293 = arith.addf %273, %292 : vector<16x16xf32>
    %cst_155 = arith.constant 0.000000e+00 : f32
    %294 = vector.broadcast %cst_155 : f32 to vector<16x16xf32>
    %295 = arith.maximumf %293, %294 : vector<16x16xf32>
    %296 = vector.broadcast %3 : vector<1x16xf32> to vector<16x16xf32>
    %297 = arith.addf %275, %296 : vector<16x16xf32>
    %cst_156 = arith.constant 0.000000e+00 : f32
    %298 = vector.broadcast %cst_156 : f32 to vector<16x16xf32>
    %299 = arith.maximumf %297, %298 : vector<16x16xf32>
    %300 = vector.broadcast %3 : vector<1x16xf32> to vector<16x16xf32>
    %301 = arith.addf %277, %300 : vector<16x16xf32>
    %cst_157 = arith.constant 0.000000e+00 : f32
    %302 = vector.broadcast %cst_157 : f32 to vector<16x16xf32>
    %303 = arith.maximumf %301, %302 : vector<16x16xf32>
    %304 = vector.broadcast %3 : vector<1x16xf32> to vector<16x16xf32>
    %305 = arith.addf %279, %304 : vector<16x16xf32>
    %cst_158 = arith.constant 0.000000e+00 : f32
    %306 = vector.broadcast %cst_158 : f32 to vector<16x16xf32>
    %307 = arith.maximumf %305, %306 : vector<16x16xf32>
    %308 = vector.broadcast %3 : vector<1x16xf32> to vector<16x16xf32>
    %309 = arith.addf %281, %308 : vector<16x16xf32>
    %cst_159 = arith.constant 0.000000e+00 : f32
    %310 = vector.broadcast %cst_159 : f32 to vector<16x16xf32>
    %311 = arith.maximumf %309, %310 : vector<16x16xf32>
    %312 = vector.broadcast %3 : vector<1x16xf32> to vector<16x16xf32>
    %313 = arith.addf %283, %312 : vector<16x16xf32>
    %cst_160 = arith.constant 0.000000e+00 : f32
    %314 = vector.broadcast %cst_160 : f32 to vector<16x16xf32>
    %315 = arith.maximumf %313, %314 : vector<16x16xf32>
    %316 = vector.broadcast %3 : vector<1x16xf32> to vector<16x16xf32>
    %317 = arith.addf %285, %316 : vector<16x16xf32>
    %cst_161 = arith.constant 0.000000e+00 : f32
    %318 = vector.broadcast %cst_161 : f32 to vector<16x16xf32>
    %319 = arith.maximumf %317, %318 : vector<16x16xf32>
    %320 = vector.broadcast %3 : vector<1x16xf32> to vector<16x16xf32>
    %321 = arith.addf %287, %320 : vector<16x16xf32>
    %cst_162 = arith.constant 0.000000e+00 : f32
    %322 = vector.broadcast %cst_162 : f32 to vector<16x16xf32>
    %323 = arith.maximumf %321, %322 : vector<16x16xf32>
    %324 = arith.maximumf %291, %295 : vector<16x16xf32>
    %325 = arith.maximumf %324, %299 : vector<16x16xf32>
    %326 = arith.maximumf %325, %303 : vector<16x16xf32>
    %327 = arith.maximumf %326, %307 : vector<16x16xf32>
    %328 = arith.maximumf %327, %311 : vector<16x16xf32>
    %329 = arith.maximumf %328, %315 : vector<16x16xf32>
    %330 = arith.maximumf %329, %319 : vector<16x16xf32>
    %331 = arith.maximumf %330, %323 : vector<16x16xf32>
    %332 = arith.truncf %225 : vector<16x32xf32> to vector<16x32xbf16>
    %cst_163 = arith.constant dense<0.000000e+00> : vector<16x2xf32>
    %333 = tpu.matmul %332, %4, %cst_163 {dimension_numbers = #tpu.dot_dimension_numbers<[1], [0], [0], [1], [0, 0, 1, 1], [], []>} : vector<16x32xbf16>, vector<32x2xbf16>, vector<16x2xf32> -> vector<16x2xf32>
    %334 = arith.truncf %331 : vector<16x16xf32> to vector<16x16xbf16>
    %cst_164 = arith.constant dense<0.000000e+00> : vector<16x2xf32>
    %335 = tpu.matmul %334, %5, %cst_164 {dimension_numbers = #tpu.dot_dimension_numbers<[1], [0], [0], [1], [0, 0, 1, 1], [], []>} : vector<16x16xbf16>, vector<16x2xbf16>, vector<16x2xf32> -> vector<16x2xf32>
    %336 = arith.addf %333, %335 : vector<16x2xf32>
    %337 = vector.broadcast %6 : vector<1x2xf32> to vector<16x2xf32>
    %338 = arith.addf %336, %337 : vector<16x2xf32>
    %c0_165 = arith.constant 0 : index
    %c0_166 = arith.constant 0 : index
    %339 = vector.load %arg11[%c0_165, %c0_166] : memref<16x2xf32, #tpu.memory_space<vmem>>, vector<16x2xf32>
    tpu.vector_store %arg11[%c0_165, %c0_166], %338 {strides = array<i32>} : memref<16x2xf32, #tpu.memory_space<vmem>>, vector<16x2xf32>,
    return
  }
  func.func @transform_0(%arg0: i32) -> (i32, i32, i32) {
    %c0_i32 = arith.constant 0 : i32
    %c0_i32_0 = arith.constant 0 : i32
    %c0_i32_1 = arith.constant 0 : i32
    return %c0_i32, %arg0, %c0_i32_0 : i32, i32, i32
  }
  func.func @transform_1(%arg0: i32) -> (i32, i32) {
    %c0_i32 = arith.constant 0 : i32
    %c0_i32_0 = arith.constant 0 : i32
    %c0_i32_1 = arith.constant 0 : i32
    return %c0_i32, %c0_i32_0 : i32, i32
  }
  func.func @transform_2(%arg0: i32) -> (i32, i32) {
    %c0_i32 = arith.constant 0 : i32
    %c0_i32_0 = arith.constant 0 : i32
    %c0_i32_1 = arith.constant 0 : i32
    return %c0_i32, %c0_i32_0 : i32, i32
  }
  func.func @transform_3(%arg0: i32) -> (i32, i32, i32) {
    %c0_i32 = arith.constant 0 : i32
    %c0_i32_0 = arith.constant 0 : i32
    %c0_i32_1 = arith.constant 0 : i32
    %c0_i32_2 = arith.constant 0 : i32
    return %c0_i32, %c0_i32_0, %c0_i32_1 : i32, i32, i32
  }
  func.func @transform_4(%arg0: i32) -> (i32, i32) {
    %c0_i32 = arith.constant 0 : i32
    %c0_i32_0 = arith.constant 0 : i32
    %c0_i32_1 = arith.constant 0 : i32
    return %c0_i32, %c0_i32_0 : i32, i32
  }
  func.func @transform_5(%arg0: i32) -> (i32, i32, i32) {
    %c0_i32 = arith.constant 0 : i32
    %c0_i32_0 = arith.constant 0 : i32
    %c0_i32_1 = arith.constant 0 : i32
    %c0_i32_2 = arith.constant 0 : i32
    return %c0_i32, %c0_i32_0, %c0_i32_1 : i32, i32, i32
  }
  func.func @transform_6(%arg0: i32) -> (i32, i32) {
    %c0_i32 = arith.constant 0 : i32
    %c0_i32_0 = arith.constant 0 : i32
    %c0_i32_1 = arith.constant 0 : i32
    return %c0_i32, %c0_i32_0 : i32, i32
  }
  func.func @transform_7(%arg0: i32) -> (i32, i32) {
    %c0_i32 = arith.constant 0 : i32
    %c0_i32_0 = arith.constant 0 : i32
    %c0_i32_1 = arith.constant 0 : i32
    return %c0_i32, %c0_i32_0 : i32, i32
  }
  func.func @transform_8(%arg0: i32) -> (i32, i32) {
    %c0_i32 = arith.constant 0 : i32
    %c0_i32_0 = arith.constant 0 : i32
    %c0_i32_1 = arith.constant 0 : i32
    return %c0_i32, %c0_i32_0 : i32, i32
  }
  func.func @transform_9(%arg0: i32) -> (i32, i32) {
    %c0_i32 = arith.constant 0 : i32
    %c0_i32_0 = arith.constant 0 : i32
    %c0_i32_1 = arith.constant 0 : i32
    return %c0_i32, %c0_i32_0 : i32, i32
  }
  func.func @transform_10(%arg0: i32) -> (i32, i32) {
    %c0_i32 = arith.constant 0 : i32
    %c0_i32_0 = arith.constant 0 : i32
    return %arg0, %c0_i32 : i32, i32
  }
}

</mosaic_0001>

<llo_original>
// kernel: tpu_custom_call.1
$region0: #{tpu_custom_call.1}
  #allocation0 [shape = 'u32[]', space=smem, size = 0x4, offset = 0x4, fixed_abs, tag = 'smem constant byte address 0x4 - core index']
  #allocation1 [shape = 'u32[144,128]{1,0:T(1,128)}', space=vmem, size = 0x12000, scoped, tag = 'internal scratch']
  %s0 = inlined_call_operand.vmem [shape: bf16[13,64,24], index: 0, kind: input, shape index: {}]
  %s1 = inlined_call_operand.vmem [shape: bf16[24,256], index: 1, kind: input, shape index: {}]
  %s2 = inlined_call_operand.vmem [shape: f32[1,256], index: 2, kind: input, shape index: {}]
  %s3 = inlined_call_operand.vmem [shape: bf16[3,256,32], index: 3, kind: input, shape index: {}]
  %s4 = inlined_call_operand.vmem [shape: f32[1,32], index: 4, kind: input, shape index: {}]
  %s5 = inlined_call_operand.vmem [shape: bf16[3,32,16], index: 5, kind: input, shape index: {}]
  %s6 = inlined_call_operand.vmem [shape: f32[1,16], index: 6, kind: input, shape index: {}]
  %s7 = inlined_call_operand.vmem [shape: bf16[32,2], index: 7, kind: input, shape index: {}]
  %s8 = inlined_call_operand.vmem [shape: bf16[16,2], index: 8, kind: input, shape index: {}]
  %s9 = inlined_call_operand.vmem [shape: f32[1,2], index: 9, kind: input, shape index: {}]
  %s10 = inlined_call_operand.vmem [shape: f32[64,2], index: 10, kind: output, shape index: {}]
  %s11 = sld [smem:[#allocation0]]
  $region114: #{tpu_custom_call.1} parent=0
    _
  %s13 = ssub.s32 1, %s11
  %s14 = scalar_select 0, %s13, %s11
  $region1: #{tpu_custom_call.1} parent=0
    #allocation2 [shape = 'u8[106496]{0}', space=vmem, size = 0x1a000, scoped, tag = 'input window, operand 0']
    loop: start=0, step=1, limit=6
    $region2: #{tpu_custom_call.1} parent=1 // loop_pre_header
      _
    $region3: #{tpu_custom_call.1} parent=1 // loop_header
      %s16 = sphi 0, %s20
      %p17 = scmp.ge.s32.totalorder %s16, 6
      %s26 = sphi 0, %s28
      %s29 = sphi 0, %s26
      %s30 = sphi 0, %s29
      %s46 = sphi 0, %s30
      %s50 = sphi 0, %s50
      %s52 = sphi 0, %s50
      %s53 = sphi 0, %s52
      %s67 = sphi 0, %s53
      %s71 = sphi 0, %s71
      %s73 = sphi 0, %s71
      %s74 = sphi 0, %s73
      %s88 = sphi 0, %s74
      %s92 = sphi 0, %s92
      %s94 = sphi 0, %s92
      %s95 = sphi 0, %s94
      %s109 = sphi 0, %s95
      %s113 = sphi 0, %s113
      %s115 = sphi 0, %s113
      %s116 = sphi 0, %s115
      %s130 = sphi 0, %s116
      %s134 = sphi 0, %s134
      %s136 = sphi 0, %s134
      %s137 = sphi 0, %s136
      %s151 = sphi 0, %s137
      %s155 = sphi 0, %s155
      %s157 = sphi 0, %s155
      %s158 = sphi 0, %s157
      %s172 = sphi 0, %s158
      %s176 = sphi 0, %s176
      %s178 = sphi 0, %s176
      %s179 = sphi 0, %s178
      %s193 = sphi 0, %s179
      %s197 = sphi 0, %s197
      %s199 = sphi 0, %s197
      %s200 = sphi 0, %s199
      %s214 = sphi 0, %s200
      %s218 = sphi 0, %s218
      %s220 = sphi 0, %s218
      %s221 = sphi 0, %s220
      %s235 = sphi 0, %s221
      %s241 = sphi 0, %s243
      %s244 = sphi 0, %s241
      %s245 = sphi 0, %s244
      %s261 = sphi 0, %s245
    $region4: #{tpu_custom_call.1} parent=1 // loop_header_branch
      %19 = sbr.rel (%p17) target = $region8
    $region5: #{tpu_custom_call.1} parent=1 // loop_body
      %s21 = ssub.s32 %s16, 1
      %s22 = ssub.s32 %s16, 2
      %s23 = sadd.s32 %s16, 1
      %s24 = ssub.s32 %s16, %s23
      %p25 = scmp.eq.s32.totalorder %s24, 0
      %s27 = sadd.s32 %s26, 1
      %s28 = scalar_select %p25, %s26, %s27
      %p31 = pneg %p25
      %p32 = scmp.eq.s32.totalorder %s16, 3
      %p33 = por %p31, %p32
      %p34 = scmp.ne.s32.totalorder %s26, %s29
      %p35 = scmp.eq.s32.totalorder %s16, 0
      %p36 = por %p34, %p35
      %p37 = scmp.ne.s32.totalorder %s26, %s29
      %p38 = scmp.eq.s32.totalorder %s21, 3
      %p39 = por %p37, %p38
      %p40 = scmp.ne.s32.totalorder %s29, %s30
      %p41 = scmp.eq.s32.totalorder %s21, 0
      %p42 = por %p40, %p41
      %p43 = scmp.ne.s32.totalorder %s29, %s30
      %p44 = scmp.eq.s32.totalorder %s22, 3
      %p45 = por %p43, %p44
      %p47 = scmp.ne.s32.totalorder %s30, %s46
      %p48 = scmp.eq.s32.totalorder %s22, 0
      %p49 = por %p47, %p48
      %s51 = sadd.s32 %s50, 1
      %p54 = scmp.eq.s32.totalorder %s16, 3
      %p55 = scmp.ne.s32.totalorder %s50, %s52
      %p56 = scmp.eq.s32.totalorder %s16, 0
      %p57 = por %p55, %p56
      %p58 = scmp.ne.s32.totalorder %s50, %s52
      %p59 = scmp.eq.s32.totalorder %s21, 3
      %p60 = por %p58, %p59
      %p61 = scmp.ne.s32.totalorder %s52, %s53
      %p62 = scmp.eq.s32.totalorder %s21, 0
      %p63 = por %p61, %p62
      %p64 = scmp.ne.s32.totalorder %s52, %s53
      %p65 = scmp.eq.s32.totalorder %s22, 3
      %p66 = por %p64, %p65
      %p68 = scmp.ne.s32.totalorder %s53, %s67
      %p69 = scmp.eq.s32.totalorder %s22, 0
      %p70 = por %p68, %p69
      %s72 = sadd.s32 %s71, 1
      %p75 = scmp.eq.s32.totalorder %s16, 3
      %p76 = scmp.ne.s32.totalorder %s71, %s73
      %p77 = scmp.eq.s32.totalorder %s16, 0
      %p78 = por %p76, %p77
      %p79 = scmp.ne.s32.totalorder %s71, %s73
      %p80 = scmp.eq.s32.totalorder %s21, 3
      %p81 = por %p79, %p80
      %p82 = scmp.ne.s32.totalorder %s73, %s74
      %p83 = scmp.eq.s32.totalorder %s21, 0
      %p84 = por %p82, %p83
      %p85 = scmp.ne.s32.totalorder %s73, %s74
      %p86 = scmp.eq.s32.totalorder %s22, 3
      %p87 = por %p85, %p86
      %p89 = scmp.ne.s32.totalorder %s74, %s88
      %p90 = scmp.eq.s32.totalorder %s22, 0
      %p91 = por %p89, %p90
      %s93 = sadd.s32 %s92, 1
      %p96 = scmp.eq.s32.totalorder %s16, 3
      %p97 = scmp.ne.s32.totalorder %s92, %s94
      %p98 = scmp.eq.s32.totalorder %s16, 0
      %p99 = por %p97, %p98
      %p100 = scmp.ne.s32.totalorder %s92, %s94
      %p101 = scmp.eq.s32.totalorder %s21, 3
      %p102 = por %p100, %p101
      %p103 = scmp.ne.s32.totalorder %s94, %s95
      %p104 = scmp.eq.s32.totalorder %s21, 0
      %p105 = por %p103, %p104
      %p106 = scmp.ne.s32.totalorder %s94, %s95
      %p107 = scmp.eq.s32.totalorder %s22, 3
      %p108 = por %p106, %p107
      %p110 = scmp.ne.s32.totalorder %s95, %s109
      %p111 = scmp.eq.s32.totalorder %s22, 0
      %p112 = por %p110, %p111
      %s114 = sadd.s32 %s113, 1
      %p117 = scmp.eq.s32.totalorder %s16, 3
      %p118 = scmp.ne.s32.totalorder %s113, %s115
      %p119 = scmp.eq.s32.totalorder %s16, 0
      %p120 = por %p118, %p119
      %p121 = scmp.ne.s32.totalorder %s113, %s115
      %p122 = scmp.eq.s32.totalorder %s21, 3
      %p123 = por %p121, %p122
      %p124 = scmp.ne.s32.totalorder %s115, %s116
      %p125 = scmp.eq.s32.totalorder %s21, 0
      %p126 = por %p124, %p125
      %p127 = scmp.ne.s32.totalorder %s115, %s116
      %p128 = scmp.eq.s32.totalorder %s22, 3
      %p129 = por %p127, %p128
      %p131 = scmp.ne.s32.totalorder %s116, %s130
      %p132 = scmp.eq.s32.totalorder %s22, 0
      %p133 = por %p131, %p132
      %s135 = sadd.s32 %s134, 1
      %p138 = scmp.eq.s32.totalorder %s16, 3
      %p139 = scmp.ne.s32.totalorder %s134, %s136
      %p140 = scmp.eq.s32.totalorder %s16, 0
      %p141 = por %p139, %p140
      %p142 = scmp.ne.s32.totalorder %s134, %s136
      %p143 = scmp.eq.s32.totalorder %s21, 3
      %p144 = por %p142, %p143
      %p145 = scmp.ne.s32.totalorder %s136, %s137
      %p146 = scmp.eq.s32.totalorder %s21, 0
      %p147 = por %p145, %p146
      %p148 = scmp.ne.s32.totalorder %s136, %s137
      %p149 = scmp.eq.s32.totalorder %s22, 3
      %p150 = por %p148, %p149
      %p152 = scmp.ne.s32.totalorder %s137, %s151
      %p153 = scmp.eq.s32.totalorder %s22, 0
      %p154 = por %p152, %p153
      %s156 = sadd.s32 %s155, 1
      %p159 = scmp.eq.s32.totalorder %s16, 3
      %p160 = scmp.ne.s32.totalorder %s155, %s157
      %p161 = scmp.eq.s32.totalorder %s16, 0
      %p162 = por %p160, %p161
      %p163 = scmp.ne.s32.totalorder %s155, %s157
      %p164 = scmp.eq.s32.totalorder %s21, 3
      %p165 = por %p163, %p164
      %p166 = scmp.ne.s32.totalorder %s157, %s158
      %p167 = scmp.eq.s32.totalorder %s21, 0
      %p168 = por %p166, %p167
      %p169 = scmp.ne.s32.totalorder %s157, %s158
      %p170 = scmp.eq.s32.totalorder %s22, 3
      %p171 = por %p169, %p170
      %p173 = scmp.ne.s32.totalorder %s158, %s172
      %p174 = scmp.eq.s32.totalorder %s22, 0
      %p175 = por %p173, %p174
      %s177 = sadd.s32 %s176, 1
      %p180 = scmp.eq.s32.totalorder %s16, 3
      %p181 = scmp.ne.s32.totalorder %s176, %s178
      %p182 = scmp.eq.s32.totalorder %s16, 0
      %p183 = por %p181, %p182
      %p184 = scmp.ne.s32.totalorder %s176, %s178
      %p185 = scmp.eq.s32.totalorder %s21, 3
      %p186 = por %p184, %p185
      %p187 = scmp.ne.s32.totalorder %s178, %s179
      %p188 = scmp.eq.s32.totalorder %s21, 0
      %p189 = por %p187, %p188
      %p190 = scmp.ne.s32.totalorder %s178, %s179
      %p191 = scmp.eq.s32.totalorder %s22, 3
      %p192 = por %p190, %p191
      %p194 = scmp.ne.s32.totalorder %s179, %s193
      %p195 = scmp.eq.s32.totalorder %s22, 0
      %p196 = por %p194, %p195
      %s198 = sadd.s32 %s197, 1
      %p201 = scmp.eq.s32.totalorder %s16, 3
      %p202 = scmp.ne.s32.totalorder %s197, %s199
      %p203 = scmp.eq.s32.totalorder %s16, 0
      %p204 = por %p202, %p203
      %p205 = scmp.ne.s32.totalorder %s197, %s199
      %p206 = scmp.eq.s32.totalorder %s21, 3
      %p207 = por %p205, %p206
      %p208 = scmp.ne.s32.totalorder %s199, %s200
      %p209 = scmp.eq.s32.totalorder %s21, 0
      %p210 = por %p208, %p209
      %p211 = scmp.ne.s32.totalorder %s199, %s200
      %p212 = scmp.eq.s32.totalorder %s22, 3
      %p213 = por %p211, %p212
      %p215 = scmp.ne.s32.totalorder %s200, %s214
      %p216 = scmp.eq.s32.totalorder %s22, 0
      %p217 = por %p215, %p216
      %s219 = sadd.s32 %s218, 1
      %p222 = scmp.eq.s32.totalorder %s16, 3
      %p223 = scmp.ne.s32.totalorder %s218, %s220
      %p224 = scmp.eq.s32.totalorder %s16, 0
      %p225 = por %p223, %p224
      %p226 = scmp.ne.s32.totalorder %s218, %s220
      %p227 = scmp.eq.s32.totalorder %s21, 3
      %p228 = por %p226, %p227
      %p229 = scmp.ne.s32.totalorder %s220, %s221
      %p230 = scmp.eq.s32.totalorder %s21, 0
      %p231 = por %p229, %p230
      %p232 = scmp.ne.s32.totalorder %s220, %s221
      %p233 = scmp.eq.s32.totalorder %s22, 3
      %p234 = por %p232, %p233
      %p236 = scmp.ne.s32.totalorder %s221, %s235
      %p237 = scmp.eq.s32.totalorder %s22, 0
      %p238 = por %p236, %p237
      %s239 = ssub.s32 %s16, %s23
      %p240 = scmp.eq.s32.totalorder %s239, 0
      %s242 = sadd.s32 %s241, 1
      %s243 = scalar_select %p240, %s241, %s242
      %p246 = pneg %p240
      %p247 = scmp.eq.s32.totalorder %s16, 3
      %p248 = por %p246, %p247
      %p249 = scmp.ne.s32.totalorder %s241, %s244
      %p250 = scmp.eq.s32.totalorder %s16, 0
      %p251 = por %p249, %p250
      %p252 = scmp.ne.s32.totalorder %s241, %s244
      %p253 = scmp.eq.s32.totalorder %s21, 3
      %p254 = por %p252, %p253
      %p255 = scmp.ne.s32.totalorder %s244, %s245
      %p256 = scmp.eq.s32.totalorder %s21, 0
      %p257 = por %p255, %p256
      %p258 = scmp.ne.s32.totalorder %s244, %s245
      %p259 = scmp.eq.s32.totalorder %s22, 3
      %p260 = por %p258, %p259
      %p262 = scmp.ne.s32.totalorder %s245, %s261
      %p263 = scmp.eq.s32.totalorder %s22, 0
      %p264 = por %p262, %p263
      %p265 = scmp.le.s32.totalorder 1, %s16
      %p266 = scmp.lt.s32.totalorder %s16, 5
      %p267 = pnand %p265, %p266
      %p268 = pneg %p267
      // Predicated region
      $region9: #{tpu_custom_call.1} parent=5 // pred_check
        _
      $region10: #{tpu_custom_call.1} parent=5 // pred_check_branch
        %270 = sbr.rel (%p267) target = $region12
      $region11: #{tpu_custom_call.1} parent=5 // pred_region
        %s271 = ssub.s32 %s16, 1
        // Predicated region
        $region13: #{tpu_custom_call.1} parent=11 // pred_check
          %p272 = pneg %p63
        $region14: #{tpu_custom_call.1} parent=11 // pred_check_branch
          %274 = sbr.rel (%p272) target = $region16
        $region15: #{tpu_custom_call.1} parent=11 // pred_region
          _
        $region16: #{tpu_custom_call.1} parent=11 // pred_fallthru
          _
        // Predicated region
        $region17: #{tpu_custom_call.1} parent=11 // pred_check
          %p275 = pneg %p84
        $region18: #{tpu_custom_call.1} parent=11 // pred_check_branch
          %277 = sbr.rel (%p275) target = $region20
        $region19: #{tpu_custom_call.1} parent=11 // pred_region
          _
        $region20: #{tpu_custom_call.1} parent=11 // pred_fallthru
          _
        // Predicated region
        $region21: #{tpu_custom_call.1} parent=11 // pred_check
          %p278 = pneg %p105
        $region22: #{tpu_custom_call.1} parent=11 // pred_check_branch
          %280 = sbr.rel (%p278) target = $region24
        $region23: #{tpu_custom_call.1} parent=11 // pred_region
          _
        $region24: #{tpu_custom_call.1} parent=11 // pred_fallthru
          _
        // Predicated region
        $region25: #{tpu_custom_call.1} parent=11 // pred_check
          %p281 = pneg %p126
        $region26: #{tpu_custom_call.1} parent=11 // pred_check_branch
          %283 = sbr.rel (%p281) target = $region28
        $region27: #{tpu_custom_call.1} parent=11 // pred_region
          _
        $region28: #{tpu_custom_call.1} parent=11 // pred_fallthru
          _
        // Predicated region
        $region29: #{tpu_custom_call.1} parent=11 // pred_check
          %p284 = pneg %p147
        $region30: #{tpu_custom_call.1} parent=11 // pred_check_branch
          %286 = sbr.rel (%p284) target = $region32
        $region31: #{tpu_custom_call.1} parent=11 // pred_region
          _
        $region32: #{tpu_custom_call.1} parent=11 // pred_fallthru
          _
        // Predicated region
        $region33: #{tpu_custom_call.1} parent=11 // pred_check
          %p287 = pneg %p168
        $region34: #{tpu_custom_call.1} parent=11 // pred_check_branch
          %289 = sbr.rel (%p287) target = $region36
        $region35: #{tpu_custom_call.1} parent=11 // pred_region
          _
        $region36: #{tpu_custom_call.1} parent=11 // pred_fallthru
          _
        // Predicated region
        $region37: #{tpu_custom_call.1} parent=11 // pred_check
          %p290 = pneg %p189
        $region38: #{tpu_custom_call.1} parent=11 // pred_check_branch
          %292 = sbr.rel (%p290) target = $region40
        $region39: #{tpu_custom_call.1} parent=11 // pred_region
          _
        $region40: #{tpu_custom_call.1} parent=11 // pred_fallthru
          _
        // Predicated region
        $region41: #{tpu_custom_call.1} parent=11 // pred_check
          %p293 = pneg %p210
        $region42: #{tpu_custom_call.1} parent=11 // pred_check_branch
          %295 = sbr.rel (%p293) target = $region44
        $region43: #{tpu_custom_call.1} parent=11 // pred_region
          _
        $region44: #{tpu_custom_call.1} parent=11 // pred_fallthru
          _
        // Predicated region
        $region45: #{tpu_custom_call.1} parent=11 // pred_check
          %p296 = pneg %p231
        $region46: #{tpu_custom_call.1} parent=11 // pred_check_branch
          %298 = sbr.rel (%p296) target = $region48
        $region47: #{tpu_custom_call.1} parent=11 // pred_region
          _
        $region48: #{tpu_custom_call.1} parent=11 // pred_fallthru
          _
      $region12: #{tpu_custom_call.1} parent=5 // pred_fallthru
        _
      %p299 = scmp.lt.s32.totalorder %s16, 4
      // Predicated region
      $region49: #{tpu_custom_call.1} parent=5 // pred_check
        %p300 = pneg %p299
      $region50: #{tpu_custom_call.1} parent=5 // pred_check_branch
        %302 = sbr.rel (%p300) target = $region52
      $region51: #{tpu_custom_call.1} parent=5 // pred_region
        // Predicated region
        $region53: #{tpu_custom_call.1} parent=51 // pred_check
          %p303 = pneg %p36
        $region54: #{tpu_custom_call.1} parent=51 // pred_check_branch
          %305 = sbr.rel (%p303) target = $region56
        $region55: #{tpu_custom_call.1} parent=51 // pred_region
          %s306 = sand.u32 %s26, 1
          %s307 = sand.u32 %s26, 1
          %s308 = smul.addr %s307, 104
          %s309 = scalar_lea.vmem [#allocation2], %s308
          %s310 = smul.u32 2, %s16
          %s311 = smul.addr %s310, 4
          %s312 = scalar_lea.vmem %s0, %s311
          // Predicated region
          $region57: #{tpu_custom_call.1} parent=55 // pred_check
            _
          $region58: #{tpu_custom_call.1} parent=55 // pred_check_branch
            %314 = sbr.rel (0) target = $region60
          $region59: #{tpu_custom_call.1} parent=55 // pred_region
            // Predicated region
            $region61: #{tpu_custom_call.1} parent=59 // pred_check
              _
            $region62: #{tpu_custom_call.1} parent=59 // pred_check_branch
              %316 = sbr.rel target = $region64
            $region63: #{tpu_custom_call.1} parent=59 // pred_region
              // Predicated region
              $region76: #{tpu_custom_call.1} parent=63 // pred_check
                _
              $region77: #{tpu_custom_call.1} parent=63 // pred_check_branch
                %381 = sbr.rel (0) target = $region79
              $region78: #{tpu_custom_call.1} parent=63 // pred_region
                loop: start=0, step=1, limit=1
                $region80: #{tpu_custom_call.1} parent=78 // loop_pre_header
                  _
                $region81: #{tpu_custom_call.1} parent=78 // loop_header
                  %s383 = sphi 0, %s387
                  %p384 = scmp.ge.s32.totalorder %s383, 1
                  %s388 = sphi %s312, %s312
                  %s389 = sphi %s309, %s309
                $region82: #{tpu_custom_call.1} parent=78 // loop_header_branch
                  %386 = sbr.rel (%p384) target = $region86
                $region83: #{tpu_custom_call.1} parent=78 // loop_body
                  _
                $region84: #{tpu_custom_call.1} parent=78 // loop_footer
                  %s387 = sadd.s32 1, %s383
                $region85: #{tpu_custom_call.1} parent=78 // loop_footer_branch
                  %382 = sbr.rel target = $region81
                $region86: #{tpu_custom_call.1} parent=78 // loop_exit
                  _
                loop: start=0, step=1, limit=1
                $region87: #{tpu_custom_call.1} parent=78 // loop_pre_header
                  _
                $region88: #{tpu_custom_call.1} parent=78 // loop_header
                  %s392 = sphi 0, %s396
                  %p393 = scmp.ge.s32.totalorder %s392, 1
                  %s397 = sphi %s312, %s312
                  %s398 = sphi %s309, %s309
                $region89: #{tpu_custom_call.1} parent=78 // loop_header_branch
                  %395 = sbr.rel (%p393) target = $region93
                $region90: #{tpu_custom_call.1} parent=78 // loop_body
                  %v399 = vld [vmem:[%s397] sm:$0xf]
                  %400 = vst [vmem:[%s398] sm:$0xf] %v399
                  %v401 = vld [vmem:[%s397 + $0x4] sm:$0xf]
                  %402 = vst [vmem:[%s398 + $0x4] sm:$0xf] %v401
                  %v403 = vld [vmem:[%s397 + $0x20] sm:$0xf]
                  %404 = vst [vmem:[%s398 + $0x8] sm:$0xf] %v403
                  %v405 = vld [vmem:[%s397 + $0x24] sm:$0xf]
                  %406 = vst [vmem:[%s398 + $0xc] sm:$0xf] %v405
                  %v407 = vld [vmem:[%s397 + $0x40] sm:$0xf]
                  %408 = vst [vmem:[%s398 + $0x10] sm:$0xf] %v407
                  %v409 = vld [vmem:[%s397 + $0x44] sm:$0xf]
                  %410 = vst [vmem:[%s398 + $0x14] sm:$0xf] %v409
                  %v411 = vld [vmem:[%s397 + $0x60] sm:$0xf]
                  %412 = vst [vmem:[%s398 + $0x18] sm:$0xf] %v411
                  %v413 = vld [vmem:[%s397 + $0x64] sm:$0xf]
                  %414 = vst [vmem:[%s398 + $0x1c] sm:$0xf] %v413
                  %v415 = vld [vmem:[%s397 + $0x80] sm:$0xf]
                  %416 = vst [vmem:[%s398 + $0x20] sm:$0xf] %v415
                  %v417 = vld [vmem:[%s397 + $0x84] sm:$0xf]
                  %418 = vst [vmem:[%s398 + $0x24] sm:$0xf] %v417
                  %v419 = vld [vmem:[%s397 + $0xa0] sm:$0xf]
                  %420 = vst [vmem:[%s398 + $0x28] sm:$0xf] %v419
                  %v421 = vld [vmem:[%s397 + $0xa4] sm:$0xf]
                  %422 = vst [vmem:[%s398 + $0x2c] sm:$0xf] %v421
                  %v423 = vld [vmem:[%s397 + $0xc0] sm:$0xf]
                  %424 = vst [vmem:[%s398 + $0x30] sm:$0xf] %v423
                  %v425 = vld [vmem:[%s397 + $0xc4] sm:$0xf]
                  %426 = vst [vmem:[%s398 + $0x34] sm:$0xf] %v425
                  %v427 = vld [vmem:[%s397 + $0xe0] sm:$0xf]
                  %428 = vst [vmem:[%s398 + $0x38] sm:$0xf] %v427
                  %v429 = vld [vmem:[%s397 + $0xe4] sm:$0xf]
                  %430 = vst [vmem:[%s398 + $0x3c] sm:$0xf] %v429
                  %v431 = vld [vmem:[%s397 + $0x100] sm:$0xf]
                  %432 = vst [vmem:[%s398 + $0x40] sm:$0xf] %v431
                  %v433 = vld [vmem:[%s397 + $0x104] sm:$0xf]
                  %434 = vst [vmem:[%s398 + $0x44] sm:$0xf] %v433
                  %v435 = vld [vmem:[%s397 + $0x120] sm:$0xf]
                  %436 = vst [vmem:[%s398 + $0x48] sm:$0xf] %v435
                  %v437 = vld [vmem:[%s397 + $0x124] sm:$0xf]
                  %438 = vst [vmem:[%s398 + $0x4c] sm:$0xf] %v437
                  %v439 = vld [vmem:[%s397 + $0x140] sm:$0xf]
                  %440 = vst [vmem:[%s398 + $0x50] sm:$0xf] %v439
                  %v441 = vld [vmem:[%s397 + $0x144] sm:$0xf]
                  %442 = vst [vmem:[%s398 + $0x54] sm:$0xf] %v441
                  %v443 = vld [vmem:[%s397 + $0x160] sm:$0xf]
                  %444 = vst [vmem:[%s398 + $0x58] sm:$0xf] %v443
                  %v445 = vld [vmem:[%s397 + $0x164] sm:$0xf]
                  %446 = vst [vmem:[%s398 + $0x5c] sm:$0xf] %v445
                  %v447 = vld [vmem:[%s397 + $0x180] sm:$0xf]
                  %448 = vst [vmem:[%s398 + $0x60] sm:$0xf] %v447
                  %v449 = vld [vmem:[%s397 + $0x184] sm:$0xf]
                  %450 = vst [vmem:[%s398 + $0x64] sm:$0xf] %v449
                $region91: #{tpu_custom_call.1} parent=78 // loop_footer
                  %s396 = sadd.s32 1, %s392
                $region92: #{tpu_custom_call.1} parent=78 // loop_footer_branch
                  %391 = sbr.rel target = $region88
                $region93: #{tpu_custom_call.1} parent=78 // loop_exit
                  _
              $region79: #{tpu_custom_call.1} parent=63 // pred_fallthru
                _
            $region64: #{tpu_custom_call.1} parent=59 // pred_fallthru
              _
            // Predicated region
            $region65: #{tpu_custom_call.1} parent=59 // pred_check
              _
            $region66: #{tpu_custom_call.1} parent=59 // pred_check_branch
              %318 = sbr.rel (0) target = $region68
            $region67: #{tpu_custom_call.1} parent=59 // pred_region
              loop: start=0, step=1, limit=1
              $region69: #{tpu_custom_call.1} parent=67 // loop_pre_header
                _
              $region70: #{tpu_custom_call.1} parent=67 // loop_header
                %s321 = sphi 0, %s325
                %p322 = scmp.ge.s32.totalorder %s321, 1
                %s326 = sphi %s312, %s312
                %s327 = sphi %s309, %s309
              $region71: #{tpu_custom_call.1} parent=67 // loop_header_branch
                %324 = sbr.rel (%p322) target = $region75
              $region72: #{tpu_custom_call.1} parent=67 // loop_body
                %v328 = vld [vmem:[%s326] sm:$0xf]
                %329 = vst [vmem:[%s327] sm:$0xf] %v328
                %v330 = vld [vmem:[%s326 + $0x4] sm:$0xf]
                %331 = vst [vmem:[%s327 + $0x4] sm:$0xf] %v330
                %v332 = vld [vmem:[%s326 + $0x20] sm:$0xf]
                %333 = vst [vmem:[%s327 + $0x8] sm:$0xf] %v332
                %v334 = vld [vmem:[%s326 + $0x24] sm:$0xf]
                %335 = vst [vmem:[%s327 + $0xc] sm:$0xf] %v334
                %v336 = vld [vmem:[%s326 + $0x40] sm:$0xf]
                %337 = vst [vmem:[%s327 + $0x10] sm:$0xf] %v336
                %v338 = vld [vmem:[%s326 + $0x44] sm:$0xf]
                %339 = vst [vmem:[%s327 + $0x14] sm:$0xf] %v338
                %v340 = vld [vmem:[%s326 + $0x60] sm:$0xf]
                %341 = vst [vmem:[%s327 + $0x18] sm:$0xf] %v340
                %v342 = vld [vmem:[%s326 + $0x64] sm:$0xf]
                %343 = vst [vmem:[%s327 + $0x1c] sm:$0xf] %v342
                %v344 = vld [vmem:[%s326 + $0x80] sm:$0xf]
                %345 = vst [vmem:[%s327 + $0x20] sm:$0xf] %v344
                %v346 = vld [vmem:[%s326 + $0x84] sm:$0xf]
                %347 = vst [vmem:[%s327 + $0x24] sm:$0xf] %v346
                %v348 = vld [vmem:[%s326 + $0xa0] sm:$0xf]
                %349 = vst [vmem:[%s327 + $0x28] sm:$0xf] %v348
                %v350 = vld [vmem:[%s326 + $0xa4] sm:$0xf]
                %351 = vst [vmem:[%s327 + $0x2c] sm:$0xf] %v350
                %v352 = vld [vmem:[%s326 + $0xc0] sm:$0xf]
                %353 = vst [vmem:[%s327 + $0x30] sm:$0xf] %v352
                %v354 = vld [vmem:[%s326 + $0xc4] sm:$0xf]
                %355 = vst [vmem:[%s327 + $0x34] sm:$0xf] %v354
                %v356 = vld [vmem:[%s326 + $0xe0] sm:$0xf]
                %357 = vst [vmem:[%s327 + $0x38] sm:$0xf] %v356
                %v358 = vld [vmem:[%s326 + $0xe4] sm:$0xf]
                %359 = vst [vmem:[%s327 + $0x3c] sm:$0xf] %v358
                %v360 = vld [vmem:[%s326 + $0x100] sm:$0xf]
                %361 = vst [vmem:[%s327 + $0x40] sm:$0xf] %v360
                %v362 = vld [vmem:[%s326 + $0x104] sm:$0xf]
                %363 = vst [vmem:[%s327 + $0x44] sm:$0xf] %v362
                %v364 = vld [vmem:[%s326 + $0x120] sm:$0xf]
                %365 = vst [vmem:[%s327 + $0x48] sm:$0xf] %v364
                %v366 = vld [vmem:[%s326 + $0x124] sm:$0xf]
                %367 = vst [vmem:[%s327 + $0x4c] sm:$0xf] %v366
                %v368 = vld [vmem:[%s326 + $0x140] sm:$0xf]
                %369 = vst [vmem:[%s327 + $0x50] sm:$0xf] %v368
                %v370 = vld [vmem:[%s326 + $0x144] sm:$0xf]
                %371 = vst [vmem:[%s327 + $0x54] sm:$0xf] %v370
                %v372 = vld [vmem:[%s326 + $0x160] sm:$0xf]
                %373 = vst [vmem:[%s327 + $0x58] sm:$0xf] %v372
                %v374 = vld [vmem:[%s326 + $0x164] sm:$0xf]
                %375 = vst [vmem:[%s327 + $0x5c] sm:$0xf] %v374
                %v376 = vld [vmem:[%s326 + $0x180] sm:$0xf]
                %377 = vst [vmem:[%s327 + $0x60] sm:$0xf] %v376
                %v378 = vld [vmem:[%s326 + $0x184] sm:$0xf]
                %379 = vst [vmem:[%s327 + $0x64] sm:$0xf] %v378
              $region73: #{tpu_custom_call.1} parent=67 // loop_footer
                %s325 = sadd.s32 1, %s321
              $region74: #{tpu_custom_call.1} parent=67 // loop_footer_branch
                %320 = sbr.rel target = $region70
              $region75: #{tpu_custom_call.1} parent=67 // loop_exit
                _
            $region68: #{tpu_custom_call.1} parent=59 // pred_fallthru
              _
          $region60: #{tpu_custom_call.1} parent=55 // pred_fallthru
            _
          %451 = vnop
        $region56: #{tpu_custom_call.1} parent=51 // pred_fallthru
          _
      $region52: #{tpu_custom_call.1} parent=5 // pred_fallthru
        _
      %p452 = scmp.le.s32.totalorder 1, %s16
      %p453 = scmp.lt.s32.totalorder %s16, 5
      %p454 = pnand %p452, %p453
      %p455 = pneg %p454
      // Predicated region
      $region94: #{tpu_custom_call.1} parent=5 // pred_check
        _
      $region95: #{tpu_custom_call.1} parent=5 // pred_check_branch
        %457 = sbr.rel (%p454) target = $region97
      $region96: #{tpu_custom_call.1} parent=5 // pred_region
        %s458 = ssub.s32 %s16, 1
        %s459 = sand.u32 %s29, 1
        %s460 = sand.u32 %s29, 1
        %s461 = smul.addr %s460, 104
        %s462 = scalar_lea.vmem [#allocation2], %s461
        // Predicated region
        $region98: #{tpu_custom_call.1} parent=96 // pred_check
          %p463 = pneg %p42
        $region99: #{tpu_custom_call.1} parent=96 // pred_check_branch
          %465 = sbr.rel (%p463) target = $region101
        $region100: #{tpu_custom_call.1} parent=96 // pred_region
          _
        $region101: #{tpu_custom_call.1} parent=96 // pred_fallthru
          _
        %s466 = sand.u32 %s29, 1
        %s467 = sand.u32 %s29, 1
        %s468 = smul.addr %s467, 104
        %s469 = scalar_lea.vmem [#allocation2], %s468
        %p470 = pneg %p42
        %p471 = pneg %p39
        %p472 = pneg %p63
        %p473 = pneg %p60
        %p474 = pneg %p84
        %p475 = pneg %p81
        %p476 = pneg %p105
        %p477 = pneg %p102
        %p478 = pneg %p126
        %p479 = pneg %p123
        %p480 = pneg %p147
        %p481 = pneg %p144
        %p482 = pneg %p168
        %p483 = pneg %p165
        %p484 = pneg %p189
        %p485 = pneg %p186
        %p486 = pneg %p210
        %p487 = pneg %p207
        %p488 = pneg %p231
        %p489 = pneg %p228
        %p490 = pneg %p257
        %p491 = pneg %p254
        %s492 = smul.u32 2, %s21
        %p493 = scmp.lt.s32.totalorder %s492, 7
        %s494 = scalar_select %p493, %s492, 7
        %s495 = smul.addr %s494, 8
        %s496 = scalar_lea.vmem %s10, %s495
        %s497 = smul.u32 2, %s21
        %s498 = smul.u32 2, %s21
        %p499 = scmp.lt.s32.totalorder %s498, 7
        %s500 = scalar_select %p499, %s498, 7
        %s501 = smul.addr %s500, 8
        %s502 = scalar_lea.vmem %s10, %s501
        %s503 = smul.u32 2, %s21
        %v505 = vld [vmem:[%s1] sm:$0xff]
        %v506 = vld [vmem:[%s1 + $0x8] sm:$0xff]
        %v507 = vld [vmem:[%s1 + $0x10] sm:$0xff]
        %v508 = vld [vmem:[%s2] sm:$0x3]
        %v509 = vld [vmem:[%s4] sm:$0x1]
        %v510 = vld [vmem:[%s6] sm:$0x1]
        %v511 = vld [vmem:[%s7] sm:$0xf]
        %v512 = vld [vmem:[%s7 + $0x4] sm:$0xf]
        %v513 = vld [vmem:[%s7 + $0x8] sm:$0xf]
        %v514 = vld [vmem:[%s7 + $0xc] sm:$0xf]
        %v515 = vld [vmem:[%s8] sm:$0xf]
        %v516 = vld [vmem:[%s8 + $0x4] sm:$0xf]
        %v517 = vld [vmem:[%s9] sm:$0x1]
        %v518 = vld [vmem:[%s462] sm:$0xf]
        %v519 = vld [vmem:[%s462 + $0x4] sm:$0xf]
        %v521 = vlaneseq
        %v522 = vshrl.u32 %v521, 7
        %v523 = vsub.s32 0, %v522
        %v524 = vrot.slane %v508, %v523
        %v525 = vlaneseq
        %v526 = vshrl.u32 %v525, 7
        %v527 = vsub.s32 1, %v526
        %v528 = vrot.slane %v508, %v527
        %v533 = vunpack.c.l.b16 %v518
        %v534 = vunpack.c.l.b16 %v519
        %v535 = vpack.c.b16 %v534, %v533
        %v539 = vunpack.c.l.b16 %v505
        %v540 = vunpack.c.h.b16 %v505
        %v541 = vunpack.c.l.b16 %v506
        %v542 = vunpack.c.h.b16 %v506
        %v543 = vunpack.c.l.b16 %v507
        %v544 = vunpack.c.h.b16 %v507
        %v545 = vpack.c.b16 %v541, %v539
        %v546 = vpack.c.b16 %v542, %v540
        %v547 = vpack.c.b16 %v543, %v543
        %v548 = vpack.c.b16 %v544, %v544
        %vm551 = vcmask 195584
        %v553 = vsel %vm551, %v535, 0
        %vm555 = vcmask 1043456
        %v557 = vsel %vm555, %v547, 0
        %v560 = vsel %vm555, %v548, 0
        %562 = vmatprep.subr.bf16.mxu0 %v546
        %563 = vmatpush1.bf16.msra.mxu0 %v545
        %564 = vmatprep.subr.bf16.mxu0 %v560
        %565 = vmatpush1.bf16.msra.mxu0 %v557
        %566 = vmatprep.subr.bf16.mxu0 0
        %567 = vmatpush1.bf16.msra.mxu0 0
        %568 = vmatprep.subr.bf16.mxu0 0
        %569 = vmatpush1.bf16.msra.mxu0 0
        %570 = vmatprep.subr.bf16.mxu0 0
        %571 = vmatpush1.bf16.msra.mxu0 0
        %572 = vmatprep.subr.bf16.mxu0 0
        %573 = vmatpush1.bf16.msra.mxu0 0
        %574 = vmatprep.subr.bf16.mxu0 0
        %575 = vmatpush1.bf16.msra.mxu0 0
        %576 = vmatprep.subr.bf16.mxu0 0
        %577 = vmatpush1.bf16.msra.mxu0 0
        %578 = vmatprep.subr.bf16.mxu0 0
        %579 = vmatpush1.bf16.msra.mxu0 0
        %580 = vmatprep.subr.bf16.mxu0 0
        %581 = vmatpush1.bf16.msra.mxu0 0
        %582 = vmatprep.subr.bf16.mxu0 0
        %583 = vmatpush1.bf16.msra.mxu0 0
        %584 = vmatprep.subr.bf16.mxu0 0
        %585 = vmatpush1.bf16.msra.mxu0 0
        %586 = vmatprep.subr.bf16.mxu0 0
        %587 = vmatpush1.bf16.msra.mxu0 0
        %588 = vmatprep.subr.bf16.mxu0 0
        %589 = vmatpush1.bf16.msra.mxu0 0
        %590 = vmatprep.subr.bf16.mxu0 0
        %591 = vmatpush1.bf16.msra.mxu0 0
        %592 = vmatprep.subr.bf16.mxu0 0
        %593 = vmatpush1.bf16.msra.mxu0 0
        %594 = vmatprep.mubr.bf16.mxu0 0
        %595 = vmatmul.mubr.bf16.gmra.mrb[0].mxu0 %v553
        %v596 = vpop.f32.mrb[0].mxu0
        %v597 = vadd.f32 %v524, %v596
        %v598 = vpop.f32.mrb[0].mxu0
        %v599 = vadd.f32 %v528, %v598
        %v600 = vpop.f32.mrb[0].mxu0
        %v601 = vadd.f32 %v524, %v600
        %v602 = vpop.f32.mrb[0].mxu0
        %v603 = vadd.f32 %v528, %v602
        %604 = vdwg.mxu0
        %v605 = vmax.f32 %v597, 0.0
        %v606 = vmax.f32 %v599, 0.0
        %v607 = vmax.f32 %v601, 0.0
        %v608 = vmax.f32 %v603, 0.0
        %v609 = vpack.c.bf16 %v607, %v605
        %v610 = vpack.c.bf16 %v608, %v606
        %s611 = scalar_lea.vmem %s462, 8 [#allocation2]
        %v612 = vld [vmem:[%s611] sm:$0xf]
        %v613 = vld [vmem:[%s611 + $0x4] sm:$0xf]
        %v616 = vunpack.c.l.b16 %v612
        %v617 = vunpack.c.l.b16 %v613
        %v618 = vpack.c.b16 %v617, %v616
        %v620 = vsel %vm551, %v618, 0
        %622 = vmatprep.subr.bf16.mxu0 %v546
        %623 = vmatpush1.bf16.msra.mxu0 %v545
        %624 = vmatprep.subr.bf16.mxu0 %v560
        %625 = vmatpush1.bf16.msra.mxu0 %v557
        %626 = vmatprep.subr.bf16.mxu0 0
        %627 = vmatpush1.bf16.msra.mxu0 0
        %628 = vmatprep.subr.bf16.mxu0 0
        %629 = vmatpush1.bf16.msra.mxu0 0
        %630 = vmatprep.subr.bf16.mxu0 0
        %631 = vmatpush1.bf16.msra.mxu0 0
        %632 = vmatprep.subr.bf16.mxu0 0
        %633 = vmatpush1.bf16.msra.mxu0 0
        %634 = vmatprep.subr.bf16.mxu0 0
        %635 = vmatpush1.bf16.msra.mxu0 0
        %636 = vmatprep.subr.bf16.mxu0 0
        %637 = vmatpush1.bf16.msra.mxu0 0
        %638 = vmatprep.subr.bf16.mxu0 0
        %639 = vmatpush1.bf16.msra.mxu0 0
        %640 = vmatprep.subr.bf16.mxu0 0
        %641 = vmatpush1.bf16.msra.mxu0 0
        %642 = vmatprep.subr.bf16.mxu0 0
        %643 = vmatpush1.bf16.msra.mxu0 0
        %644 = vmatprep.subr.bf16.mxu0 0
        %645 = vmatpush1.bf16.msra.mxu0 0
        %646 = vmatprep.subr.bf16.mxu0 0
        %647 = vmatpush1.bf16.msra.mxu0 0
        %648 = vmatprep.subr.bf16.mxu0 0
        %649 = vmatpush1.bf16.msra.mxu0 0
        %650 = vmatprep.subr.bf16.mxu0 0
        %651 = vmatpush1.bf16.msra.mxu0 0
        %652 = vmatprep.subr.bf16.mxu0 0
        %653 = vmatpush1.bf16.msra.mxu0 0
        %654 = vmatprep.mubr.bf16.mxu0 0
        %655 = vmatmul.mubr.bf16.gmra.mrb[0].mxu0 %v620
        %v656 = vpop.f32.mrb[0].mxu0
        %v657 = vadd.f32 %v524, %v656
        %v658 = vpop.f32.mrb[0].mxu0
        %v659 = vadd.f32 %v528, %v658
        %v660 = vpop.f32.mrb[0].mxu0
        %v661 = vadd.f32 %v524, %v660
        %v662 = vpop.f32.mrb[0].mxu0
        %v663 = vadd.f32 %v528, %v662
        %664 = vdwg.mxu0
        %v665 = vmax.f32 %v657, 0.0
        %v666 = vmax.f32 %v659, 0.0
        %v667 = vmax.f32 %v661, 0.0
        %v668 = vmax.f32 %v663, 0.0
        %v669 = vpack.c.bf16 %v667, %v665
        %v670 = vpack.c.bf16 %v668, %v666
        %s671 = scalar_lea.vmem %s462, 16 [#allocation2]
        %v672 = vld [vmem:[%s671] sm:$0xf]
        %v673 = vld [vmem:[%s671 + $0x4] sm:$0xf]
        %v676 = vunpack.c.l.b16 %v672
        %v677 = vunpack.c.l.b16 %v673
        %v678 = vpack.c.b16 %v677, %v676
        %v680 = vsel %vm551, %v678, 0
        %682 = vmatprep.subr.bf16.mxu0 %v546
        %683 = vmatpush1.bf16.msra.mxu0 %v545
        %684 = vmatprep.subr.bf16.mxu0 %v560
        %685 = vmatpush1.bf16.msra.mxu0 %v557
        %686 = vmatprep.subr.bf16.mxu0 0
        %687 = vmatpush1.bf16.msra.mxu0 0
        %688 = vmatprep.subr.bf16.mxu0 0
        %689 = vmatpush1.bf16.msra.mxu0 0
        %690 = vmatprep.subr.bf16.mxu0 0
        %691 = vmatpush1.bf16.msra.mxu0 0
        %692 = vmatprep.subr.bf16.mxu0 0
        %693 = vmatpush1.bf16.msra.mxu0 0
        %694 = vmatprep.subr.bf16.mxu0 0
        %695 = vmatpush1.bf16.msra.mxu0 0
        %696 = vmatprep.subr.bf16.mxu0 0
        %697 = vmatpush1.bf16.msra.mxu0 0
        %698 = vmatprep.subr.bf16.mxu0 0
        %699 = vmatpush1.bf16.msra.mxu0 0
        %700 = vmatprep.subr.bf16.mxu0 0
        %701 = vmatpush1.bf16.msra.mxu0 0
        %702 = vmatprep.subr.bf16.mxu0 0
        %703 = vmatpush1.bf16.msra.mxu0 0
        %704 = vmatprep.subr.bf16.mxu0 0
        %705 = vmatpush1.bf16.msra.mxu0 0
        %706 = vmatprep.subr.bf16.mxu0 0
        %707 = vmatpush1.bf16.msra.mxu0 0
        %708 = vmatprep.subr.bf16.mxu0 0
        %709 = vmatpush1.bf16.msra.mxu0 0
        %710 = vmatprep.subr.bf16.mxu0 0
        %711 = vmatpush1.bf16.msra.mxu0 0
        %712 = vmatprep.subr.bf16.mxu0 0
        %713 = vmatpush1.bf16.msra.mxu0 0
        %714 = vmatprep.mubr.bf16.mxu0 0
        %715 = vmatmul.mubr.bf16.gmra.mrb[0].mxu0 %v680
        %v716 = vpop.f32.mrb[0].mxu0
        %v717 = vadd.f32 %v524, %v716
        %v718 = vpop.f32.mrb[0].mxu0
        %v719 = vadd.f32 %v528, %v718
        %v720 = vpop.f32.mrb[0].mxu0
        %v721 = vadd.f32 %v524, %v720
        %v722 = vpop.f32.mrb[0].mxu0
        %v723 = vadd.f32 %v528, %v722
        %724 = vdwg.mxu0
        %v725 = vmax.f32 %v717, 0.0
        %v726 = vmax.f32 %v719, 0.0
        %v727 = vmax.f32 %v721, 0.0
        %v728 = vmax.f32 %v723, 0.0
        %v729 = vpack.c.bf16 %v727, %v725
        %v730 = vpack.c.bf16 %v728, %v726
        %s731 = scalar_lea.vmem %s462, 24 [#allocation2]
        %v732 = vld [vmem:[%s731] sm:$0xf]
        %v733 = vld [vmem:[%s731 + $0x4] sm:$0xf]
        %v736 = vunpack.c.l.b16 %v732
        %v737 = vunpack.c.l.b16 %v733
        %v738 = vpack.c.b16 %v737, %v736
        %v740 = vsel %vm551, %v738, 0
        %742 = vmatprep.subr.bf16.mxu0 %v546
        %743 = vmatpush1.bf16.msra.mxu0 %v545
        %744 = vmatprep.subr.bf16.mxu0 %v560
        %745 = vmatpush1.bf16.msra.mxu0 %v557
        %746 = vmatprep.subr.bf16.mxu0 0
        %747 = vmatpush1.bf16.msra.mxu0 0
        %748 = vmatprep.subr.bf16.mxu0 0
        %749 = vmatpush1.bf16.msra.mxu0 0
        %750 = vmatprep.subr.bf16.mxu0 0
        %751 = vmatpush1.bf16.msra.mxu0 0
        %752 = vmatprep.subr.bf16.mxu0 0
        %753 = vmatpush1.bf16.msra.mxu0 0
        %754 = vmatprep.subr.bf16.mxu0 0
        %755 = vmatpush1.bf16.msra.mxu0 0
        %756 = vmatprep.subr.bf16.mxu0 0
        %757 = vmatpush1.bf16.msra.mxu0 0
        %758 = vmatprep.subr.bf16.mxu0 0
        %759 = vmatpush1.bf16.msra.mxu0 0
        %760 = vmatprep.subr.bf16.mxu0 0
        %761 = vmatpush1.bf16.msra.mxu0 0
        %762 = vmatprep.subr.bf16.mxu0 0
        %763 = vmatpush1.bf16.msra.mxu0 0
        %764 = vmatprep.subr.bf16.mxu0 0
        %765 = vmatpush1.bf16.msra.mxu0 0
        %766 = vmatprep.subr.bf16.mxu0 0
        %767 = vmatpush1.bf16.msra.mxu0 0
        %768 = vmatprep.subr.bf16.mxu0 0
        %769 = vmatpush1.bf16.msra.mxu0 0
        %770 = vmatprep.subr.bf16.mxu0 0
        %771 = vmatpush1.bf16.msra.mxu0 0
        %772 = vmatprep.subr.bf16.mxu0 0
        %773 = vmatpush1.bf16.msra.mxu0 0
        %774 = vmatprep.mubr.bf16.mxu0 0
        %775 = vmatmul.mubr.bf16.gmra.mrb[0].mxu0 %v740
        %v776 = vpop.f32.mrb[0].mxu0
        %v777 = vadd.f32 %v524, %v776
        %v778 = vpop.f32.mrb[0].mxu0
        %v779 = vadd.f32 %v528, %v778
        %v780 = vpop.f32.mrb[0].mxu0
        %v781 = vadd.f32 %v524, %v780
        %v782 = vpop.f32.mrb[0].mxu0
        %v783 = vadd.f32 %v528, %v782
        %784 = vdwg.mxu0
        %v785 = vmax.f32 %v777, 0.0
        %v786 = vmax.f32 %v779, 0.0
        %v787 = vmax.f32 %v781, 0.0
        %v788 = vmax.f32 %v783, 0.0
        %v789 = vpack.c.bf16 %v787, %v785
        %v790 = vpack.c.bf16 %v788, %v786
        %s791 = scalar_lea.vmem %s462, 32 [#allocation2]
        %v792 = vld [vmem:[%s791] sm:$0xf]
        %v793 = vld [vmem:[%s791 + $0x4] sm:$0xf]
        %v796 = vunpack.c.l.b16 %v792
        %v797 = vunpack.c.l.b16 %v793
        %v798 = vpack.c.b16 %v797, %v796
        %v800 = vsel %vm551, %v798, 0
        %802 = vmatprep.subr.bf16.mxu0 %v546
        %803 = vmatpush1.bf16.msra.mxu0 %v545
        %804 = vmatprep.subr.bf16.mxu0 %v560
        %805 = vmatpush1.bf16.msra.mxu0 %v557
        %806 = vmatprep.subr.bf16.mxu0 0
        %807 = vmatpush1.bf16.msra.mxu0 0
        %808 = vmatprep.subr.bf16.mxu0 0
        %809 = vmatpush1.bf16.msra.mxu0 0
        %810 = vmatprep.subr.bf16.mxu0 0
        %811 = vmatpush1.bf16.msra.mxu0 0
        %812 = vmatprep.subr.bf16.mxu0 0
        %813 = vmatpush1.bf16.msra.mxu0 0
        %814 = vmatprep.subr.bf16.mxu0 0
        %815 = vmatpush1.bf16.msra.mxu0 0
        %816 = vmatprep.subr.bf16.mxu0 0
        %817 = vmatpush1.bf16.msra.mxu0 0
        %818 = vmatprep.subr.bf16.mxu0 0
        %819 = vmatpush1.bf16.msra.mxu0 0
        %820 = vmatprep.subr.bf16.mxu0 0
        %821 = vmatpush1.bf16.msra.mxu0 0
        %822 = vmatprep.subr.bf16.mxu0 0
        %823 = vmatpush1.bf16.msra.mxu0 0
        %824 = vmatprep.subr.bf16.mxu0 0
        %825 = vmatpush1.bf16.msra.mxu0 0
        %826 = vmatprep.subr.bf16.mxu0 0
        %827 = vmatpush1.bf16.msra.mxu0 0
        %828 = vmatprep.subr.bf16.mxu0 0
        %829 = vmatpush1.bf16.msra.mxu0 0
        %830 = vmatprep.subr.bf16.mxu0 0
        %831 = vmatpush1.bf16.msra.mxu0 0
        %832 = vmatprep.subr.bf16.mxu0 0
        %833 = vmatpush1.bf16.msra.mxu0 0
        %834 = vmatprep.mubr.bf16.mxu0 0
        %835 = vmatmul.mubr.bf16.gmra.mrb[0].mxu0 %v800
        %v836 = vpop.f32.mrb[0].mxu0
        %v837 = vadd.f32 %v524, %v836
        %v838 = vpop.f32.mrb[0].mxu0
        %v839 = vadd.f32 %v528, %v838
        %v840 = vpop.f32.mrb[0].mxu0
        %v841 = vadd.f32 %v524, %v840
        %v842 = vpop.f32.mrb[0].mxu0
        %v843 = vadd.f32 %v528, %v842
        %844 = vdwg.mxu0
        %v845 = vmax.f32 %v837, 0.0
        %v846 = vmax.f32 %v839, 0.0
        %v847 = vmax.f32 %v841, 0.0
        %v848 = vmax.f32 %v843, 0.0
        %v849 = vpack.c.bf16 %v847, %v845
        %v850 = vpack.c.bf16 %v848, %v846
        %s851 = scalar_lea.vmem %s462, 40 [#allocation2]
        %v852 = vld [vmem:[%s851] sm:$0xf]
        %v853 = vld [vmem:[%s851 + $0x4] sm:$0xf]
        %v856 = vunpack.c.l.b16 %v852
        %v857 = vunpack.c.l.b16 %v853
        %v858 = vpack.c.b16 %v857, %v856
        %v860 = vsel %vm551, %v858, 0
        %862 = vmatprep.subr.bf16.mxu0 %v546
        %863 = vmatpush1.bf16.msra.mxu0 %v545
        %864 = vmatprep.subr.bf16.mxu0 %v560
        %865 = vmatpush1.bf16.msra.mxu0 %v557
        %866 = vmatprep.subr.bf16.mxu0 0
        %867 = vmatpush1.bf16.msra.mxu0 0
        %868 = vmatprep.subr.bf16.mxu0 0
        %869 = vmatpush1.bf16.msra.mxu0 0
        %870 = vmatprep.subr.bf16.mxu0 0
        %871 = vmatpush1.bf16.msra.mxu0 0
        %872 = vmatprep.subr.bf16.mxu0 0
        %873 = vmatpush1.bf16.msra.mxu0 0
        %874 = vmatprep.subr.bf16.mxu0 0
        %875 = vmatpush1.bf16.msra.mxu0 0
        %876 = vmatprep.subr.bf16.mxu0 0
        %877 = vmatpush1.bf16.msra.mxu0 0
        %878 = vmatprep.subr.bf16.mxu0 0
        %879 = vmatpush1.bf16.msra.mxu0 0
        %880 = vmatprep.subr.bf16.mxu0 0
        %881 = vmatpush1.bf16.msra.mxu0 0
        %882 = vmatprep.subr.bf16.mxu0 0
        %883 = vmatpush1.bf16.msra.mxu0 0
        %884 = vmatprep.subr.bf16.mxu0 0
        %885 = vmatpush1.bf16.msra.mxu0 0
        %886 = vmatprep.subr.bf16.mxu0 0
        %887 = vmatpush1.bf16.msra.mxu0 0
        %888 = vmatprep.subr.bf16.mxu0 0
        %889 = vmatpush1.bf16.msra.mxu0 0
        %890 = vmatprep.subr.bf16.mxu0 0
        %891 = vmatpush1.bf16.msra.mxu0 0
        %892 = vmatprep.subr.bf16.mxu0 0
        %893 = vmatpush1.bf16.msra.mxu0 0
        %894 = vmatprep.mubr.bf16.mxu0 0
        %895 = vmatmul.mubr.bf16.gmra.mrb[0].mxu0 %v860
        %v896 = vpop.f32.mrb[0].mxu0
        %v897 = vadd.f32 %v524, %v896
        %v898 = vpop.f32.mrb[0].mxu0
        %v899 = vadd.f32 %v528, %v898
        %v900 = vpop.f32.mrb[0].mxu0
        %v901 = vadd.f32 %v524, %v900
        %v902 = vpop.f32.mrb[0].mxu0
        %v903 = vadd.f32 %v528, %v902
        %904 = vdwg.mxu0
        %v905 = vmax.f32 %v897, 0.0
        %v906 = vmax.f32 %v899, 0.0
        %v907 = vmax.f32 %v901, 0.0
        %v908 = vmax.f32 %v903, 0.0
        %v909 = vpack.c.bf16 %v907, %v905
        %v910 = vpack.c.bf16 %v908, %v906
        %s911 = scalar_lea.vmem %s462, 48 [#allocation2]
        %v912 = vld [vmem:[%s911] sm:$0xf]
        %v913 = vld [vmem:[%s911 + $0x4] sm:$0xf]
        %v916 = vunpack.c.l.b16 %v912
        %v917 = vunpack.c.l.b16 %v913
        %v918 = vpack.c.b16 %v917, %v916
        %v920 = vsel %vm551, %v918, 0
        %922 = vmatprep.subr.bf16.mxu0 %v546
        %923 = vmatpush1.bf16.msra.mxu0 %v545
        %924 = vmatprep.subr.bf16.mxu0 %v560
        %925 = vmatpush1.bf16.msra.mxu0 %v557
        %926 = vmatprep.subr.bf16.mxu0 0
        %927 = vmatpush1.bf16.msra.mxu0 0
        %928 = vmatprep.subr.bf16.mxu0 0
        %929 = vmatpush1.bf16.msra.mxu0 0
        %930 = vmatprep.subr.bf16.mxu0 0
        %931 = vmatpush1.bf16.msra.mxu0 0
        %932 = vmatprep.subr.bf16.mxu0 0
        %933 = vmatpush1.bf16.msra.mxu0 0
        %934 = vmatprep.subr.bf16.mxu0 0
        %935 = vmatpush1.bf16.msra.mxu0 0
        %936 = vmatprep.subr.bf16.mxu0 0
        %937 = vmatpush1.bf16.msra.mxu0 0
        %938 = vmatprep.subr.bf16.mxu0 0
        %939 = vmatpush1.bf16.msra.mxu0 0
        %940 = vmatprep.subr.bf16.mxu0 0
        %941 = vmatpush1.bf16.msra.mxu0 0
        %942 = vmatprep.subr.bf16.mxu0 0
        %943 = vmatpush1.bf16.msra.mxu0 0
        %944 = vmatprep.subr.bf16.mxu0 0
        %945 = vmatpush1.bf16.msra.mxu0 0
        %946 = vmatprep.subr.bf16.mxu0 0
        %947 = vmatpush1.bf16.msra.mxu0 0
        %948 = vmatprep.subr.bf16.mxu0 0
        %949 = vmatpush1.bf16.msra.mxu0 0
        %950 = vmatprep.subr.bf16.mxu0 0
        %951 = vmatpush1.bf16.msra.mxu0 0
        %952 = vmatprep.subr.bf16.mxu0 0
        %953 = vmatpush1.bf16.msra.mxu0 0
        %954 = vmatprep.mubr.bf16.mxu0 0
        %955 = vmatmul.mubr.bf16.gmra.mrb[0].mxu0 %v920
        %v956 = vpop.f32.mrb[0].mxu0
        %v957 = vadd.f32 %v524, %v956
        %v958 = vpop.f32.mrb[0].mxu0
        %v959 = vadd.f32 %v528, %v958
        %v960 = vpop.f32.mrb[0].mxu0
        %v961 = vadd.f32 %v524, %v960
        %v962 = vpop.f32.mrb[0].mxu0
        %v963 = vadd.f32 %v528, %v962
        %964 = vdwg.mxu0
        %v965 = vmax.f32 %v957, 0.0
        %v966 = vmax.f32 %v959, 0.0
        %v967 = vmax.f32 %v961, 0.0
        %v968 = vmax.f32 %v963, 0.0
        %v969 = vpack.c.bf16 %v967, %v965
        %v970 = vpack.c.bf16 %v968, %v966
        %s971 = scalar_lea.vmem %s462, 56 [#allocation2]
        %v972 = vld [vmem:[%s971] sm:$0xf]
        %v973 = vld [vmem:[%s971 + $0x4] sm:$0xf]
        %v976 = vunpack.c.l.b16 %v972
        %v977 = vunpack.c.l.b16 %v973
        %v978 = vpack.c.b16 %v977, %v976
        %v980 = vsel %vm551, %v978, 0
        %982 = vmatprep.subr.bf16.mxu0 %v546
        %983 = vmatpush1.bf16.msra.mxu0 %v545
        %984 = vmatprep.subr.bf16.mxu0 %v560
        %985 = vmatpush1.bf16.msra.mxu0 %v557
        %986 = vmatprep.subr.bf16.mxu0 0
        %987 = vmatpush1.bf16.msra.mxu0 0
        %988 = vmatprep.subr.bf16.mxu0 0
        %989 = vmatpush1.bf16.msra.mxu0 0
        %990 = vmatprep.subr.bf16.mxu0 0
        %991 = vmatpush1.bf16.msra.mxu0 0
        %992 = vmatprep.subr.bf16.mxu0 0
        %993 = vmatpush1.bf16.msra.mxu0 0
        %994 = vmatprep.subr.bf16.mxu0 0
        %995 = vmatpush1.bf16.msra.mxu0 0
        %996 = vmatprep.subr.bf16.mxu0 0
        %997 = vmatpush1.bf16.msra.mxu0 0
        %998 = vmatprep.subr.bf16.mxu0 0
        %999 = vmatpush1.bf16.msra.mxu0 0
        %1000 = vmatprep.subr.bf16.mxu0 0
        %1001 = vmatpush1.bf16.msra.mxu0 0
        %1002 = vmatprep.subr.bf16.mxu0 0
        %1003 = vmatpush1.bf16.msra.mxu0 0
        %1004 = vmatprep.subr.bf16.mxu0 0
        %1005 = vmatpush1.bf16.msra.mxu0 0
        %1006 = vmatprep.subr.bf16.mxu0 0
        %1007 = vmatpush1.bf16.msra.mxu0 0
        %1008 = vmatprep.subr.bf16.mxu0 0
        %1009 = vmatpush1.bf16.msra.mxu0 0
        %1010 = vmatprep.subr.bf16.mxu0 0
        %1011 = vmatpush1.bf16.msra.mxu0 0
        %1012 = vmatprep.subr.bf16.mxu0 0
        %1013 = vmatpush1.bf16.msra.mxu0 0
        %1014 = vmatprep.mubr.bf16.mxu0 0
        %1015 = vmatmul.mubr.bf16.gmra.mrb[0].mxu0 %v980
        %v1016 = vpop.f32.mrb[0].mxu0
        %v1017 = vadd.f32 %v524, %v1016
        %v1018 = vpop.f32.mrb[0].mxu0
        %v1019 = vadd.f32 %v528, %v1018
        %v1020 = vpop.f32.mrb[0].mxu0
        %v1021 = vadd.f32 %v524, %v1020
        %v1022 = vpop.f32.mrb[0].mxu0
        %v1023 = vadd.f32 %v528, %v1022
        %1024 = vdwg.mxu0
        %v1025 = vmax.f32 %v1017, 0.0
        %v1026 = vmax.f32 %v1019, 0.0
        %v1027 = vmax.f32 %v1021, 0.0
        %v1028 = vmax.f32 %v1023, 0.0
        %v1029 = vpack.c.bf16 %v1027, %v1025
        %v1030 = vpack.c.bf16 %v1028, %v1026
        %s1031 = scalar_lea.vmem %s462, 64 [#allocation2]
        %v1032 = vld [vmem:[%s1031] sm:$0xf]
        %v1033 = vld [vmem:[%s1031 + $0x4] sm:$0xf]
        %v1036 = vunpack.c.l.b16 %v1032
        %v1037 = vunpack.c.l.b16 %v1033
        %v1038 = vpack.c.b16 %v1037, %v1036
        %v1040 = vsel %vm551, %v1038, 0
        %1042 = vmatprep.subr.bf16.mxu0 %v546
        %1043 = vmatpush1.bf16.msra.mxu0 %v545
        %1044 = vmatprep.subr.bf16.mxu0 %v560
        %1045 = vmatpush1.bf16.msra.mxu0 %v557
        %1046 = vmatprep.subr.bf16.mxu0 0
        %1047 = vmatpush1.bf16.msra.mxu0 0
        %1048 = vmatprep.subr.bf16.mxu0 0
        %1049 = vmatpush1.bf16.msra.mxu0 0
        %1050 = vmatprep.subr.bf16.mxu0 0
        %1051 = vmatpush1.bf16.msra.mxu0 0
        %1052 = vmatprep.subr.bf16.mxu0 0
        %1053 = vmatpush1.bf16.msra.mxu0 0
        %1054 = vmatprep.subr.bf16.mxu0 0
        %1055 = vmatpush1.bf16.msra.mxu0 0
        %1056 = vmatprep.subr.bf16.mxu0 0
        %1057 = vmatpush1.bf16.msra.mxu0 0
        %1058 = vmatprep.subr.bf16.mxu0 0
        %1059 = vmatpush1.bf16.msra.mxu0 0
        %1060 = vmatprep.subr.bf16.mxu0 0
        %1061 = vmatpush1.bf16.msra.mxu0 0
        %1062 = vmatprep.subr.bf16.mxu0 0
        %1063 = vmatpush1.bf16.msra.mxu0 0
        %1064 = vmatprep.subr.bf16.mxu0 0
        %1065 = vmatpush1.bf16.msra.mxu0 0
        %1066 = vmatprep.subr.bf16.mxu0 0
        %1067 = vmatpush1.bf16.msra.mxu0 0
        %1068 = vmatprep.subr.bf16.mxu0 0
        %1069 = vmatpush1.bf16.msra.mxu0 0
        %1070 = vmatprep.subr.bf16.mxu0 0
        %1071 = vmatpush1.bf16.msra.mxu0 0
        %1072 = vmatprep.subr.bf16.mxu0 0
        %1073 = vmatpush1.bf16.msra.mxu0 0
        %1074 = vmatprep.mubr.bf16.mxu0 0
        %1075 = vmatmul.mubr.bf16.gmra.mrb[0].mxu0 %v1040
        %v1076 = vpop.f32.mrb[0].mxu0
        %v1077 = vadd.f32 %v524, %v1076
        %v1078 = vpop.f32.mrb[0].mxu0
        %v1079 = vadd.f32 %v528, %v1078
        %v1080 = vpop.f32.mrb[0].mxu0
        %v1081 = vadd.f32 %v524, %v1080
        %v1082 = vpop.f32.mrb[0].mxu0
        %v1083 = vadd.f32 %v528, %v1082
        %1084 = vdwg.mxu0
        %v1085 = vmax.f32 %v1077, 0.0
        %v1086 = vmax.f32 %v1079, 0.0
        %v1087 = vmax.f32 %v1081, 0.0
        %v1088 = vmax.f32 %v1083, 0.0
        %v1089 = vpack.c.bf16 %v1087, %v1085
        %v1090 = vpack.c.bf16 %v1088, %v1086
        %s1091 = scalar_lea.vmem %s462, 72 [#allocation2]
        %v1092 = vld [vmem:[%s1091] sm:$0xf]
        %v1093 = vld [vmem:[%s1091 + $0x4] sm:$0xf]
        %v1096 = vunpack.c.l.b16 %v1092
        %v1097 = vunpack.c.l.b16 %v1093
        %v1098 = vpack.c.b16 %v1097, %v1096
        %v1100 = vsel %vm551, %v1098, 0
        %1102 = vmatprep.subr.bf16.mxu0 %v546
        %1103 = vmatpush1.bf16.msra.mxu0 %v545
        %1104 = vmatprep.subr.bf16.mxu0 %v560
        %1105 = vmatpush1.bf16.msra.mxu0 %v557
        %1106 = vmatprep.subr.bf16.mxu0 0
        %1107 = vmatpush1.bf16.msra.mxu0 0
        %1108 = vmatprep.subr.bf16.mxu0 0
        %1109 = vmatpush1.bf16.msra.mxu0 0
        %1110 = vmatprep.subr.bf16.mxu0 0
        %1111 = vmatpush1.bf16.msra.mxu0 0
        %1112 = vmatprep.subr.bf16.mxu0 0
        %1113 = vmatpush1.bf16.msra.mxu0 0
        %1114 = vmatprep.subr.bf16.mxu0 0
        %1115 = vmatpush1.bf16.msra.mxu0 0
        %1116 = vmatprep.subr.bf16.mxu0 0
        %1117 = vmatpush1.bf16.msra.mxu0 0
        %1118 = vmatprep.subr.bf16.mxu0 0
        %1119 = vmatpush1.bf16.msra.mxu0 0
        %1120 = vmatprep.subr.bf16.mxu0 0
        %1121 = vmatpush1.bf16.msra.mxu0 0
        %1122 = vmatprep.subr.bf16.mxu0 0
        %1123 = vmatpush1.bf16.msra.mxu0 0
        %1124 = vmatprep.subr.bf16.mxu0 0
        %1125 = vmatpush1.bf16.msra.mxu0 0
        %1126 = vmatprep.subr.bf16.mxu0 0
        %1127 = vmatpush1.bf16.msra.mxu0 0
        %1128 = vmatprep.subr.bf16.mxu0 0
        %1129 = vmatpush1.bf16.msra.mxu0 0
        %1130 = vmatprep.subr.bf16.mxu0 0
        %1131 = vmatpush1.bf16.msra.mxu0 0
        %1132 = vmatprep.subr.bf16.mxu0 0
        %1133 = vmatpush1.bf16.msra.mxu0 0
        %1134 = vmatprep.mubr.bf16.mxu0 0
        %1135 = vmatmul.mubr.bf16.gmra.mrb[0].mxu0 %v1100
        %v1136 = vpop.f32.mrb[0].mxu0
        %v1137 = vadd.f32 %v524, %v1136
        %v1138 = vpop.f32.mrb[0].mxu0
        %v1139 = vadd.f32 %v528, %v1138
        %v1140 = vpop.f32.mrb[0].mxu0
        %v1141 = vadd.f32 %v524, %v1140
        %v1142 = vpop.f32.mrb[0].mxu0
        %v1143 = vadd.f32 %v528, %v1142
        %1144 = vdwg.mxu0
        %v1145 = vmax.f32 %v1137, 0.0
        %v1146 = vmax.f32 %v1139, 0.0
        %v1147 = vmax.f32 %v1141, 0.0
        %v1148 = vmax.f32 %v1143, 0.0
        %v1149 = vpack.c.bf16 %v1147, %v1145
        %v1150 = vpack.c.bf16 %v1148, %v1146
        %s1151 = scalar_lea.vmem %s462, 80 [#allocation2]
        %v1152 = vld [vmem:[%s1151] sm:$0xf]
        %v1153 = vld [vmem:[%s1151 + $0x4] sm:$0xf]
        %v1156 = vunpack.c.l.b16 %v1152
        %v1157 = vunpack.c.l.b16 %v1153
        %v1158 = vpack.c.b16 %v1157, %v1156
        %v1160 = vsel %vm551, %v1158, 0
        %1162 = vmatprep.subr.bf16.mxu0 %v546
        %1163 = vmatpush1.bf16.msra.mxu0 %v545
        %1164 = vmatprep.subr.bf16.mxu0 %v560
        %1165 = vmatpush1.bf16.msra.mxu0 %v557
        %1166 = vmatprep.subr.bf16.mxu0 0
        %1167 = vmatpush1.bf16.msra.mxu0 0
        %1168 = vmatprep.subr.bf16.mxu0 0
        %1169 = vmatpush1.bf16.msra.mxu0 0
        %1170 = vmatprep.subr.bf16.mxu0 0
        %1171 = vmatpush1.bf16.msra.mxu0 0
        %1172 = vmatprep.subr.bf16.mxu0 0
        %1173 = vmatpush1.bf16.msra.mxu0 0
        %1174 = vmatprep.subr.bf16.mxu0 0
        %1175 = vmatpush1.bf16.msra.mxu0 0
        %1176 = vmatprep.subr.bf16.mxu0 0
        %1177 = vmatpush1.bf16.msra.mxu0 0
        %1178 = vmatprep.subr.bf16.mxu0 0
        %1179 = vmatpush1.bf16.msra.mxu0 0
        %1180 = vmatprep.subr.bf16.mxu0 0
        %1181 = vmatpush1.bf16.msra.mxu0 0
        %1182 = vmatprep.subr.bf16.mxu0 0
        %1183 = vmatpush1.bf16.msra.mxu0 0
        %1184 = vmatprep.subr.bf16.mxu0 0
        %1185 = vmatpush1.bf16.msra.mxu0 0
        %1186 = vmatprep.subr.bf16.mxu0 0
        %1187 = vmatpush1.bf16.msra.mxu0 0
        %1188 = vmatprep.subr.bf16.mxu0 0
        %1189 = vmatpush1.bf16.msra.mxu0 0
        %1190 = vmatprep.subr.bf16.mxu0 0
        %1191 = vmatpush1.bf16.msra.mxu0 0
        %1192 = vmatprep.subr.bf16.mxu0 0
        %1193 = vmatpush1.bf16.msra.mxu0 0
        %1194 = vmatprep.mubr.bf16.mxu0 0
        %1195 = vmatmul.mubr.bf16.gmra.mrb[0].mxu0 %v1160
        %v1196 = vpop.f32.mrb[0].mxu0
        %v1197 = vadd.f32 %v524, %v1196
        %v1198 = vpop.f32.mrb[0].mxu0
        %v1199 = vadd.f32 %v528, %v1198
        %v1200 = vpop.f32.mrb[0].mxu0
        %v1201 = vadd.f32 %v524, %v1200
        %v1202 = vpop.f32.mrb[0].mxu0
        %v1203 = vadd.f32 %v528, %v1202
        %1204 = vdwg.mxu0
        %v1205 = vmax.f32 %v1197, 0.0
        %v1206 = vmax.f32 %v1199, 0.0
        %v1207 = vmax.f32 %v1201, 0.0
        %v1208 = vmax.f32 %v1203, 0.0
        %v1209 = vpack.c.bf16 %v1207, %v1205
        %v1210 = vpack.c.bf16 %v1208, %v1206
        %s1211 = scalar_lea.vmem %s462, 88 [#allocation2]
        %v1212 = vld [vmem:[%s1211] sm:$0xf]
        %v1213 = vld [vmem:[%s1211 + $0x4] sm:$0xf]
        %v1216 = vunpack.c.l.b16 %v1212
        %v1217 = vunpack.c.l.b16 %v1213
        %v1218 = vpack.c.b16 %v1217, %v1216
        %v1220 = vsel %vm551, %v1218, 0
        %1222 = vmatprep.subr.bf16.mxu0 %v546
        %1223 = vmatpush1.bf16.msra.mxu0 %v545
        %1224 = vmatprep.subr.bf16.mxu0 %v560
        %1225 = vmatpush1.bf16.msra.mxu0 %v557
        %1226 = vmatprep.subr.bf16.mxu0 0
        %1227 = vmatpush1.bf16.msra.mxu0 0
        %1228 = vmatprep.subr.bf16.mxu0 0
        %1229 = vmatpush1.bf16.msra.mxu0 0
        %1230 = vmatprep.subr.bf16.mxu0 0
        %1231 = vmatpush1.bf16.msra.mxu0 0
        %1232 = vmatprep.subr.bf16.mxu0 0
        %1233 = vmatpush1.bf16.msra.mxu0 0
        %1234 = vmatprep.subr.bf16.mxu0 0
        %1235 = vmatpush1.bf16.msra.mxu0 0
        %1236 = vmatprep.subr.bf16.mxu0 0
        %1237 = vmatpush1.bf16.msra.mxu0 0
        %1238 = vmatprep.subr.bf16.mxu0 0
        %1239 = vmatpush1.bf16.msra.mxu0 0
        %1240 = vmatprep.subr.bf16.mxu0 0
        %1241 = vmatpush1.bf16.msra.mxu0 0
        %1242 = vmatprep.subr.bf16.mxu0 0
        %1243 = vmatpush1.bf16.msra.mxu0 0
        %1244 = vmatprep.subr.bf16.mxu0 0
        %1245 = vmatpush1.bf16.msra.mxu0 0
        %1246 = vmatprep.subr.bf16.mxu0 0
        %1247 = vmatpush1.bf16.msra.mxu0 0
        %1248 = vmatprep.subr.bf16.mxu0 0
        %1249 = vmatpush1.bf16.msra.mxu0 0
        %1250 = vmatprep.subr.bf16.mxu0 0
        %1251 = vmatpush1.bf16.msra.mxu0 0
        %1252 = vmatprep.subr.bf16.mxu0 0
        %1253 = vmatpush1.bf16.msra.mxu0 0
        %1254 = vmatprep.mubr.bf16.mxu0 0
        %1255 = vmatmul.mubr.bf16.gmra.mrb[0].mxu0 %v1220
        %v1256 = vpop.f32.mrb[0].mxu0
        %v1257 = vadd.f32 %v524, %v1256
        %v1258 = vpop.f32.mrb[0].mxu0
        %v1259 = vadd.f32 %v528, %v1258
        %v1260 = vpop.f32.mrb[0].mxu0
        %v1261 = vadd.f32 %v524, %v1260
        %v1262 = vpop.f32.mrb[0].mxu0
        %v1263 = vadd.f32 %v528, %v1262
        %1264 = vdwg.mxu0
        %v1265 = vmax.f32 %v1257, 0.0
        %v1266 = vmax.f32 %v1259, 0.0
        %v1267 = vmax.f32 %v1261, 0.0
        %v1268 = vmax.f32 %v1263, 0.0
        %v1269 = vpack.c.bf16 %v1267, %v1265
        %v1270 = vpack.c.bf16 %v1268, %v1266
        %s1271 = scalar_lea.vmem %s462, 96 [#allocation2]
        %v1272 = vld [vmem:[%s1271] sm:$0xf]
        %v1273 = vld [vmem:[%s1271 + $0x4] sm:$0xf]
        %v1276 = vunpack.c.l.b16 %v1272
        %v1277 = vunpack.c.l.b16 %v1273
        %v1278 = vpack.c.b16 %v1277, %v1276
        %v1280 = vsel %vm551, %v1278, 0
        %1282 = vmatprep.subr.bf16.mxu0 %v546
        %1283 = vmatpush1.bf16.msra.mxu0 %v545
        %1284 = vmatprep.subr.bf16.mxu0 %v560
        %1285 = vmatpush1.bf16.msra.mxu0 %v557
        %1286 = vmatprep.subr.bf16.mxu0 0
        %1287 = vmatpush1.bf16.msra.mxu0 0
        %1288 = vmatprep.subr.bf16.mxu0 0
        %1289 = vmatpush1.bf16.msra.mxu0 0
        %1290 = vmatprep.subr.bf16.mxu0 0
        %1291 = vmatpush1.bf16.msra.mxu0 0
        %1292 = vmatprep.subr.bf16.mxu0 0
        %1293 = vmatpush1.bf16.msra.mxu0 0
        %1294 = vmatprep.subr.bf16.mxu0 0
        %1295 = vmatpush1.bf16.msra.mxu0 0
        %1296 = vmatprep.subr.bf16.mxu0 0
        %1297 = vmatpush1.bf16.msra.mxu0 0
        %1298 = vmatprep.subr.bf16.mxu0 0
        %1299 = vmatpush1.bf16.msra.mxu0 0
        %1300 = vmatprep.subr.bf16.mxu0 0
        %1301 = vmatpush1.bf16.msra.mxu0 0
        %1302 = vmatprep.subr.bf16.mxu0 0
        %1303 = vmatpush1.bf16.msra.mxu0 0
        %1304 = vmatprep.subr.bf16.mxu0 0
        %1305 = vmatpush1.bf16.msra.mxu0 0
        %1306 = vmatprep.subr.bf16.mxu0 0
        %1307 = vmatpush1.bf16.msra.mxu0 0
        %1308 = vmatprep.subr.bf16.mxu0 0
        %1309 = vmatpush1.bf16.msra.mxu0 0
        %1310 = vmatprep.subr.bf16.mxu0 0
        %1311 = vmatpush1.bf16.msra.mxu0 0
        %1312 = vmatprep.subr.bf16.mxu0 0
        %1313 = vmatpush1.bf16.msra.mxu0 0
        %1314 = vmatprep.mubr.bf16.mxu0 0
        %1315 = vmatmul.mubr.bf16.gmra.mrb[0].mxu0 %v1280
        %v1316 = vpop.f32.mrb[0].mxu0
        %v1317 = vadd.f32 %v524, %v1316
        %v1318 = vpop.f32.mrb[0].mxu0
        %v1319 = vadd.f32 %v528, %v1318
        %v1320 = vpop.f32.mrb[0].mxu0
        %v1321 = vadd.f32 %v524, %v1320
        %v1322 = vpop.f32.mrb[0].mxu0
        %v1323 = vadd.f32 %v528, %v1322
        %1324 = vdwg.mxu0
        %v1325 = vmax.f32 %v1317, 0.0
        %v1326 = vmax.f32 %v1319, 0.0
        %v1327 = vmax.f32 %v1321, 0.0
        %v1328 = vmax.f32 %v1323, 0.0
        %v1329 = vpack.c.bf16 %v1327, %v1325
        %v1330 = vpack.c.bf16 %v1328, %v1326
        %v1331 = vld [vmem:[%s3] sm:$0xf]
        %v1332 = vld [vmem:[%s3 + $0x4] sm:$0xf]
        %v1333 = vld [vmem:[%s3 + $0x8] sm:$0xf]
        %v1334 = vld [vmem:[%s3 + $0xc] sm:$0xf]
        %v1335 = vld [vmem:[%s3 + $0x10] sm:$0xf]
        %v1336 = vld [vmem:[%s3 + $0x14] sm:$0xf]
        %v1337 = vld [vmem:[%s3 + $0x18] sm:$0xf]
        %v1338 = vld [vmem:[%s3 + $0x1c] sm:$0xf]
        %v1339 = vld [vmem:[%s3 + $0x20] sm:$0xf]
        %v1340 = vld [vmem:[%s3 + $0x24] sm:$0xf]
        %v1341 = vld [vmem:[%s3 + $0x28] sm:$0xf]
        %v1342 = vld [vmem:[%s3 + $0x2c] sm:$0xf]
        %v1343 = vld [vmem:[%s3 + $0x30] sm:$0xf]
        %v1344 = vld [vmem:[%s3 + $0x34] sm:$0xf]
        %v1345 = vld [vmem:[%s3 + $0x38] sm:$0xf]
        %v1346 = vld [vmem:[%s3 + $0x3c] sm:$0xf]
        %v1347 = vld [vmem:[%s3 + $0x40] sm:$0xf]
        %v1348 = vld [vmem:[%s3 + $0x44] sm:$0xf]
        %v1349 = vld [vmem:[%s3 + $0x48] sm:$0xf]
        %v1350 = vld [vmem:[%s3 + $0x4c] sm:$0xf]
        %v1351 = vld [vmem:[%s3 + $0x50] sm:$0xf]
        %v1352 = vld [vmem:[%s3 + $0x54] sm:$0xf]
        %v1353 = vld [vmem:[%s3 + $0x58] sm:$0xf]
        %v1354 = vld [vmem:[%s3 + $0x5c] sm:$0xf]
        %v1355 = vld [vmem:[%s3 + $0x60] sm:$0xf]
        %v1356 = vld [vmem:[%s3 + $0x64] sm:$0xf]
        %v1357 = vld [vmem:[%s3 + $0x68] sm:$0xf]
        %v1358 = vld [vmem:[%s3 + $0x6c] sm:$0xf]
        %v1359 = vld [vmem:[%s3 + $0x70] sm:$0xf]
        %v1360 = vld [vmem:[%s3 + $0x74] sm:$0xf]
        %v1361 = vld [vmem:[%s3 + $0x78] sm:$0xf]
        %v1362 = vld [vmem:[%s3 + $0x7c] sm:$0xf]
        %s1363 = scalar_lea.vmem %s3, 128
        %v1364 = vld [vmem:[%s1363] sm:$0xf]
        %v1365 = vld [vmem:[%s1363 + $0x4] sm:$0xf]
        %v1366 = vld [vmem:[%s1363 + $0x8] sm:$0xf]
        %v1367 = vld [vmem:[%s1363 + $0xc] sm:$0xf]
        %v1368 = vld [vmem:[%s1363 + $0x10] sm:$0xf]
        %v1369 = vld [vmem:[%s1363 + $0x14] sm:$0xf]
        %v1370 = vld [vmem:[%s1363 + $0x18] sm:$0xf]
        %v1371 = vld [vmem:[%s1363 + $0x1c] sm:$0xf]
        %v1372 = vld [vmem:[%s1363 + $0x20] sm:$0xf]
        %v1373 = vld [vmem:[%s1363 + $0x24] sm:$0xf]
        %v1374 = vld [vmem:[%s1363 + $0x28] sm:$0xf]
        %v1375 = vld [vmem:[%s1363 + $0x2c] sm:$0xf]
        %v1376 = vld [vmem:[%s1363 + $0x30] sm:$0xf]
        %v1377 = vld [vmem:[%s1363 + $0x34] sm:$0xf]
        %v1378 = vld [vmem:[%s1363 + $0x38] sm:$0xf]
        %v1379 = vld [vmem:[%s1363 + $0x3c] sm:$0xf]
        %v1380 = vld [vmem:[%s1363 + $0x40] sm:$0xf]
        %v1381 = vld [vmem:[%s1363 + $0x44] sm:$0xf]
        %v1382 = vld [vmem:[%s1363 + $0x48] sm:$0xf]
        %v1383 = vld [vmem:[%s1363 + $0x4c] sm:$0xf]
        %v1384 = vld [vmem:[%s1363 + $0x50] sm:$0xf]
        %v1385 = vld [vmem:[%s1363 + $0x54] sm:$0xf]
        %v1386 = vld [vmem:[%s1363 + $0x58] sm:$0xf]
        %v1387 = vld [vmem:[%s1363 + $0x5c] sm:$0xf]
        %v1388 = vld [vmem:[%s1363 + $0x60] sm:$0xf]
        %v1389 = vld [vmem:[%s1363 + $0x64] sm:$0xf]
        %v1390 = vld [vmem:[%s1363 + $0x68] sm:$0xf]
        %v1391 = vld [vmem:[%s1363 + $0x6c] sm:$0xf]
        %v1392 = vld [vmem:[%s1363 + $0x70] sm:$0xf]
        %v1393 = vld [vmem:[%s1363 + $0x74] sm:$0xf]
        %v1394 = vld [vmem:[%s1363 + $0x78] sm:$0xf]
        %v1395 = vld [vmem:[%s1363 + $0x7c] sm:$0xf]
        %v1428 = vunpack.c.l.b16 %v1364
        %v1429 = vunpack.c.l.b16 %v1365
        %v1430 = vunpack.c.l.b16 %v1366
        %v1431 = vunpack.c.l.b16 %v1367
        %v1432 = vunpack.c.l.b16 %v1368
        %v1433 = vunpack.c.l.b16 %v1369
        %v1434 = vunpack.c.l.b16 %v1370
        %v1435 = vunpack.c.l.b16 %v1371
        %v1436 = vunpack.c.l.b16 %v1372
        %v1437 = vunpack.c.l.b16 %v1373
        %v1438 = vunpack.c.l.b16 %v1374
        %v1439 = vunpack.c.l.b16 %v1375
        %v1440 = vunpack.c.l.b16 %v1376
        %v1441 = vunpack.c.l.b16 %v1377
        %v1442 = vunpack.c.l.b16 %v1378
        %v1443 = vunpack.c.l.b16 %v1379
        %v1444 = vunpack.c.l.b16 %v1380
        %v1445 = vunpack.c.l.b16 %v1381
        %v1446 = vunpack.c.l.b16 %v1382
        %v1447 = vunpack.c.l.b16 %v1383
        %v1448 = vunpack.c.l.b16 %v1384
        %v1449 = vunpack.c.l.b16 %v1385
        %v1450 = vunpack.c.l.b16 %v1386
        %v1451 = vunpack.c.l.b16 %v1387
        %v1452 = vunpack.c.l.b16 %v1388
        %v1453 = vunpack.c.l.b16 %v1389
        %v1454 = vunpack.c.l.b16 %v1390
        %v1455 = vunpack.c.l.b16 %v1391
        %v1456 = vunpack.c.l.b16 %v1392
        %v1457 = vunpack.c.l.b16 %v1393
        %v1458 = vunpack.c.l.b16 %v1394
        %v1459 = vunpack.c.l.b16 %v1395
        %v1460 = vpack.c.b16 %v1429, %v1428
        %v1461 = vpack.c.b16 %v1431, %v1430
        %v1462 = vpack.c.b16 %v1433, %v1432
        %v1463 = vpack.c.b16 %v1435, %v1434
        %v1464 = vpack.c.b16 %v1437, %v1436
        %v1465 = vpack.c.b16 %v1439, %v1438
        %v1466 = vpack.c.b16 %v1441, %v1440
        %v1467 = vpack.c.b16 %v1443, %v1442
        %v1468 = vpack.c.b16 %v1445, %v1444
        %v1469 = vpack.c.b16 %v1447, %v1446
        %v1470 = vpack.c.b16 %v1449, %v1448
        %v1471 = vpack.c.b16 %v1451, %v1450
        %v1472 = vpack.c.b16 %v1453, %v1452
        %v1473 = vpack.c.b16 %v1455, %v1454
        %v1474 = vpack.c.b16 %v1457, %v1456
        %v1475 = vpack.c.b16 %v1459, %v1458
        %1492 = vmatprep.subr.bf16.mxu0 0
        %1493 = vmatpush1.bf16.msra.mxu0 %v1460
        %1494 = vmatprep.subr.bf16.mxu0 0
        %1495 = vmatpush1.bf16.msra.mxu0 %v1461
        %1496 = vmatprep.subr.bf16.mxu0 0
        %1497 = vmatpush1.bf16.msra.mxu0 %v1462
        %1498 = vmatprep.subr.bf16.mxu0 0
        %1499 = vmatpush1.bf16.msra.mxu0 %v1463
        %1500 = vmatprep.subr.bf16.mxu0 0
        %1501 = vmatpush1.bf16.msra.mxu0 %v1464
        %1502 = vmatprep.subr.bf16.mxu0 0
        %1503 = vmatpush1.bf16.msra.mxu0 %v1465
        %1504 = vmatprep.subr.bf16.mxu0 0
        %1505 = vmatpush1.bf16.msra.mxu0 %v1466
        %1506 = vmatprep.subr.bf16.mxu0 0
        %1507 = vmatpush1.bf16.msra.mxu0 %v1467
        %1508 = vmatprep.subr.bf16.mxu0 0
        %1509 = vmatpush1.bf16.msra.mxu0 %v1468
        %1510 = vmatprep.subr.bf16.mxu0 0
        %1511 = vmatpush1.bf16.msra.mxu0 %v1469
        %1512 = vmatprep.subr.bf16.mxu0 0
        %1513 = vmatpush1.bf16.msra.mxu0 %v1470
        %1514 = vmatprep.subr.bf16.mxu0 0
        %1515 = vmatpush1.bf16.msra.mxu0 %v1471
        %1516 = vmatprep.subr.bf16.mxu0 0
        %1517 = vmatpush1.bf16.msra.mxu0 %v1472
        %1518 = vmatprep.subr.bf16.mxu0 0
        %1519 = vmatpush1.bf16.msra.mxu0 %v1473
        %1520 = vmatprep.subr.bf16.mxu0 0
        %1521 = vmatpush1.bf16.msra.mxu0 %v1474
        %1522 = vmatprep.subr.bf16.mxu0 0
        %1523 = vmatpush1.bf16.msra.mxu0 %v1475
        %1524 = vmatprep.mubr.bf16.mxu0 %v670
        %1525 = vmatmul.mubr.bf16.gmra.mrb[0].mxu0 %v669
        %v1526 = vpop.f32.mrb[0].mxu0
        %v1527 = vadd.f32 0.0, %v1526
        %v1528 = vpop.f32.mrb[0].mxu0
        %v1529 = vpop.f32.mrb[0].mxu0
        %v1530 = vadd.f32 0.0, %v1529
        %v1531 = vpop.f32.mrb[0].mxu0
        %1532 = vdwg.mxu0
        %v1565 = vunpack.c.l.b16 %v1331
        %v1566 = vunpack.c.l.b16 %v1332
        %v1567 = vunpack.c.l.b16 %v1333
        %v1568 = vunpack.c.l.b16 %v1334
        %v1569 = vunpack.c.l.b16 %v1335
        %v1570 = vunpack.c.l.b16 %v1336
        %v1571 = vunpack.c.l.b16 %v1337
        %v1572 = vunpack.c.l.b16 %v1338
        %v1573 = vunpack.c.l.b16 %v1339
        %v1574 = vunpack.c.l.b16 %v1340
        %v1575 = vunpack.c.l.b16 %v1341
        %v1576 = vunpack.c.l.b16 %v1342
        %v1577 = vunpack.c.l.b16 %v1343
        %v1578 = vunpack.c.l.b16 %v1344
        %v1579 = vunpack.c.l.b16 %v1345
        %v1580 = vunpack.c.l.b16 %v1346
        %v1581 = vunpack.c.l.b16 %v1347
        %v1582 = vunpack.c.l.b16 %v1348
        %v1583 = vunpack.c.l.b16 %v1349
        %v1584 = vunpack.c.l.b16 %v1350
        %v1585 = vunpack.c.l.b16 %v1351
        %v1586 = vunpack.c.l.b16 %v1352
        %v1587 = vunpack.c.l.b16 %v1353
        %v1588 = vunpack.c.l.b16 %v1354
        %v1589 = vunpack.c.l.b16 %v1355
        %v1590 = vunpack.c.l.b16 %v1356
        %v1591 = vunpack.c.l.b16 %v1357
        %v1592 = vunpack.c.l.b16 %v1358
        %v1593 = vunpack.c.l.b16 %v1359
        %v1594 = vunpack.c.l.b16 %v1360
        %v1595 = vunpack.c.l.b16 %v1361
        %v1596 = vunpack.c.l.b16 %v1362
        %v1597 = vpack.c.b16 %v1566, %v1565
        %v1598 = vpack.c.b16 %v1568, %v1567
        %v1599 = vpack.c.b16 %v1570, %v1569
        %v1600 = vpack.c.b16 %v1572, %v1571
        %v1601 = vpack.c.b16 %v1574, %v1573
        %v1602 = vpack.c.b16 %v1576, %v1575
        %v1603 = vpack.c.b16 %v1578, %v1577
        %v1604 = vpack.c.b16 %v1580, %v1579
        %v1605 = vpack.c.b16 %v1582, %v1581
        %v1606 = vpack.c.b16 %v1584, %v1583
        %v1607 = vpack.c.b16 %v1586, %v1585
        %v1608 = vpack.c.b16 %v1588, %v1587
        %v1609 = vpack.c.b16 %v1590, %v1589
        %v1610 = vpack.c.b16 %v1592, %v1591
        %v1611 = vpack.c.b16 %v1594, %v1593
        %v1612 = vpack.c.b16 %v1596, %v1595
        %1629 = vmatprep.subr.bf16.mxu0 0
        %1630 = vmatpush1.bf16.msra.mxu0 %v1597
        %1631 = vmatprep.subr.bf16.mxu0 0
        %1632 = vmatpush1.bf16.msra.mxu0 %v1598
        %1633 = vmatprep.subr.bf16.mxu0 0
        %1634 = vmatpush1.bf16.msra.mxu0 %v1599
        %1635 = vmatprep.subr.bf16.mxu0 0
        %1636 = vmatpush1.bf16.msra.mxu0 %v1600
        %1637 = vmatprep.subr.bf16.mxu0 0
        %1638 = vmatpush1.bf16.msra.mxu0 %v1601
        %1639 = vmatprep.subr.bf16.mxu0 0
        %1640 = vmatpush1.bf16.msra.mxu0 %v1602
        %1641 = vmatprep.subr.bf16.mxu0 0
        %1642 = vmatpush1.bf16.msra.mxu0 %v1603
        %1643 = vmatprep.subr.bf16.mxu0 0
        %1644 = vmatpush1.bf16.msra.mxu0 %v1604
        %1645 = vmatprep.subr.bf16.mxu0 0
        %1646 = vmatpush1.bf16.msra.mxu0 %v1605
        %1647 = vmatprep.subr.bf16.mxu0 0
        %1648 = vmatpush1.bf16.msra.mxu0 %v1606
        %1649 = vmatprep.subr.bf16.mxu0 0
        %1650 = vmatpush1.bf16.msra.mxu0 %v1607
        %1651 = vmatprep.subr.bf16.mxu0 0
        %1652 = vmatpush1.bf16.msra.mxu0 %v1608
        %1653 = vmatprep.subr.bf16.mxu0 0
        %1654 = vmatpush1.bf16.msra.mxu0 %v1609
        %1655 = vmatprep.subr.bf16.mxu0 0
        %1656 = vmatpush1.bf16.msra.mxu0 %v1610
        %1657 = vmatprep.subr.bf16.mxu0 0
        %1658 = vmatpush1.bf16.msra.mxu0 %v1611
        %1659 = vmatprep.subr.bf16.mxu0 0
        %1660 = vmatpush1.bf16.msra.mxu0 %v1612
        %1661 = vmatprep.mubr.bf16.mxu0 %v610
        %1662 = vmatmul.mubr.bf16.gmra.mrb[0].mxu0 %v609
        %v1663 = vpop.f32.mrb[0].mxu0
        %v1664 = vadd.f32 %v1527, %v1663
        %v1665 = vpop.f32.mrb[0].mxu0
        %v1666 = vpop.f32.mrb[0].mxu0
        %v1667 = vadd.f32 %v1530, %v1666
        %v1668 = vpop.f32.mrb[0].mxu0
        %1669 = vdwg.mxu0
        %1670 = vmatprep.subr.bf16.mxu0 0
        %1671 = vmatpush1.bf16.msra.mxu0 %v1460
        %1672 = vmatprep.subr.bf16.mxu0 0
        %1673 = vmatpush1.bf16.msra.mxu0 %v1461
        %1674 = vmatprep.subr.bf16.mxu0 0
        %1675 = vmatpush1.bf16.msra.mxu0 %v1462
        %1676 = vmatprep.subr.bf16.mxu0 0
        %1677 = vmatpush1.bf16.msra.mxu0 %v1463
        %1678 = vmatprep.subr.bf16.mxu0 0
        %1679 = vmatpush1.bf16.msra.mxu0 %v1464
        %1680 = vmatprep.subr.bf16.mxu0 0
        %1681 = vmatpush1.bf16.msra.mxu0 %v1465
        %1682 = vmatprep.subr.bf16.mxu0 0
        %1683 = vmatpush1.bf16.msra.mxu0 %v1466
        %1684 = vmatprep.subr.bf16.mxu0 0
        %1685 = vmatpush1.bf16.msra.mxu0 %v1467
        %1686 = vmatprep.subr.bf16.mxu0 0
        %1687 = vmatpush1.bf16.msra.mxu0 %v1468
        %1688 = vmatprep.subr.bf16.mxu0 0
        %1689 = vmatpush1.bf16.msra.mxu0 %v1469
        %1690 = vmatprep.subr.bf16.mxu0 0
        %1691 = vmatpush1.bf16.msra.mxu0 %v1470
        %1692 = vmatprep.subr.bf16.mxu0 0
        %1693 = vmatpush1.bf16.msra.mxu0 %v1471
        %1694 = vmatprep.subr.bf16.mxu0 0
        %1695 = vmatpush1.bf16.msra.mxu0 %v1472
        %1696 = vmatprep.subr.bf16.mxu0 0
        %1697 = vmatpush1.bf16.msra.mxu0 %v1473
        %1698 = vmatprep.subr.bf16.mxu0 0
        %1699 = vmatpush1.bf16.msra.mxu0 %v1474
        %1700 = vmatprep.subr.bf16.mxu0 0
        %1701 = vmatpush1.bf16.msra.mxu0 %v1475
        %1702 = vmatprep.mubr.bf16.mxu0 %v730
        %1703 = vmatmul.mubr.bf16.gmra.mrb[0].mxu0 %v729
        %v1704 = vpop.f32.mrb[0].mxu0
        %v1705 = vadd.f32 0.0, %v1704
        %v1706 = vpop.f32.mrb[0].mxu0
        %v1707 = vpop.f32.mrb[0].mxu0
        %v1708 = vadd.f32 0.0, %v1707
        %v1709 = vpop.f32.mrb[0].mxu0
        %1710 = vdwg.mxu0
        %1711 = vmatprep.subr.bf16.mxu0 0
        %1712 = vmatpush1.bf16.msra.mxu0 %v1597
        %1713 = vmatprep.subr.bf16.mxu0 0
        %1714 = vmatpush1.bf16.msra.mxu0 %v1598
        %1715 = vmatprep.subr.bf16.mxu0 0
        %1716 = vmatpush1.bf16.msra.mxu0 %v1599
        %1717 = vmatprep.subr.bf16.mxu0 0
        %1718 = vmatpush1.bf16.msra.mxu0 %v1600
        %1719 = vmatprep.subr.bf16.mxu0 0
        %1720 = vmatpush1.bf16.msra.mxu0 %v1601
        %1721 = vmatprep.subr.bf16.mxu0 0
        %1722 = vmatpush1.bf16.msra.mxu0 %v1602
        %1723 = vmatprep.subr.bf16.mxu0 0
        %1724 = vmatpush1.bf16.msra.mxu0 %v1603
        %1725 = vmatprep.subr.bf16.mxu0 0
        %1726 = vmatpush1.bf16.msra.mxu0 %v1604
        %1727 = vmatprep.subr.bf16.mxu0 0
        %1728 = vmatpush1.bf16.msra.mxu0 %v1605
        %1729 = vmatprep.subr.bf16.mxu0 0
        %1730 = vmatpush1.bf16.msra.mxu0 %v1606
        %1731 = vmatprep.subr.bf16.mxu0 0
        %1732 = vmatpush1.bf16.msra.mxu0 %v1607
        %1733 = vmatprep.subr.bf16.mxu0 0
        %1734 = vmatpush1.bf16.msra.mxu0 %v1608
        %1735 = vmatprep.subr.bf16.mxu0 0
        %1736 = vmatpush1.bf16.msra.mxu0 %v1609
        %1737 = vmatprep.subr.bf16.mxu0 0
        %1738 = vmatpush1.bf16.msra.mxu0 %v1610
        %1739 = vmatprep.subr.bf16.mxu0 0
        %1740 = vmatpush1.bf16.msra.mxu0 %v1611
        %1741 = vmatprep.subr.bf16.mxu0 0
        %1742 = vmatpush1.bf16.msra.mxu0 %v1612
        %1743 = vmatprep.mubr.bf16.mxu0 %v670
        %1744 = vmatmul.mubr.bf16.gmra.mrb[0].mxu0 %v669
        %v1745 = vpop.f32.mrb[0].mxu0
        %v1746 = vadd.f32 %v1705, %v1745
        %v1747 = vpop.f32.mrb[0].mxu0
        %v1748 = vpop.f32.mrb[0].mxu0
        %v1749 = vadd.f32 %v1708, %v1748
        %v1750 = vpop.f32.mrb[0].mxu0
        %1751 = vdwg.mxu0
        %1752 = vmatprep.subr.bf16.mxu0 0
        %1753 = vmatpush1.bf16.msra.mxu0 %v1460
        %1754 = vmatprep.subr.bf16.mxu0 0
        %1755 = vmatpush1.bf16.msra.mxu0 %v1461
        %1756 = vmatprep.subr.bf16.mxu0 0
        %1757 = vmatpush1.bf16.msra.mxu0 %v1462
        %1758 = vmatprep.subr.bf16.mxu0 0
        %1759 = vmatpush1.bf16.msra.mxu0 %v1463
        %1760 = vmatprep.subr.bf16.mxu0 0
        %1761 = vmatpush1.bf16.msra.mxu0 %v1464
        %1762 = vmatprep.subr.bf16.mxu0 0
        %1763 = vmatpush1.bf16.msra.mxu0 %v1465
        %1764 = vmatprep.subr.bf16.mxu0 0
        %1765 = vmatpush1.bf16.msra.mxu0 %v1466
        %1766 = vmatprep.subr.bf16.mxu0 0
        %1767 = vmatpush1.bf16.msra.mxu0 %v1467
        %1768 = vmatprep.subr.bf16.mxu0 0
        %1769 = vmatpush1.bf16.msra.mxu0 %v1468
        %1770 = vmatprep.subr.bf16.mxu0 0
        %1771 = vmatpush1.bf16.msra.mxu0 %v1469
        %1772 = vmatprep.subr.bf16.mxu0 0
        %1773 = vmatpush1.bf16.msra.mxu0 %v1470
        %1774 = vmatprep.subr.bf16.mxu0 0
        %1775 = vmatpush1.bf16.msra.mxu0 %v1471
        %1776 = vmatprep.subr.bf16.mxu0 0
        %1777 = vmatpush1.bf16.msra.mxu0 %v1472
        %1778 = vmatprep.subr.bf16.mxu0 0
        %1779 = vmatpush1.bf16.msra.mxu0 %v1473
        %1780 = vmatprep.subr.bf16.mxu0 0
        %1781 = vmatpush1.bf16.msra.mxu0 %v1474
        %1782 = vmatprep.subr.bf16.mxu0 0
        %1783 = vmatpush1.bf16.msra.mxu0 %v1475
        %1784 = vmatprep.mubr.bf16.mxu0 %v790
        %1785 = vmatmul.mubr.bf16.gmra.mrb[0].mxu0 %v789
        %v1786 = vpop.f32.mrb[0].mxu0
        %v1787 = vadd.f32 0.0, %v1786
        %v1788 = vpop.f32.mrb[0].mxu0
        %v1789 = vpop.f32.mrb[0].mxu0
        %v1790 = vadd.f32 0.0, %v1789
        %v1791 = vpop.f32.mrb[0].mxu0
        %1792 = vdwg.mxu0
        %1793 = vmatprep.subr.bf16.mxu0 0
        %1794 = vmatpush1.bf16.msra.mxu0 %v1597
        %1795 = vmatprep.subr.bf16.mxu0 0
        %1796 = vmatpush1.bf16.msra.mxu0 %v1598
        %1797 = vmatprep.subr.bf16.mxu0 0
        %1798 = vmatpush1.bf16.msra.mxu0 %v1599
        %1799 = vmatprep.subr.bf16.mxu0 0
        %1800 = vmatpush1.bf16.msra.mxu0 %v1600
        %1801 = vmatprep.subr.bf16.mxu0 0
        %1802 = vmatpush1.bf16.msra.mxu0 %v1601
        %1803 = vmatprep.subr.bf16.mxu0 0
        %1804 = vmatpush1.bf16.msra.mxu0 %v1602
        %1805 = vmatprep.subr.bf16.mxu0 0
        %1806 = vmatpush1.bf16.msra.mxu0 %v1603
        %1807 = vmatprep.subr.bf16.mxu0 0
        %1808 = vmatpush1.bf16.msra.mxu0 %v1604
        %1809 = vmatprep.subr.bf16.mxu0 0
        %1810 = vmatpush1.bf16.msra.mxu0 %v1605
        %1811 = vmatprep.subr.bf16.mxu0 0
        %1812 = vmatpush1.bf16.msra.mxu0 %v1606
        %1813 = vmatprep.subr.bf16.mxu0 0
        %1814 = vmatpush1.bf16.msra.mxu0 %v1607
        %1815 = vmatprep.subr.bf16.mxu0 0
        %1816 = vmatpush1.bf16.msra.mxu0 %v1608
        %1817 = vmatprep.subr.bf16.mxu0 0
        %1818 = vmatpush1.bf16.msra.mxu0 %v1609
        %1819 = vmatprep.subr.bf16.mxu0 0
        %1820 = vmatpush1.bf16.msra.mxu0 %v1610
        %1821 = vmatprep.subr.bf16.mxu0 0
        %1822 = vmatpush1.bf16.msra.mxu0 %v1611
        %1823 = vmatprep.subr.bf16.mxu0 0
        %1824 = vmatpush1.bf16.msra.mxu0 %v1612
        %1825 = vmatprep.mubr.bf16.mxu0 %v730
        %1826 = vmatmul.mubr.bf16.gmra.mrb[0].mxu0 %v729
        %v1827 = vpop.f32.mrb[0].mxu0
        %v1828 = vadd.f32 %v1787, %v1827
        %v1829 = vpop.f32.mrb[0].mxu0
        %v1830 = vpop.f32.mrb[0].mxu0
        %v1831 = vadd.f32 %v1790, %v1830
        %v1832 = vpop.f32.mrb[0].mxu0
        %1833 = vdwg.mxu0
        %1834 = vmatprep.subr.bf16.mxu0 0
        %1835 = vmatpush1.bf16.msra.mxu0 %v1460
        %1836 = vmatprep.subr.bf16.mxu0 0
        %1837 = vmatpush1.bf16.msra.mxu0 %v1461
        %1838 = vmatprep.subr.bf16.mxu0 0
        %1839 = vmatpush1.bf16.msra.mxu0 %v1462
        %1840 = vmatprep.subr.bf16.mxu0 0
        %1841 = vmatpush1.bf16.msra.mxu0 %v1463
        %1842 = vmatprep.subr.bf16.mxu0 0
        %1843 = vmatpush1.bf16.msra.mxu0 %v1464
        %1844 = vmatprep.subr.bf16.mxu0 0
        %1845 = vmatpush1.bf16.msra.mxu0 %v1465
        %1846 = vmatprep.subr.bf16.mxu0 0
        %1847 = vmatpush1.bf16.msra.mxu0 %v1466
        %1848 = vmatprep.subr.bf16.mxu0 0
        %1849 = vmatpush1.bf16.msra.mxu0 %v1467
        %1850 = vmatprep.subr.bf16.mxu0 0
        %1851 = vmatpush1.bf16.msra.mxu0 %v1468
        %1852 = vmatprep.subr.bf16.mxu0 0
        %1853 = vmatpush1.bf16.msra.mxu0 %v1469
        %1854 = vmatprep.subr.bf16.mxu0 0
        %1855 = vmatpush1.bf16.msra.mxu0 %v1470
        %1856 = vmatprep.subr.bf16.mxu0 0
        %1857 = vmatpush1.bf16.msra.mxu0 %v1471
        %1858 = vmatprep.subr.bf16.mxu0 0
        %1859 = vmatpush1.bf16.msra.mxu0 %v1472
        %1860 = vmatprep.subr.bf16.mxu0 0
        %1861 = vmatpush1.bf16.msra.mxu0 %v1473
        %1862 = vmatprep.subr.bf16.mxu0 0
        %1863 = vmatpush1.bf16.msra.mxu0 %v1474
        %1864 = vmatprep.subr.bf16.mxu0 0
        %1865 = vmatpush1.bf16.msra.mxu0 %v1475
        %1866 = vmatprep.mubr.bf16.mxu0 %v850
        %1867 = vmatmul.mubr.bf16.gmra.mrb[0].mxu0 %v849
        %v1868 = vpop.f32.mrb[0].mxu0
        %v1869 = vadd.f32 0.0, %v1868
        %v1870 = vpop.f32.mrb[0].mxu0
        %v1871 = vpop.f32.mrb[0].mxu0
        %v1872 = vadd.f32 0.0, %v1871
        %v1873 = vpop.f32.mrb[0].mxu0
        %1874 = vdwg.mxu0
        %1875 = vmatprep.subr.bf16.mxu0 0
        %1876 = vmatpush1.bf16.msra.mxu0 %v1597
        %1877 = vmatprep.subr.bf16.mxu0 0
        %1878 = vmatpush1.bf16.msra.mxu0 %v1598
        %1879 = vmatprep.subr.bf16.mxu0 0
        %1880 = vmatpush1.bf16.msra.mxu0 %v1599
        %1881 = vmatprep.subr.bf16.mxu0 0
        %1882 = vmatpush1.bf16.msra.mxu0 %v1600
        %1883 = vmatprep.subr.bf16.mxu0 0
        %1884 = vmatpush1.bf16.msra.mxu0 %v1601
        %1885 = vmatprep.subr.bf16.mxu0 0
        %1886 = vmatpush1.bf16.msra.mxu0 %v1602
        %1887 = vmatprep.subr.bf16.mxu0 0
        %1888 = vmatpush1.bf16.msra.mxu0 %v1603
        %1889 = vmatprep.subr.bf16.mxu0 0
        %1890 = vmatpush1.bf16.msra.mxu0 %v1604
        %1891 = vmatprep.subr.bf16.mxu0 0
        %1892 = vmatpush1.bf16.msra.mxu0 %v1605
        %1893 = vmatprep.subr.bf16.mxu0 0
        %1894 = vmatpush1.bf16.msra.mxu0 %v1606
        %1895 = vmatprep.subr.bf16.mxu0 0
        %1896 = vmatpush1.bf16.msra.mxu0 %v1607
        %1897 = vmatprep.subr.bf16.mxu0 0
        %1898 = vmatpush1.bf16.msra.mxu0 %v1608
        %1899 = vmatprep.subr.bf16.mxu0 0
        %1900 = vmatpush1.bf16.msra.mxu0 %v1609
        %1901 = vmatprep.subr.bf16.mxu0 0
        %1902 = vmatpush1.bf16.msra.mxu0 %v1610
        %1903 = vmatprep.subr.bf16.mxu0 0
        %1904 = vmatpush1.bf16.msra.mxu0 %v1611
        %1905 = vmatprep.subr.bf16.mxu0 0
        %1906 = vmatpush1.bf16.msra.mxu0 %v1612
        %1907 = vmatprep.mubr.bf16.mxu0 %v790
        %1908 = vmatmul.mubr.bf16.gmra.mrb[0].mxu0 %v789
        %v1909 = vpop.f32.mrb[0].mxu0
        %v1910 = vadd.f32 %v1869, %v1909
        %v1911 = vpop.f32.mrb[0].mxu0
        %v1912 = vpop.f32.mrb[0].mxu0
        %v1913 = vadd.f32 %v1872, %v1912
        %v1914 = vpop.f32.mrb[0].mxu0
        %1915 = vdwg.mxu0
        %1916 = vmatprep.subr.bf16.mxu0 0
        %1917 = vmatpush1.bf16.msra.mxu0 %v1460
        %1918 = vmatprep.subr.bf16.mxu0 0
        %1919 = vmatpush1.bf16.msra.mxu0 %v1461
        %1920 = vmatprep.subr.bf16.mxu0 0
        %1921 = vmatpush1.bf16.msra.mxu0 %v1462
        %1922 = vmatprep.subr.bf16.mxu0 0
        %1923 = vmatpush1.bf16.msra.mxu0 %v1463
        %1924 = vmatprep.subr.bf16.mxu0 0
        %1925 = vmatpush1.bf16.msra.mxu0 %v1464
        %1926 = vmatprep.subr.bf16.mxu0 0
        %1927 = vmatpush1.bf16.msra.mxu0 %v1465
        %1928 = vmatprep.subr.bf16.mxu0 0
        %1929 = vmatpush1.bf16.msra.mxu0 %v1466
        %1930 = vmatprep.subr.bf16.mxu0 0
        %1931 = vmatpush1.bf16.msra.mxu0 %v1467
        %1932 = vmatprep.subr.bf16.mxu0 0
        %1933 = vmatpush1.bf16.msra.mxu0 %v1468
        %1934 = vmatprep.subr.bf16.mxu0 0
        %1935 = vmatpush1.bf16.msra.mxu0 %v1469
        %1936 = vmatprep.subr.bf16.mxu0 0
        %1937 = vmatpush1.bf16.msra.mxu0 %v1470
        %1938 = vmatprep.subr.bf16.mxu0 0
        %1939 = vmatpush1.bf16.msra.mxu0 %v1471
        %1940 = vmatprep.subr.bf16.mxu0 0
        %1941 = vmatpush1.bf16.msra.mxu0 %v1472
        %1942 = vmatprep.subr.bf16.mxu0 0
        %1943 = vmatpush1.bf16.msra.mxu0 %v1473
        %1944 = vmatprep.subr.bf16.mxu0 0
        %1945 = vmatpush1.bf16.msra.mxu0 %v1474
        %1946 = vmatprep.subr.bf16.mxu0 0
        %1947 = vmatpush1.bf16.msra.mxu0 %v1475
        %1948 = vmatprep.mubr.bf16.mxu0 %v910
        %1949 = vmatmul.mubr.bf16.gmra.mrb[0].mxu0 %v909
        %v1950 = vpop.f32.mrb[0].mxu0
        %v1951 = vadd.f32 0.0, %v1950
        %v1952 = vpop.f32.mrb[0].mxu0
        %v1953 = vpop.f32.mrb[0].mxu0
        %v1954 = vadd.f32 0.0, %v1953
        %v1955 = vpop.f32.mrb[0].mxu0
        %1956 = vdwg.mxu0
        %1957 = vmatprep.subr.bf16.mxu0 0
        %1958 = vmatpush1.bf16.msra.mxu0 %v1597
        %1959 = vmatprep.subr.bf16.mxu0 0
        %1960 = vmatpush1.bf16.msra.mxu0 %v1598
        %1961 = vmatprep.subr.bf16.mxu0 0
        %1962 = vmatpush1.bf16.msra.mxu0 %v1599
        %1963 = vmatprep.subr.bf16.mxu0 0
        %1964 = vmatpush1.bf16.msra.mxu0 %v1600
        %1965 = vmatprep.subr.bf16.mxu0 0
        %1966 = vmatpush1.bf16.msra.mxu0 %v1601
        %1967 = vmatprep.subr.bf16.mxu0 0
        %1968 = vmatpush1.bf16.msra.mxu0 %v1602
        %1969 = vmatprep.subr.bf16.mxu0 0
        %1970 = vmatpush1.bf16.msra.mxu0 %v1603
        %1971 = vmatprep.subr.bf16.mxu0 0
        %1972 = vmatpush1.bf16.msra.mxu0 %v1604
        %1973 = vmatprep.subr.bf16.mxu0 0
        %1974 = vmatpush1.bf16.msra.mxu0 %v1605
        %1975 = vmatprep.subr.bf16.mxu0 0
        %1976 = vmatpush1.bf16.msra.mxu0 %v1606
        %1977 = vmatprep.subr.bf16.mxu0 0
        %1978 = vmatpush1.bf16.msra.mxu0 %v1607
        %1979 = vmatprep.subr.bf16.mxu0 0
        %1980 = vmatpush1.bf16.msra.mxu0 %v1608
        %1981 = vmatprep.subr.bf16.mxu0 0
        %1982 = vmatpush1.bf16.msra.mxu0 %v1609
        %1983 = vmatprep.subr.bf16.mxu0 0
        %1984 = vmatpush1.bf16.msra.mxu0 %v1610
        %1985 = vmatprep.subr.bf16.mxu0 0
        %1986 = vmatpush1.bf16.msra.mxu0 %v1611
        %1987 = vmatprep.subr.bf16.mxu0 0
        %1988 = vmatpush1.bf16.msra.mxu0 %v1612
        %1989 = vmatprep.mubr.bf16.mxu0 %v850
        %1990 = vmatmul.mubr.bf16.gmra.mrb[0].mxu0 %v849
        %v1991 = vpop.f32.mrb[0].mxu0
        %v1992 = vadd.f32 %v1951, %v1991
        %v1993 = vpop.f32.mrb[0].mxu0
        %v1994 = vpop.f32.mrb[0].mxu0
        %v1995 = vadd.f32 %v1954, %v1994
        %v1996 = vpop.f32.mrb[0].mxu0
        %1997 = vdwg.mxu0
        %1998 = vmatprep.subr.bf16.mxu0 0
        %1999 = vmatpush1.bf16.msra.mxu0 %v1460
        %2000 = vmatprep.subr.bf16.mxu0 0
        %2001 = vmatpush1.bf16.msra.mxu0 %v1461
        %2002 = vmatprep.subr.bf16.mxu0 0
        %2003 = vmatpush1.bf16.msra.mxu0 %v1462
        %2004 = vmatprep.subr.bf16.mxu0 0
        %2005 = vmatpush1.bf16.msra.mxu0 %v1463
        %2006 = vmatprep.subr.bf16.mxu0 0
        %2007 = vmatpush1.bf16.msra.mxu0 %v1464
        %2008 = vmatprep.subr.bf16.mxu0 0
        %2009 = vmatpush1.bf16.msra.mxu0 %v1465
        %2010 = vmatprep.subr.bf16.mxu0 0
        %2011 = vmatpush1.bf16.msra.mxu0 %v1466
        %2012 = vmatprep.subr.bf16.mxu0 0
        %2013 = vmatpush1.bf16.msra.mxu0 %v1467
        %2014 = vmatprep.subr.bf16.mxu0 0
        %2015 = vmatpush1.bf16.msra.mxu0 %v1468
        %2016 = vmatprep.subr.bf16.mxu0 0
        %2017 = vmatpush1.bf16.msra.mxu0 %v1469
        %2018 = vmatprep.subr.bf16.mxu0 0
        %2019 = vmatpush1.bf16.msra.mxu0 %v1470
        %2020 = vmatprep.subr.bf16.mxu0 0
        %2021 = vmatpush1.bf16.msra.mxu0 %v1471
        %2022 = vmatprep.subr.bf16.mxu0 0
        %2023 = vmatpush1.bf16.msra.mxu0 %v1472
        %2024 = vmatprep.subr.bf16.mxu0 0
        %2025 = vmatpush1.bf16.msra.mxu0 %v1473
        %2026 = vmatprep.subr.bf16.mxu0 0
        %2027 = vmatpush1.bf16.msra.mxu0 %v1474
        %2028 = vmatprep.subr.bf16.mxu0 0
        %2029 = vmatpush1.bf16.msra.mxu0 %v1475
        %2030 = vmatprep.mubr.bf16.mxu0 %v970
        %2031 = vmatmul.mubr.bf16.gmra.mrb[0].mxu0 %v969
        %v2032 = vpop.f32.mrb[0].mxu0
        %v2033 = vadd.f32 0.0, %v2032
        %v2034 = vpop.f32.mrb[0].mxu0
        %v2035 = vpop.f32.mrb[0].mxu0
        %v2036 = vadd.f32 0.0, %v2035
        %v2037 = vpop.f32.mrb[0].mxu0
        %2038 = vdwg.mxu0
        %2039 = vmatprep.subr.bf16.mxu0 0
        %2040 = vmatpush1.bf16.msra.mxu0 %v1597
        %2041 = vmatprep.subr.bf16.mxu0 0
        %2042 = vmatpush1.bf16.msra.mxu0 %v1598
        %2043 = vmatprep.subr.bf16.mxu0 0
        %2044 = vmatpush1.bf16.msra.mxu0 %v1599
        %2045 = vmatprep.subr.bf16.mxu0 0
        %2046 = vmatpush1.bf16.msra.mxu0 %v1600
        %2047 = vmatprep.subr.bf16.mxu0 0
        %2048 = vmatpush1.bf16.msra.mxu0 %v1601
        %2049 = vmatprep.subr.bf16.mxu0 0
        %2050 = vmatpush1.bf16.msra.mxu0 %v1602
        %2051 = vmatprep.subr.bf16.mxu0 0
        %2052 = vmatpush1.bf16.msra.mxu0 %v1603
        %2053 = vmatprep.subr.bf16.mxu0 0
        %2054 = vmatpush1.bf16.msra.mxu0 %v1604
        %2055 = vmatprep.subr.bf16.mxu0 0
        %2056 = vmatpush1.bf16.msra.mxu0 %v1605
        %2057 = vmatprep.subr.bf16.mxu0 0
        %2058 = vmatpush1.bf16.msra.mxu0 %v1606
        %2059 = vmatprep.subr.bf16.mxu0 0
        %2060 = vmatpush1.bf16.msra.mxu0 %v1607
        %2061 = vmatprep.subr.bf16.mxu0 0
        %2062 = vmatpush1.bf16.msra.mxu0 %v1608
        %2063 = vmatprep.subr.bf16.mxu0 0
        %2064 = vmatpush1.bf16.msra.mxu0 %v1609
        %2065 = vmatprep.subr.bf16.mxu0 0
        %2066 = vmatpush1.bf16.msra.mxu0 %v1610
        %2067 = vmatprep.subr.bf16.mxu0 0
        %2068 = vmatpush1.bf16.msra.mxu0 %v1611
        %2069 = vmatprep.subr.bf16.mxu0 0
        %2070 = vmatpush1.bf16.msra.mxu0 %v1612
        %2071 = vmatprep.mubr.bf16.mxu0 %v910
        %2072 = vmatmul.mubr.bf16.gmra.mrb[0].mxu0 %v909
        %v2073 = vpop.f32.mrb[0].mxu0
        %v2074 = vadd.f32 %v2033, %v2073
        %v2075 = vpop.f32.mrb[0].mxu0
        %v2076 = vpop.f32.mrb[0].mxu0
        %v2077 = vadd.f32 %v2036, %v2076
        %v2078 = vpop.f32.mrb[0].mxu0
        %2079 = vdwg.mxu0
        %2080 = vmatprep.subr.bf16.mxu0 0
        %2081 = vmatpush1.bf16.msra.mxu0 %v1460
        %2082 = vmatprep.subr.bf16.mxu0 0
        %2083 = vmatpush1.bf16.msra.mxu0 %v1461
        %2084 = vmatprep.subr.bf16.mxu0 0
        %2085 = vmatpush1.bf16.msra.mxu0 %v1462
        %2086 = vmatprep.subr.bf16.mxu0 0
        %2087 = vmatpush1.bf16.msra.mxu0 %v1463
        %2088 = vmatprep.subr.bf16.mxu0 0
        %2089 = vmatpush1.bf16.msra.mxu0 %v1464
        %2090 = vmatprep.subr.bf16.mxu0 0
        %2091 = vmatpush1.bf16.msra.mxu0 %v1465
        %2092 = vmatprep.subr.bf16.mxu0 0
        %2093 = vmatpush1.bf16.msra.mxu0 %v1466
        %2094 = vmatprep.subr.bf16.mxu0 0
        %2095 = vmatpush1.bf16.msra.mxu0 %v1467
        %2096 = vmatprep.subr.bf16.mxu0 0
        %2097 = vmatpush1.bf16.msra.mxu0 %v1468
        %2098 = vmatprep.subr.bf16.mxu0 0
        %2099 = vmatpush1.bf16.msra.mxu0 %v1469
        %2100 = vmatprep.subr.bf16.mxu0 0
        %2101 = vmatpush1.bf16.msra.mxu0 %v1470
        %2102 = vmatprep.subr.bf16.mxu0 0
        %2103 = vmatpush1.bf16.msra.mxu0 %v1471
        %2104 = vmatprep.subr.bf16.mxu0 0
        %2105 = vmatpush1.bf16.msra.mxu0 %v1472
        %2106 = vmatprep.subr.bf16.mxu0 0
        %2107 = vmatpush1.bf16.msra.mxu0 %v1473
        %2108 = vmatprep.subr.bf16.mxu0 0
        %2109 = vmatpush1.bf16.msra.mxu0 %v1474
        %2110 = vmatprep.subr.bf16.mxu0 0
        %2111 = vmatpush1.bf16.msra.mxu0 %v1475
        %2112 = vmatprep.mubr.bf16.mxu0 %v1030
        %2113 = vmatmul.mubr.bf16.gmra.mrb[0].mxu0 %v1029
        %v2114 = vpop.f32.mrb[0].mxu0
        %v2115 = vadd.f32 0.0, %v2114
        %v2116 = vpop.f32.mrb[0].mxu0
        %v2117 = vpop.f32.mrb[0].mxu0
        %v2118 = vadd.f32 0.0, %v2117
        %v2119 = vpop.f32.mrb[0].mxu0
        %2120 = vdwg.mxu0
        %2121 = vmatprep.subr.bf16.mxu0 0
        %2122 = vmatpush1.bf16.msra.mxu0 %v1597
        %2123 = vmatprep.subr.bf16.mxu0 0
        %2124 = vmatpush1.bf16.msra.mxu0 %v1598
        %2125 = vmatprep.subr.bf16.mxu0 0
        %2126 = vmatpush1.bf16.msra.mxu0 %v1599
        %2127 = vmatprep.subr.bf16.mxu0 0
        %2128 = vmatpush1.bf16.msra.mxu0 %v1600
        %2129 = vmatprep.subr.bf16.mxu0 0
        %2130 = vmatpush1.bf16.msra.mxu0 %v1601
        %2131 = vmatprep.subr.bf16.mxu0 0
        %2132 = vmatpush1.bf16.msra.mxu0 %v1602
        %2133 = vmatprep.subr.bf16.mxu0 0
        %2134 = vmatpush1.bf16.msra.mxu0 %v1603
        %2135 = vmatprep.subr.bf16.mxu0 0
        %2136 = vmatpush1.bf16.msra.mxu0 %v1604
        %2137 = vmatprep.subr.bf16.mxu0 0
        %2138 = vmatpush1.bf16.msra.mxu0 %v1605
        %2139 = vmatprep.subr.bf16.mxu0 0
        %2140 = vmatpush1.bf16.msra.mxu0 %v1606
        %2141 = vmatprep.subr.bf16.mxu0 0
        %2142 = vmatpush1.bf16.msra.mxu0 %v1607
        %2143 = vmatprep.subr.bf16.mxu0 0
        %2144 = vmatpush1.bf16.msra.mxu0 %v1608
        %2145 = vmatprep.subr.bf16.mxu0 0
        %2146 = vmatpush1.bf16.msra.mxu0 %v1609
        %2147 = vmatprep.subr.bf16.mxu0 0
        %2148 = vmatpush1.bf16.msra.mxu0 %v1610
        %2149 = vmatprep.subr.bf16.mxu0 0
        %2150 = vmatpush1.bf16.msra.mxu0 %v1611
        %2151 = vmatprep.subr.bf16.mxu0 0
        %2152 = vmatpush1.bf16.msra.mxu0 %v1612
        %2153 = vmatprep.mubr.bf16.mxu0 %v970
        %2154 = vmatmul.mubr.bf16.gmra.mrb[0].mxu0 %v969
        %v2155 = vpop.f32.mrb[0].mxu0
        %v2156 = vadd.f32 %v2115, %v2155
        %v2157 = vpop.f32.mrb[0].mxu0
        %v2158 = vpop.f32.mrb[0].mxu0
        %v2159 = vadd.f32 %v2118, %v2158
        %v2160 = vpop.f32.mrb[0].mxu0
        %2161 = vdwg.mxu0
        %2162 = vmatprep.subr.bf16.mxu0 0
        %2163 = vmatpush1.bf16.msra.mxu0 %v1460
        %2164 = vmatprep.subr.bf16.mxu0 0
        %2165 = vmatpush1.bf16.msra.mxu0 %v1461
        %2166 = vmatprep.subr.bf16.mxu0 0
        %2167 = vmatpush1.bf16.msra.mxu0 %v1462
        %2168 = vmatprep.subr.bf16.mxu0 0
        %2169 = vmatpush1.bf16.msra.mxu0 %v1463
        %2170 = vmatprep.subr.bf16.mxu0 0
        %2171 = vmatpush1.bf16.msra.mxu0 %v1464
        %2172 = vmatprep.subr.bf16.mxu0 0
        %2173 = vmatpush1.bf16.msra.mxu0 %v1465
        %2174 = vmatprep.subr.bf16.mxu0 0
        %2175 = vmatpush1.bf16.msra.mxu0 %v1466
        %2176 = vmatprep.subr.bf16.mxu0 0
        %2177 = vmatpush1.bf16.msra.mxu0 %v1467
        %2178 = vmatprep.subr.bf16.mxu0 0
        %2179 = vmatpush1.bf16.msra.mxu0 %v1468
        %2180 = vmatprep.subr.bf16.mxu0 0
        %2181 = vmatpush1.bf16.msra.mxu0 %v1469
        %2182 = vmatprep.subr.bf16.mxu0 0
        %2183 = vmatpush1.bf16.msra.mxu0 %v1470
        %2184 = vmatprep.subr.bf16.mxu0 0
        %2185 = vmatpush1.bf16.msra.mxu0 %v1471
        %2186 = vmatprep.subr.bf16.mxu0 0
        %2187 = vmatpush1.bf16.msra.mxu0 %v1472
        %2188 = vmatprep.subr.bf16.mxu0 0
        %2189 = vmatpush1.bf16.msra.mxu0 %v1473
        %2190 = vmatprep.subr.bf16.mxu0 0
        %2191 = vmatpush1.bf16.msra.mxu0 %v1474
        %2192 = vmatprep.subr.bf16.mxu0 0
        %2193 = vmatpush1.bf16.msra.mxu0 %v1475
        %2194 = vmatprep.mubr.bf16.mxu0 %v1090
        %2195 = vmatmul.mubr.bf16.gmra.mrb[0].mxu0 %v1089
        %v2196 = vpop.f32.mrb[0].mxu0
        %v2197 = vadd.f32 0.0, %v2196
        %v2198 = vpop.f32.mrb[0].mxu0
        %v2199 = vpop.f32.mrb[0].mxu0
        %v2200 = vadd.f32 0.0, %v2199
        %v2201 = vpop.f32.mrb[0].mxu0
        %2202 = vdwg.mxu0
        %2203 = vmatprep.subr.bf16.mxu0 0
        %2204 = vmatpush1.bf16.msra.mxu0 %v1597
        %2205 = vmatprep.subr.bf16.mxu0 0
        %2206 = vmatpush1.bf16.msra.mxu0 %v1598
        %2207 = vmatprep.subr.bf16.mxu0 0
        %2208 = vmatpush1.bf16.msra.mxu0 %v1599
        %2209 = vmatprep.subr.bf16.mxu0 0
        %2210 = vmatpush1.bf16.msra.mxu0 %v1600
        %2211 = vmatprep.subr.bf16.mxu0 0
        %2212 = vmatpush1.bf16.msra.mxu0 %v1601
        %2213 = vmatprep.subr.bf16.mxu0 0
        %2214 = vmatpush1.bf16.msra.mxu0 %v1602
        %2215 = vmatprep.subr.bf16.mxu0 0
        %2216 = vmatpush1.bf16.msra.mxu0 %v1603
        %2217 = vmatprep.subr.bf16.mxu0 0
        %2218 = vmatpush1.bf16.msra.mxu0 %v1604
        %2219 = vmatprep.subr.bf16.mxu0 0
        %2220 = vmatpush1.bf16.msra.mxu0 %v1605
        %2221 = vmatprep.subr.bf16.mxu0 0
        %2222 = vmatpush1.bf16.msra.mxu0 %v1606
        %2223 = vmatprep.subr.bf16.mxu0 0
        %2224 = vmatpush1.bf16.msra.mxu0 %v1607
        %2225 = vmatprep.subr.bf16.mxu0 0
        %2226 = vmatpush1.bf16.msra.mxu0 %v1608
        %2227 = vmatprep.subr.bf16.mxu0 0
        %2228 = vmatpush1.bf16.msra.mxu0 %v1609
        %2229 = vmatprep.subr.bf16.mxu0 0
        %2230 = vmatpush1.bf16.msra.mxu0 %v1610
        %2231 = vmatprep.subr.bf16.mxu0 0
        %2232 = vmatpush1.bf16.msra.mxu0 %v1611
        %2233 = vmatprep.subr.bf16.mxu0 0
        %2234 = vmatpush1.bf16.msra.mxu0 %v1612
        %2235 = vmatprep.mubr.bf16.mxu0 %v1030
        %2236 = vmatmul.mubr.bf16.gmra.mrb[0].mxu0 %v1029
        %v2237 = vpop.f32.mrb[0].mxu0
        %v2238 = vadd.f32 %v2197, %v2237
        %v2239 = vpop.f32.mrb[0].mxu0
        %v2240 = vpop.f32.mrb[0].mxu0
        %v2241 = vadd.f32 %v2200, %v2240
        %v2242 = vpop.f32.mrb[0].mxu0
        %2243 = vdwg.mxu0
        %2244 = vmatprep.subr.bf16.mxu0 0
        %2245 = vmatpush1.bf16.msra.mxu0 %v1460
        %2246 = vmatprep.subr.bf16.mxu0 0
        %2247 = vmatpush1.bf16.msra.mxu0 %v1461
        %2248 = vmatprep.subr.bf16.mxu0 0
        %2249 = vmatpush1.bf16.msra.mxu0 %v1462
        %2250 = vmatprep.subr.bf16.mxu0 0
        %2251 = vmatpush1.bf16.msra.mxu0 %v1463
        %2252 = vmatprep.subr.bf16.mxu0 0
        %2253 = vmatpush1.bf16.msra.mxu0 %v1464
        %2254 = vmatprep.subr.bf16.mxu0 0
        %2255 = vmatpush1.bf16.msra.mxu0 %v1465
        %2256 = vmatprep.subr.bf16.mxu0 0
        %2257 = vmatpush1.bf16.msra.mxu0 %v1466
        %2258 = vmatprep.subr.bf16.mxu0 0
        %2259 = vmatpush1.bf16.msra.mxu0 %v1467
        %2260 = vmatprep.subr.bf16.mxu0 0
        %2261 = vmatpush1.bf16.msra.mxu0 %v1468
        %2262 = vmatprep.subr.bf16.mxu0 0
        %2263 = vmatpush1.bf16.msra.mxu0 %v1469
        %2264 = vmatprep.subr.bf16.mxu0 0
        %2265 = vmatpush1.bf16.msra.mxu0 %v1470
        %2266 = vmatprep.subr.bf16.mxu0 0
        %2267 = vmatpush1.bf16.msra.mxu0 %v1471
        %2268 = vmatprep.subr.bf16.mxu0 0
        %2269 = vmatpush1.bf16.msra.mxu0 %v1472
        %2270 = vmatprep.subr.bf16.mxu0 0
        %2271 = vmatpush1.bf16.msra.mxu0 %v1473
        %2272 = vmatprep.subr.bf16.mxu0 0
        %2273 = vmatpush1.bf16.msra.mxu0 %v1474
        %2274 = vmatprep.subr.bf16.mxu0 0
        %2275 = vmatpush1.bf16.msra.mxu0 %v1475
        %2276 = vmatprep.mubr.bf16.mxu0 %v1150
        %2277 = vmatmul.mubr.bf16.gmra.mrb[0].mxu0 %v1149
        %v2278 = vpop.f32.mrb[0].mxu0
        %v2279 = vadd.f32 0.0, %v2278
        %v2280 = vpop.f32.mrb[0].mxu0
        %v2281 = vpop.f32.mrb[0].mxu0
        %v2282 = vadd.f32 0.0, %v2281
        %v2283 = vpop.f32.mrb[0].mxu0
        %2284 = vdwg.mxu0
        %2285 = vmatprep.subr.bf16.mxu0 0
        %2286 = vmatpush1.bf16.msra.mxu0 %v1597
        %2287 = vmatprep.subr.bf16.mxu0 0
        %2288 = vmatpush1.bf16.msra.mxu0 %v1598
        %2289 = vmatprep.subr.bf16.mxu0 0
        %2290 = vmatpush1.bf16.msra.mxu0 %v1599
        %2291 = vmatprep.subr.bf16.mxu0 0
        %2292 = vmatpush1.bf16.msra.mxu0 %v1600
        %2293 = vmatprep.subr.bf16.mxu0 0
        %2294 = vmatpush1.bf16.msra.mxu0 %v1601
        %2295 = vmatprep.subr.bf16.mxu0 0
        %2296 = vmatpush1.bf16.msra.mxu0 %v1602
        %2297 = vmatprep.subr.bf16.mxu0 0
        %2298 = vmatpush1.bf16.msra.mxu0 %v1603
        %2299 = vmatprep.subr.bf16.mxu0 0
        %2300 = vmatpush1.bf16.msra.mxu0 %v1604
        %2301 = vmatprep.subr.bf16.mxu0 0
        %2302 = vmatpush1.bf16.msra.mxu0 %v1605
        %2303 = vmatprep.subr.bf16.mxu0 0
        %2304 = vmatpush1.bf16.msra.mxu0 %v1606
        %2305 = vmatprep.subr.bf16.mxu0 0
        %2306 = vmatpush1.bf16.msra.mxu0 %v1607
        %2307 = vmatprep.subr.bf16.mxu0 0
        %2308 = vmatpush1.bf16.msra.mxu0 %v1608
        %2309 = vmatprep.subr.bf16.mxu0 0
        %2310 = vmatpush1.bf16.msra.mxu0 %v1609
        %2311 = vmatprep.subr.bf16.mxu0 0
        %2312 = vmatpush1.bf16.msra.mxu0 %v1610
        %2313 = vmatprep.subr.bf16.mxu0 0
        %2314 = vmatpush1.bf16.msra.mxu0 %v1611
        %2315 = vmatprep.subr.bf16.mxu0 0
        %2316 = vmatpush1.bf16.msra.mxu0 %v1612
        %2317 = vmatprep.mubr.bf16.mxu0 %v1090
        %2318 = vmatmul.mubr.bf16.gmra.mrb[0].mxu0 %v1089
        %v2319 = vpop.f32.mrb[0].mxu0
        %v2320 = vadd.f32 %v2279, %v2319
        %v2321 = vpop.f32.mrb[0].mxu0
        %v2322 = vpop.f32.mrb[0].mxu0
        %v2323 = vadd.f32 %v2282, %v2322
        %v2324 = vpop.f32.mrb[0].mxu0
        %2325 = vdwg.mxu0
        %2326 = vmatprep.subr.bf16.mxu0 0
        %2327 = vmatpush1.bf16.msra.mxu0 %v1460
        %2328 = vmatprep.subr.bf16.mxu0 0
        %2329 = vmatpush1.bf16.msra.mxu0 %v1461
        %2330 = vmatprep.subr.bf16.mxu0 0
        %2331 = vmatpush1.bf16.msra.mxu0 %v1462
        %2332 = vmatprep.subr.bf16.mxu0 0
        %2333 = vmatpush1.bf16.msra.mxu0 %v1463
        %2334 = vmatprep.subr.bf16.mxu0 0
        %2335 = vmatpush1.bf16.msra.mxu0 %v1464
        %2336 = vmatprep.subr.bf16.mxu0 0
        %2337 = vmatpush1.bf16.msra.mxu0 %v1465
        %2338 = vmatprep.subr.bf16.mxu0 0
        %2339 = vmatpush1.bf16.msra.mxu0 %v1466
        %2340 = vmatprep.subr.bf16.mxu0 0
        %2341 = vmatpush1.bf16.msra.mxu0 %v1467
        %2342 = vmatprep.subr.bf16.mxu0 0
        %2343 = vmatpush1.bf16.msra.mxu0 %v1468
        %2344 = vmatprep.subr.bf16.mxu0 0
        %2345 = vmatpush1.bf16.msra.mxu0 %v1469
        %2346 = vmatprep.subr.bf16.mxu0 0
        %2347 = vmatpush1.bf16.msra.mxu0 %v1470
        %2348 = vmatprep.subr.bf16.mxu0 0
        %2349 = vmatpush1.bf16.msra.mxu0 %v1471
        %2350 = vmatprep.subr.bf16.mxu0 0
        %2351 = vmatpush1.bf16.msra.mxu0 %v1472
        %2352 = vmatprep.subr.bf16.mxu0 0
        %2353 = vmatpush1.bf16.msra.mxu0 %v1473
        %2354 = vmatprep.subr.bf16.mxu0 0
        %2355 = vmatpush1.bf16.msra.mxu0 %v1474
        %2356 = vmatprep.subr.bf16.mxu0 0
        %2357 = vmatpush1.bf16.msra.mxu0 %v1475
        %2358 = vmatprep.mubr.bf16.mxu0 %v1210
        %2359 = vmatmul.mubr.bf16.gmra.mrb[0].mxu0 %v1209
        %v2360 = vpop.f32.mrb[0].mxu0
        %v2361 = vadd.f32 0.0, %v2360
        %v2362 = vpop.f32.mrb[0].mxu0
        %v2363 = vpop.f32.mrb[0].mxu0
        %v2364 = vadd.f32 0.0, %v2363
        %v2365 = vpop.f32.mrb[0].mxu0
        %2366 = vdwg.mxu0
        %2367 = vmatprep.subr.bf16.mxu0 0
        %2368 = vmatpush1.bf16.msra.mxu0 %v1597
        %2369 = vmatprep.subr.bf16.mxu0 0
        %2370 = vmatpush1.bf16.msra.mxu0 %v1598
        %2371 = vmatprep.subr.bf16.mxu0 0
        %2372 = vmatpush1.bf16.msra.mxu0 %v1599
        %2373 = vmatprep.subr.bf16.mxu0 0
        %2374 = vmatpush1.bf16.msra.mxu0 %v1600
        %2375 = vmatprep.subr.bf16.mxu0 0
        %2376 = vmatpush1.bf16.msra.mxu0 %v1601
        %2377 = vmatprep.subr.bf16.mxu0 0
        %2378 = vmatpush1.bf16.msra.mxu0 %v1602
        %2379 = vmatprep.subr.bf16.mxu0 0
        %2380 = vmatpush1.bf16.msra.mxu0 %v1603
        %2381 = vmatprep.subr.bf16.mxu0 0
        %2382 = vmatpush1.bf16.msra.mxu0 %v1604
        %2383 = vmatprep.subr.bf16.mxu0 0
        %2384 = vmatpush1.bf16.msra.mxu0 %v1605
        %2385 = vmatprep.subr.bf16.mxu0 0
        %2386 = vmatpush1.bf16.msra.mxu0 %v1606
        %2387 = vmatprep.subr.bf16.mxu0 0
        %2388 = vmatpush1.bf16.msra.mxu0 %v1607
        %2389 = vmatprep.subr.bf16.mxu0 0
        %2390 = vmatpush1.bf16.msra.mxu0 %v1608
        %2391 = vmatprep.subr.bf16.mxu0 0
        %2392 = vmatpush1.bf16.msra.mxu0 %v1609
        %2393 = vmatprep.subr.bf16.mxu0 0
        %2394 = vmatpush1.bf16.msra.mxu0 %v1610
        %2395 = vmatprep.subr.bf16.mxu0 0
        %2396 = vmatpush1.bf16.msra.mxu0 %v1611
        %2397 = vmatprep.subr.bf16.mxu0 0
        %2398 = vmatpush1.bf16.msra.mxu0 %v1612
        %2399 = vmatprep.mubr.bf16.mxu0 %v1150
        %2400 = vmatmul.mubr.bf16.gmra.mrb[0].mxu0 %v1149
        %v2401 = vpop.f32.mrb[0].mxu0
        %v2402 = vadd.f32 %v2361, %v2401
        %v2403 = vpop.f32.mrb[0].mxu0
        %v2404 = vpop.f32.mrb[0].mxu0
        %v2405 = vadd.f32 %v2364, %v2404
        %v2406 = vpop.f32.mrb[0].mxu0
        %2407 = vdwg.mxu0
        %2408 = vmatprep.subr.bf16.mxu0 0
        %2409 = vmatpush1.bf16.msra.mxu0 %v1460
        %2410 = vmatprep.subr.bf16.mxu0 0
        %2411 = vmatpush1.bf16.msra.mxu0 %v1461
        %2412 = vmatprep.subr.bf16.mxu0 0
        %2413 = vmatpush1.bf16.msra.mxu0 %v1462
        %2414 = vmatprep.subr.bf16.mxu0 0
        %2415 = vmatpush1.bf16.msra.mxu0 %v1463
        %2416 = vmatprep.subr.bf16.mxu0 0
        %2417 = vmatpush1.bf16.msra.mxu0 %v1464
        %2418 = vmatprep.subr.bf16.mxu0 0
        %2419 = vmatpush1.bf16.msra.mxu0 %v1465
        %2420 = vmatprep.subr.bf16.mxu0 0
        %2421 = vmatpush1.bf16.msra.mxu0 %v1466
        %2422 = vmatprep.subr.bf16.mxu0 0
        %2423 = vmatpush1.bf16.msra.mxu0 %v1467
        %2424 = vmatprep.subr.bf16.mxu0 0
        %2425 = vmatpush1.bf16.msra.mxu0 %v1468
        %2426 = vmatprep.subr.bf16.mxu0 0
        %2427 = vmatpush1.bf16.msra.mxu0 %v1469
        %2428 = vmatprep.subr.bf16.mxu0 0
        %2429 = vmatpush1.bf16.msra.mxu0 %v1470
        %2430 = vmatprep.subr.bf16.mxu0 0
        %2431 = vmatpush1.bf16.msra.mxu0 %v1471
        %2432 = vmatprep.subr.bf16.mxu0 0
        %2433 = vmatpush1.bf16.msra.mxu0 %v1472
        %2434 = vmatprep.subr.bf16.mxu0 0
        %2435 = vmatpush1.bf16.msra.mxu0 %v1473
        %2436 = vmatprep.subr.bf16.mxu0 0
        %2437 = vmatpush1.bf16.msra.mxu0 %v1474
        %2438 = vmatprep.subr.bf16.mxu0 0
        %2439 = vmatpush1.bf16.msra.mxu0 %v1475
        %2440 = vmatprep.mubr.bf16.mxu0 %v1270
        %2441 = vmatmul.mubr.bf16.gmra.mrb[0].mxu0 %v1269
        %v2442 = vpop.f32.mrb[0].mxu0
        %v2443 = vadd.f32 0.0, %v2442
        %v2444 = vpop.f32.mrb[0].mxu0
        %v2445 = vpop.f32.mrb[0].mxu0
        %v2446 = vadd.f32 0.0, %v2445
        %v2447 = vpop.f32.mrb[0].mxu0
        %2448 = vdwg.mxu0
        %2449 = vmatprep.subr.bf16.mxu0 0
        %2450 = vmatpush1.bf16.msra.mxu0 %v1597
        %2451 = vmatprep.subr.bf16.mxu0 0
        %2452 = vmatpush1.bf16.msra.mxu0 %v1598
        %2453 = vmatprep.subr.bf16.mxu0 0
        %2454 = vmatpush1.bf16.msra.mxu0 %v1599
        %2455 = vmatprep.subr.bf16.mxu0 0
        %2456 = vmatpush1.bf16.msra.mxu0 %v1600
        %2457 = vmatprep.subr.bf16.mxu0 0
        %2458 = vmatpush1.bf16.msra.mxu0 %v1601
        %2459 = vmatprep.subr.bf16.mxu0 0
        %2460 = vmatpush1.bf16.msra.mxu0 %v1602
        %2461 = vmatprep.subr.bf16.mxu0 0
        %2462 = vmatpush1.bf16.msra.mxu0 %v1603
        %2463 = vmatprep.subr.bf16.mxu0 0
        %2464 = vmatpush1.bf16.msra.mxu0 %v1604
        %2465 = vmatprep.subr.bf16.mxu0 0
        %2466 = vmatpush1.bf16.msra.mxu0 %v1605
        %2467 = vmatprep.subr.bf16.mxu0 0
        %2468 = vmatpush1.bf16.msra.mxu0 %v1606
        %2469 = vmatprep.subr.bf16.mxu0 0
        %2470 = vmatpush1.bf16.msra.mxu0 %v1607
        %2471 = vmatprep.subr.bf16.mxu0 0
        %2472 = vmatpush1.bf16.msra.mxu0 %v1608
        %2473 = vmatprep.subr.bf16.mxu0 0
        %2474 = vmatpush1.bf16.msra.mxu0 %v1609
        %2475 = vmatprep.subr.bf16.mxu0 0
        %2476 = vmatpush1.bf16.msra.mxu0 %v1610
        %2477 = vmatprep.subr.bf16.mxu0 0
        %2478 = vmatpush1.bf16.msra.mxu0 %v1611
        %2479 = vmatprep.subr.bf16.mxu0 0
        %2480 = vmatpush1.bf16.msra.mxu0 %v1612
        %2481 = vmatprep.mubr.bf16.mxu0 %v1210
        %2482 = vmatmul.mubr.bf16.gmra.mrb[0].mxu0 %v1209
        %v2483 = vpop.f32.mrb[0].mxu0
        %v2484 = vadd.f32 %v2443, %v2483
        %v2485 = vpop.f32.mrb[0].mxu0
        %v2486 = vpop.f32.mrb[0].mxu0
        %v2487 = vadd.f32 %v2446, %v2486
        %v2488 = vpop.f32.mrb[0].mxu0
        %2489 = vdwg.mxu0
        %s2490 = scalar_lea.vmem %s3, 256
        %v2491 = vld [vmem:[%s2490] sm:$0xf]
        %v2492 = vld [vmem:[%s2490 + $0x4] sm:$0xf]
        %v2493 = vld [vmem:[%s2490 + $0x8] sm:$0xf]
        %v2494 = vld [vmem:[%s2490 + $0xc] sm:$0xf]
        %v2495 = vld [vmem:[%s2490 + $0x10] sm:$0xf]
        %v2496 = vld [vmem:[%s2490 + $0x14] sm:$0xf]
        %v2497 = vld [vmem:[%s2490 + $0x18] sm:$0xf]
        %v2498 = vld [vmem:[%s2490 + $0x1c] sm:$0xf]
        %v2499 = vld [vmem:[%s2490 + $0x20] sm:$0xf]
        %v2500 = vld [vmem:[%s2490 + $0x24] sm:$0xf]
        %v2501 = vld [vmem:[%s2490 + $0x28] sm:$0xf]
        %v2502 = vld [vmem:[%s2490 + $0x2c] sm:$0xf]
        %v2503 = vld [vmem:[%s2490 + $0x30] sm:$0xf]
        %v2504 = vld [vmem:[%s2490 + $0x34] sm:$0xf]
        %v2505 = vld [vmem:[%s2490 + $0x38] sm:$0xf]
        %v2506 = vld [vmem:[%s2490 + $0x3c] sm:$0xf]
        %v2507 = vld [vmem:[%s2490 + $0x40] sm:$0xf]
        %v2508 = vld [vmem:[%s2490 + $0x44] sm:$0xf]
        %v2509 = vld [vmem:[%s2490 + $0x48] sm:$0xf]
        %v2510 = vld [vmem:[%s2490 + $0x4c] sm:$0xf]
        %v2511 = vld [vmem:[%s2490 + $0x50] sm:$0xf]
        %v2512 = vld [vmem:[%s2490 + $0x54] sm:$0xf]
        %v2513 = vld [vmem:[%s2490 + $0x58] sm:$0xf]
        %v2514 = vld [vmem:[%s2490 + $0x5c] sm:$0xf]
        %v2515 = vld [vmem:[%s2490 + $0x60] sm:$0xf]
        %v2516 = vld [vmem:[%s2490 + $0x64] sm:$0xf]
        %v2517 = vld [vmem:[%s2490 + $0x68] sm:$0xf]
        %v2518 = vld [vmem:[%s2490 + $0x6c] sm:$0xf]
        %v2519 = vld [vmem:[%s2490 + $0x70] sm:$0xf]
        %v2520 = vld [vmem:[%s2490 + $0x74] sm:$0xf]
        %v2521 = vld [vmem:[%s2490 + $0x78] sm:$0xf]
        %v2522 = vld [vmem:[%s2490 + $0x7c] sm:$0xf]
        %v2555 = vunpack.c.l.b16 %v2491
        %v2556 = vunpack.c.l.b16 %v2492
        %v2557 = vunpack.c.l.b16 %v2493
        %v2558 = vunpack.c.l.b16 %v2494
        %v2559 = vunpack.c.l.b16 %v2495
        %v2560 = vunpack.c.l.b16 %v2496
        %v2561 = vunpack.c.l.b16 %v2497
        %v2562 = vunpack.c.l.b16 %v2498
        %v2563 = vunpack.c.l.b16 %v2499
        %v2564 = vunpack.c.l.b16 %v2500
        %v2565 = vunpack.c.l.b16 %v2501
        %v2566 = vunpack.c.l.b16 %v2502
        %v2567 = vunpack.c.l.b16 %v2503
        %v2568 = vunpack.c.l.b16 %v2504
        %v2569 = vunpack.c.l.b16 %v2505
        %v2570 = vunpack.c.l.b16 %v2506
        %v2571 = vunpack.c.l.b16 %v2507
        %v2572 = vunpack.c.l.b16 %v2508
        %v2573 = vunpack.c.l.b16 %v2509
        %v2574 = vunpack.c.l.b16 %v2510
        %v2575 = vunpack.c.l.b16 %v2511
        %v2576 = vunpack.c.l.b16 %v2512
        %v2577 = vunpack.c.l.b16 %v2513
        %v2578 = vunpack.c.l.b16 %v2514
        %v2579 = vunpack.c.l.b16 %v2515
        %v2580 = vunpack.c.l.b16 %v2516
        %v2581 = vunpack.c.l.b16 %v2517
        %v2582 = vunpack.c.l.b16 %v2518
        %v2583 = vunpack.c.l.b16 %v2519
        %v2584 = vunpack.c.l.b16 %v2520
        %v2585 = vunpack.c.l.b16 %v2521
        %v2586 = vunpack.c.l.b16 %v2522
        %v2587 = vpack.c.b16 %v2556, %v2555
        %v2588 = vpack.c.b16 %v2558, %v2557
        %v2589 = vpack.c.b16 %v2560, %v2559
        %v2590 = vpack.c.b16 %v2562, %v2561
        %v2591 = vpack.c.b16 %v2564, %v2563
        %v2592 = vpack.c.b16 %v2566, %v2565
        %v2593 = vpack.c.b16 %v2568, %v2567
        %v2594 = vpack.c.b16 %v2570, %v2569
        %v2595 = vpack.c.b16 %v2572, %v2571
        %v2596 = vpack.c.b16 %v2574, %v2573
        %v2597 = vpack.c.b16 %v2576, %v2575
        %v2598 = vpack.c.b16 %v2578, %v2577
        %v2599 = vpack.c.b16 %v2580, %v2579
        %v2600 = vpack.c.b16 %v2582, %v2581
        %v2601 = vpack.c.b16 %v2584, %v2583
        %v2602 = vpack.c.b16 %v2586, %v2585
        %2619 = vmatprep.subr.bf16.mxu0 0
        %2620 = vmatpush1.bf16.msra.mxu0 %v2587
        %2621 = vmatprep.subr.bf16.mxu0 0
        %2622 = vmatpush1.bf16.msra.mxu0 %v2588
        %2623 = vmatprep.subr.bf16.mxu0 0
        %2624 = vmatpush1.bf16.msra.mxu0 %v2589
        %2625 = vmatprep.subr.bf16.mxu0 0
        %2626 = vmatpush1.bf16.msra.mxu0 %v2590
        %2627 = vmatprep.subr.bf16.mxu0 0
        %2628 = vmatpush1.bf16.msra.mxu0 %v2591
        %2629 = vmatprep.subr.bf16.mxu0 0
        %2630 = vmatpush1.bf16.msra.mxu0 %v2592
        %2631 = vmatprep.subr.bf16.mxu0 0
        %2632 = vmatpush1.bf16.msra.mxu0 %v2593
        %2633 = vmatprep.subr.bf16.mxu0 0
        %2634 = vmatpush1.bf16.msra.mxu0 %v2594
        %2635 = vmatprep.subr.bf16.mxu0 0
        %2636 = vmatpush1.bf16.msra.mxu0 %v2595
        %2637 = vmatprep.subr.bf16.mxu0 0
        %2638 = vmatpush1.bf16.msra.mxu0 %v2596
        %2639 = vmatprep.subr.bf16.mxu0 0
        %2640 = vmatpush1.bf16.msra.mxu0 %v2597
        %2641 = vmatprep.subr.bf16.mxu0 0
        %2642 = vmatpush1.bf16.msra.mxu0 %v2598
        %2643 = vmatprep.subr.bf16.mxu0 0
        %2644 = vmatpush1.bf16.msra.mxu0 %v2599
        %2645 = vmatprep.subr.bf16.mxu0 0
        %2646 = vmatpush1.bf16.msra.mxu0 %v2600
        %2647 = vmatprep.subr.bf16.mxu0 0
        %2648 = vmatpush1.bf16.msra.mxu0 %v2601
        %2649 = vmatprep.subr.bf16.mxu0 0
        %2650 = vmatpush1.bf16.msra.mxu0 %v2602
        %2651 = vmatprep.mubr.bf16.mxu0 %v730
        %2652 = vmatmul.mubr.bf16.gmra.mrb[0].mxu0 %v729
        %v2653 = vpop.f32.mrb[0].mxu0
        %v2654 = vadd.f32 0.0, %v2653
        %v2655 = vpop.f32.mrb[0].mxu0
        %v2656 = vpop.f32.mrb[0].mxu0
        %v2657 = vadd.f32 0.0, %v2656
        %v2658 = vpop.f32.mrb[0].mxu0
        %2659 = vdwg.mxu0
        %v2660 = vadd.f32 %v1664, %v2654
        %v2661 = vadd.f32 %v1667, %v2657
        %2662 = vmatprep.subr.bf16.mxu0 0
        %2663 = vmatpush1.bf16.msra.mxu0 %v2587
        %2664 = vmatprep.subr.bf16.mxu0 0
        %2665 = vmatpush1.bf16.msra.mxu0 %v2588
        %2666 = vmatprep.subr.bf16.mxu0 0
        %2667 = vmatpush1.bf16.msra.mxu0 %v2589
        %2668 = vmatprep.subr.bf16.mxu0 0
        %2669 = vmatpush1.bf16.msra.mxu0 %v2590
        %2670 = vmatprep.subr.bf16.mxu0 0
        %2671 = vmatpush1.bf16.msra.mxu0 %v2591
        %2672 = vmatprep.subr.bf16.mxu0 0
        %2673 = vmatpush1.bf16.msra.mxu0 %v2592
        %2674 = vmatprep.subr.bf16.mxu0 0
        %2675 = vmatpush1.bf16.msra.mxu0 %v2593
        %2676 = vmatprep.subr.bf16.mxu0 0
        %2677 = vmatpush1.bf16.msra.mxu0 %v2594
        %2678 = vmatprep.subr.bf16.mxu0 0
        %2679 = vmatpush1.bf16.msra.mxu0 %v2595
        %2680 = vmatprep.subr.bf16.mxu0 0
        %2681 = vmatpush1.bf16.msra.mxu0 %v2596
        %2682 = vmatprep.subr.bf16.mxu0 0
        %2683 = vmatpush1.bf16.msra.mxu0 %v2597
        %2684 = vmatprep.subr.bf16.mxu0 0
        %2685 = vmatpush1.bf16.msra.mxu0 %v2598
        %2686 = vmatprep.subr.bf16.mxu0 0
        %2687 = vmatpush1.bf16.msra.mxu0 %v2599
        %2688 = vmatprep.subr.bf16.mxu0 0
        %2689 = vmatpush1.bf16.msra.mxu0 %v2600
        %2690 = vmatprep.subr.bf16.mxu0 0
        %2691 = vmatpush1.bf16.msra.mxu0 %v2601
        %2692 = vmatprep.subr.bf16.mxu0 0
        %2693 = vmatpush1.bf16.msra.mxu0 %v2602
        %2694 = vmatprep.mubr.bf16.mxu0 %v790
        %2695 = vmatmul.mubr.bf16.gmra.mrb[0].mxu0 %v789
        %v2696 = vpop.f32.mrb[0].mxu0
        %v2697 = vadd.f32 0.0, %v2696
        %v2698 = vpop.f32.mrb[0].mxu0
        %v2699 = vpop.f32.mrb[0].mxu0
        %v2700 = vadd.f32 0.0, %v2699
        %v2701 = vpop.f32.mrb[0].mxu0
        %2702 = vdwg.mxu0
        %v2703 = vadd.f32 %v1746, %v2697
        %v2704 = vadd.f32 %v1749, %v2700
        %2705 = vmatprep.subr.bf16.mxu0 0
        %2706 = vmatpush1.bf16.msra.mxu0 %v2587
        %2707 = vmatprep.subr.bf16.mxu0 0
        %2708 = vmatpush1.bf16.msra.mxu0 %v2588
        %2709 = vmatprep.subr.bf16.mxu0 0
        %2710 = vmatpush1.bf16.msra.mxu0 %v2589
        %2711 = vmatprep.subr.bf16.mxu0 0
        %2712 = vmatpush1.bf16.msra.mxu0 %v2590
        %2713 = vmatprep.subr.bf16.mxu0 0
        %2714 = vmatpush1.bf16.msra.mxu0 %v2591
        %2715 = vmatprep.subr.bf16.mxu0 0
        %2716 = vmatpush1.bf16.msra.mxu0 %v2592
        %2717 = vmatprep.subr.bf16.mxu0 0
        %2718 = vmatpush1.bf16.msra.mxu0 %v2593
        %2719 = vmatprep.subr.bf16.mxu0 0
        %2720 = vmatpush1.bf16.msra.mxu0 %v2594
        %2721 = vmatprep.subr.bf16.mxu0 0
        %2722 = vmatpush1.bf16.msra.mxu0 %v2595
        %2723 = vmatprep.subr.bf16.mxu0 0
        %2724 = vmatpush1.bf16.msra.mxu0 %v2596
        %2725 = vmatprep.subr.bf16.mxu0 0
        %2726 = vmatpush1.bf16.msra.mxu0 %v2597
        %2727 = vmatprep.subr.bf16.mxu0 0
        %2728 = vmatpush1.bf16.msra.mxu0 %v2598
        %2729 = vmatprep.subr.bf16.mxu0 0
        %2730 = vmatpush1.bf16.msra.mxu0 %v2599
        %2731 = vmatprep.subr.bf16.mxu0 0
        %2732 = vmatpush1.bf16.msra.mxu0 %v2600
        %2733 = vmatprep.subr.bf16.mxu0 0
        %2734 = vmatpush1.bf16.msra.mxu0 %v2601
        %2735 = vmatprep.subr.bf16.mxu0 0
        %2736 = vmatpush1.bf16.msra.mxu0 %v2602
        %2737 = vmatprep.mubr.bf16.mxu0 %v850
        %2738 = vmatmul.mubr.bf16.gmra.mrb[0].mxu0 %v849
        %v2739 = vpop.f32.mrb[0].mxu0
        %v2740 = vadd.f32 0.0, %v2739
        %v2741 = vpop.f32.mrb[0].mxu0
        %v2742 = vpop.f32.mrb[0].mxu0
        %v2743 = vadd.f32 0.0, %v2742
        %v2744 = vpop.f32.mrb[0].mxu0
        %2745 = vdwg.mxu0
        %v2746 = vadd.f32 %v1828, %v2740
        %v2747 = vadd.f32 %v1831, %v2743
        %2748 = vmatprep.subr.bf16.mxu0 0
        %2749 = vmatpush1.bf16.msra.mxu0 %v2587
        %2750 = vmatprep.subr.bf16.mxu0 0
        %2751 = vmatpush1.bf16.msra.mxu0 %v2588
        %2752 = vmatprep.subr.bf16.mxu0 0
        %2753 = vmatpush1.bf16.msra.mxu0 %v2589
        %2754 = vmatprep.subr.bf16.mxu0 0
        %2755 = vmatpush1.bf16.msra.mxu0 %v2590
        %2756 = vmatprep.subr.bf16.mxu0 0
        %2757 = vmatpush1.bf16.msra.mxu0 %v2591
        %2758 = vmatprep.subr.bf16.mxu0 0
        %2759 = vmatpush1.bf16.msra.mxu0 %v2592
        %2760 = vmatprep.subr.bf16.mxu0 0
        %2761 = vmatpush1.bf16.msra.mxu0 %v2593
        %2762 = vmatprep.subr.bf16.mxu0 0
        %2763 = vmatpush1.bf16.msra.mxu0 %v2594
        %2764 = vmatprep.subr.bf16.mxu0 0
        %2765 = vmatpush1.bf16.msra.mxu0 %v2595
        %2766 = vmatprep.subr.bf16.mxu0 0
        %2767 = vmatpush1.bf16.msra.mxu0 %v2596
        %2768 = vmatprep.subr.bf16.mxu0 0
        %2769 = vmatpush1.bf16.msra.mxu0 %v2597
        %2770 = vmatprep.subr.bf16.mxu0 0
        %2771 = vmatpush1.bf16.msra.mxu0 %v2598
        %2772 = vmatprep.subr.bf16.mxu0 0
        %2773 = vmatpush1.bf16.msra.mxu0 %v2599
        %2774 = vmatprep.subr.bf16.mxu0 0
        %2775 = vmatpush1.bf16.msra.mxu0 %v2600
        %2776 = vmatprep.subr.bf16.mxu0 0
        %2777 = vmatpush1.bf16.msra.mxu0 %v2601
        %2778 = vmatprep.subr.bf16.mxu0 0
        %2779 = vmatpush1.bf16.msra.mxu0 %v2602
        %2780 = vmatprep.mubr.bf16.mxu0 %v910
        %2781 = vmatmul.mubr.bf16.gmra.mrb[0].mxu0 %v909
        %v2782 = vpop.f32.mrb[0].mxu0
        %v2783 = vadd.f32 0.0, %v2782
        %v2784 = vpop.f32.mrb[0].mxu0
        %v2785 = vpop.f32.mrb[0].mxu0
        %v2786 = vadd.f32 0.0, %v2785
        %v2787 = vpop.f32.mrb[0].mxu0
        %2788 = vdwg.mxu0
        %v2789 = vadd.f32 %v1910, %v2783
        %v2790 = vadd.f32 %v1913, %v2786
        %2791 = vmatprep.subr.bf16.mxu0 0
        %2792 = vmatpush1.bf16.msra.mxu0 %v2587
        %2793 = vmatprep.subr.bf16.mxu0 0
        %2794 = vmatpush1.bf16.msra.mxu0 %v2588
        %2795 = vmatprep.subr.bf16.mxu0 0
        %2796 = vmatpush1.bf16.msra.mxu0 %v2589
        %2797 = vmatprep.subr.bf16.mxu0 0
        %2798 = vmatpush1.bf16.msra.mxu0 %v2590
        %2799 = vmatprep.subr.bf16.mxu0 0
        %2800 = vmatpush1.bf16.msra.mxu0 %v2591
        %2801 = vmatprep.subr.bf16.mxu0 0
        %2802 = vmatpush1.bf16.msra.mxu0 %v2592
        %2803 = vmatprep.subr.bf16.mxu0 0
        %2804 = vmatpush1.bf16.msra.mxu0 %v2593
        %2805 = vmatprep.subr.bf16.mxu0 0
        %2806 = vmatpush1.bf16.msra.mxu0 %v2594
        %2807 = vmatprep.subr.bf16.mxu0 0
        %2808 = vmatpush1.bf16.msra.mxu0 %v2595
        %2809 = vmatprep.subr.bf16.mxu0 0
        %2810 = vmatpush1.bf16.msra.mxu0 %v2596
        %2811 = vmatprep.subr.bf16.mxu0 0
        %2812 = vmatpush1.bf16.msra.mxu0 %v2597
        %2813 = vmatprep.subr.bf16.mxu0 0
        %2814 = vmatpush1.bf16.msra.mxu0 %v2598
        %2815 = vmatprep.subr.bf16.mxu0 0
        %2816 = vmatpush1.bf16.msra.mxu0 %v2599
        %2817 = vmatprep.subr.bf16.mxu0 0
        %2818 = vmatpush1.bf16.msra.mxu0 %v2600
        %2819 = vmatprep.subr.bf16.mxu0 0
        %2820 = vmatpush1.bf16.msra.mxu0 %v2601
        %2821 = vmatprep.subr.bf16.mxu0 0
        %2822 = vmatpush1.bf16.msra.mxu0 %v2602
        %2823 = vmatprep.mubr.bf16.mxu0 %v970
        %2824 = vmatmul.mubr.bf16.gmra.mrb[0].mxu0 %v969
        %v2825 = vpop.f32.mrb[0].mxu0
        %v2826 = vadd.f32 0.0, %v2825
        %v2827 = vpop.f32.mrb[0].mxu0
        %v2828 = vpop.f32.mrb[0].mxu0
        %v2829 = vadd.f32 0.0, %v2828
        %v2830 = vpop.f32.mrb[0].mxu0
        %2831 = vdwg.mxu0
        %v2832 = vadd.f32 %v1992, %v2826
        %v2833 = vadd.f32 %v1995, %v2829
        %2834 = vmatprep.subr.bf16.mxu0 0
        %2835 = vmatpush1.bf16.msra.mxu0 %v2587
        %2836 = vmatprep.subr.bf16.mxu0 0
        %2837 = vmatpush1.bf16.msra.mxu0 %v2588
        %2838 = vmatprep.subr.bf16.mxu0 0
        %2839 = vmatpush1.bf16.msra.mxu0 %v2589
        %2840 = vmatprep.subr.bf16.mxu0 0
        %2841 = vmatpush1.bf16.msra.mxu0 %v2590
        %2842 = vmatprep.subr.bf16.mxu0 0
        %2843 = vmatpush1.bf16.msra.mxu0 %v2591
        %2844 = vmatprep.subr.bf16.mxu0 0
        %2845 = vmatpush1.bf16.msra.mxu0 %v2592
        %2846 = vmatprep.subr.bf16.mxu0 0
        %2847 = vmatpush1.bf16.msra.mxu0 %v2593
        %2848 = vmatprep.subr.bf16.mxu0 0
        %2849 = vmatpush1.bf16.msra.mxu0 %v2594
        %2850 = vmatprep.subr.bf16.mxu0 0
        %2851 = vmatpush1.bf16.msra.mxu0 %v2595
        %2852 = vmatprep.subr.bf16.mxu0 0
        %2853 = vmatpush1.bf16.msra.mxu0 %v2596
        %2854 = vmatprep.subr.bf16.mxu0 0
        %2855 = vmatpush1.bf16.msra.mxu0 %v2597
        %2856 = vmatprep.subr.bf16.mxu0 0
        %2857 = vmatpush1.bf16.msra.mxu0 %v2598
        %2858 = vmatprep.subr.bf16.mxu0 0
        %2859 = vmatpush1.bf16.msra.mxu0 %v2599
        %2860 = vmatprep.subr.bf16.mxu0 0
        %2861 = vmatpush1.bf16.msra.mxu0 %v2600
        %2862 = vmatprep.subr.bf16.mxu0 0
        %2863 = vmatpush1.bf16.msra.mxu0 %v2601
        %2864 = vmatprep.subr.bf16.mxu0 0
        %2865 = vmatpush1.bf16.msra.mxu0 %v2602
        %2866 = vmatprep.mubr.bf16.mxu0 %v1030
        %2867 = vmatmul.mubr.bf16.gmra.mrb[0].mxu0 %v1029
        %v2868 = vpop.f32.mrb[0].mxu0
        %v2869 = vadd.f32 0.0, %v2868
        %v2870 = vpop.f32.mrb[0].mxu0
        %v2871 = vpop.f32.mrb[0].mxu0
        %v2872 = vadd.f32 0.0, %v2871
        %v2873 = vpop.f32.mrb[0].mxu0
        %2874 = vdwg.mxu0
        %v2875 = vadd.f32 %v2074, %v2869
        %v2876 = vadd.f32 %v2077, %v2872
        %2877 = vmatprep.subr.bf16.mxu0 0
        %2878 = vmatpush1.bf16.msra.mxu0 %v2587
        %2879 = vmatprep.subr.bf16.mxu0 0
        %2880 = vmatpush1.bf16.msra.mxu0 %v2588
        %2881 = vmatprep.subr.bf16.mxu0 0
        %2882 = vmatpush1.bf16.msra.mxu0 %v2589
        %2883 = vmatprep.subr.bf16.mxu0 0
        %2884 = vmatpush1.bf16.msra.mxu0 %v2590
        %2885 = vmatprep.subr.bf16.mxu0 0
        %2886 = vmatpush1.bf16.msra.mxu0 %v2591
        %2887 = vmatprep.subr.bf16.mxu0 0
        %2888 = vmatpush1.bf16.msra.mxu0 %v2592
        %2889 = vmatprep.subr.bf16.mxu0 0
        %2890 = vmatpush1.bf16.msra.mxu0 %v2593
        %2891 = vmatprep.subr.bf16.mxu0 0
        %2892 = vmatpush1.bf16.msra.mxu0 %v2594
        %2893 = vmatprep.subr.bf16.mxu0 0
        %2894 = vmatpush1.bf16.msra.mxu0 %v2595
        %2895 = vmatprep.subr.bf16.mxu0 0
        %2896 = vmatpush1.bf16.msra.mxu0 %v2596
        %2897 = vmatprep.subr.bf16.mxu0 0
        %2898 = vmatpush1.bf16.msra.mxu0 %v2597
        %2899 = vmatprep.subr.bf16.mxu0 0
        %2900 = vmatpush1.bf16.msra.mxu0 %v2598
        %2901 = vmatprep.subr.bf16.mxu0 0
        %2902 = vmatpush1.bf16.msra.mxu0 %v2599
        %2903 = vmatprep.subr.bf16.mxu0 0
        %2904 = vmatpush1.bf16.msra.mxu0 %v2600
        %2905 = vmatprep.subr.bf16.mxu0 0
        %2906 = vmatpush1.bf16.msra.mxu0 %v2601
        %2907 = vmatprep.subr.bf16.mxu0 0
        %2908 = vmatpush1.bf16.msra.mxu0 %v2602
        %2909 = vmatprep.mubr.bf16.mxu0 %v1090
        %2910 = vmatmul.mubr.bf16.gmra.mrb[0].mxu0 %v1089
        %v2911 = vpop.f32.mrb[0].mxu0
        %v2912 = vadd.f32 0.0, %v2911
        %v2913 = vpop.f32.mrb[0].mxu0
        %v2914 = vpop.f32.mrb[0].mxu0
        %v2915 = vadd.f32 0.0, %v2914
        %v2916 = vpop.f32.mrb[0].mxu0
        %2917 = vdwg.mxu0
        %v2918 = vadd.f32 %v2156, %v2912
        %v2919 = vadd.f32 %v2159, %v2915
        %2920 = vmatprep.subr.bf16.mxu0 0
        %2921 = vmatpush1.bf16.msra.mxu0 %v2587
        %2922 = vmatprep.subr.bf16.mxu0 0
        %2923 = vmatpush1.bf16.msra.mxu0 %v2588
        %2924 = vmatprep.subr.bf16.mxu0 0
        %2925 = vmatpush1.bf16.msra.mxu0 %v2589
        %2926 = vmatprep.subr.bf16.mxu0 0
        %2927 = vmatpush1.bf16.msra.mxu0 %v2590
        %2928 = vmatprep.subr.bf16.mxu0 0
        %2929 = vmatpush1.bf16.msra.mxu0 %v2591
        %2930 = vmatprep.subr.bf16.mxu0 0
        %2931 = vmatpush1.bf16.msra.mxu0 %v2592
        %2932 = vmatprep.subr.bf16.mxu0 0
        %2933 = vmatpush1.bf16.msra.mxu0 %v2593
        %2934 = vmatprep.subr.bf16.mxu0 0
        %2935 = vmatpush1.bf16.msra.mxu0 %v2594
        %2936 = vmatprep.subr.bf16.mxu0 0
        %2937 = vmatpush1.bf16.msra.mxu0 %v2595
        %2938 = vmatprep.subr.bf16.mxu0 0
        %2939 = vmatpush1.bf16.msra.mxu0 %v2596
        %2940 = vmatprep.subr.bf16.mxu0 0
        %2941 = vmatpush1.bf16.msra.mxu0 %v2597
        %2942 = vmatprep.subr.bf16.mxu0 0
        %2943 = vmatpush1.bf16.msra.mxu0 %v2598
        %2944 = vmatprep.subr.bf16.mxu0 0
        %2945 = vmatpush1.bf16.msra.mxu0 %v2599
        %2946 = vmatprep.subr.bf16.mxu0 0
        %2947 = vmatpush1.bf16.msra.mxu0 %v2600
        %2948 = vmatprep.subr.bf16.mxu0 0
        %2949 = vmatpush1.bf16.msra.mxu0 %v2601
        %2950 = vmatprep.subr.bf16.mxu0 0
        %2951 = vmatpush1.bf16.msra.mxu0 %v2602
        %2952 = vmatprep.mubr.bf16.mxu0 %v1150
        %2953 = vmatmul.mubr.bf16.gmra.mrb[0].mxu0 %v1149
        %v2954 = vpop.f32.mrb[0].mxu0
        %v2955 = vadd.f32 0.0, %v2954
        %v2956 = vpop.f32.mrb[0].mxu0
        %v2957 = vpop.f32.mrb[0].mxu0
        %v2958 = vadd.f32 0.0, %v2957
        %v2959 = vpop.f32.mrb[0].mxu0
        %2960 = vdwg.mxu0
        %v2961 = vadd.f32 %v2238, %v2955
        %v2962 = vadd.f32 %v2241, %v2958
        %2963 = vmatprep.subr.bf16.mxu0 0
        %2964 = vmatpush1.bf16.msra.mxu0 %v2587
        %2965 = vmatprep.subr.bf16.mxu0 0
        %2966 = vmatpush1.bf16.msra.mxu0 %v2588
        %2967 = vmatprep.subr.bf16.mxu0 0
        %2968 = vmatpush1.bf16.msra.mxu0 %v2589
        %2969 = vmatprep.subr.bf16.mxu0 0
        %2970 = vmatpush1.bf16.msra.mxu0 %v2590
        %2971 = vmatprep.subr.bf16.mxu0 0
        %2972 = vmatpush1.bf16.msra.mxu0 %v2591
        %2973 = vmatprep.subr.bf16.mxu0 0
        %2974 = vmatpush1.bf16.msra.mxu0 %v2592
        %2975 = vmatprep.subr.bf16.mxu0 0
        %2976 = vmatpush1.bf16.msra.mxu0 %v2593
        %2977 = vmatprep.subr.bf16.mxu0 0
        %2978 = vmatpush1.bf16.msra.mxu0 %v2594
        %2979 = vmatprep.subr.bf16.mxu0 0
        %2980 = vmatpush1.bf16.msra.mxu0 %v2595
        %2981 = vmatprep.subr.bf16.mxu0 0
        %2982 = vmatpush1.bf16.msra.mxu0 %v2596
        %2983 = vmatprep.subr.bf16.mxu0 0
        %2984 = vmatpush1.bf16.msra.mxu0 %v2597
        %2985 = vmatprep.subr.bf16.mxu0 0
        %2986 = vmatpush1.bf16.msra.mxu0 %v2598
        %2987 = vmatprep.subr.bf16.mxu0 0
        %2988 = vmatpush1.bf16.msra.mxu0 %v2599
        %2989 = vmatprep.subr.bf16.mxu0 0
        %2990 = vmatpush1.bf16.msra.mxu0 %v2600
        %2991 = vmatprep.subr.bf16.mxu0 0
        %2992 = vmatpush1.bf16.msra.mxu0 %v2601
        %2993 = vmatprep.subr.bf16.mxu0 0
        %2994 = vmatpush1.bf16.msra.mxu0 %v2602
        %2995 = vmatprep.mubr.bf16.mxu0 %v1210
        %2996 = vmatmul.mubr.bf16.gmra.mrb[0].mxu0 %v1209
        %v2997 = vpop.f32.mrb[0].mxu0
        %v2998 = vadd.f32 0.0, %v2997
        %v2999 = vpop.f32.mrb[0].mxu0
        %v3000 = vpop.f32.mrb[0].mxu0
        %v3001 = vadd.f32 0.0, %v3000
        %v3002 = vpop.f32.mrb[0].mxu0
        %3003 = vdwg.mxu0
        %v3004 = vadd.f32 %v2320, %v2998
        %v3005 = vadd.f32 %v2323, %v3001
        %3006 = vmatprep.subr.bf16.mxu0 0
        %3007 = vmatpush1.bf16.msra.mxu0 %v2587
        %3008 = vmatprep.subr.bf16.mxu0 0
        %3009 = vmatpush1.bf16.msra.mxu0 %v2588
        %3010 = vmatprep.subr.bf16.mxu0 0
        %3011 = vmatpush1.bf16.msra.mxu0 %v2589
        %3012 = vmatprep.subr.bf16.mxu0 0
        %3013 = vmatpush1.bf16.msra.mxu0 %v2590
        %3014 = vmatprep.subr.bf16.mxu0 0
        %3015 = vmatpush1.bf16.msra.mxu0 %v2591
        %3016 = vmatprep.subr.bf16.mxu0 0
        %3017 = vmatpush1.bf16.msra.mxu0 %v2592
        %3018 = vmatprep.subr.bf16.mxu0 0
        %3019 = vmatpush1.bf16.msra.mxu0 %v2593
        %3020 = vmatprep.subr.bf16.mxu0 0
        %3021 = vmatpush1.bf16.msra.mxu0 %v2594
        %3022 = vmatprep.subr.bf16.mxu0 0
        %3023 = vmatpush1.bf16.msra.mxu0 %v2595
        %3024 = vmatprep.subr.bf16.mxu0 0
        %3025 = vmatpush1.bf16.msra.mxu0 %v2596
        %3026 = vmatprep.subr.bf16.mxu0 0
        %3027 = vmatpush1.bf16.msra.mxu0 %v2597
        %3028 = vmatprep.subr.bf16.mxu0 0
        %3029 = vmatpush1.bf16.msra.mxu0 %v2598
        %3030 = vmatprep.subr.bf16.mxu0 0
        %3031 = vmatpush1.bf16.msra.mxu0 %v2599
        %3032 = vmatprep.subr.bf16.mxu0 0
        %3033 = vmatpush1.bf16.msra.mxu0 %v2600
        %3034 = vmatprep.subr.bf16.mxu0 0
        %3035 = vmatpush1.bf16.msra.mxu0 %v2601
        %3036 = vmatprep.subr.bf16.mxu0 0
        %3037 = vmatpush1.bf16.msra.mxu0 %v2602
        %3038 = vmatprep.mubr.bf16.mxu0 %v1270
        %3039 = vmatmul.mubr.bf16.gmra.mrb[0].mxu0 %v1269
        %v3040 = vpop.f32.mrb[0].mxu0
        %v3041 = vadd.f32 0.0, %v3040
        %v3042 = vpop.f32.mrb[0].mxu0
        %v3043 = vpop.f32.mrb[0].mxu0
        %v3044 = vadd.f32 0.0, %v3043
        %v3045 = vpop.f32.mrb[0].mxu0
        %3046 = vdwg.mxu0
        %v3047 = vadd.f32 %v2402, %v3041
        %v3048 = vadd.f32 %v2405, %v3044
        %3049 = vmatprep.subr.bf16.mxu0 0
        %3050 = vmatpush1.bf16.msra.mxu0 %v2587
        %3051 = vmatprep.subr.bf16.mxu0 0
        %3052 = vmatpush1.bf16.msra.mxu0 %v2588
        %3053 = vmatprep.subr.bf16.mxu0 0
        %3054 = vmatpush1.bf16.msra.mxu0 %v2589
        %3055 = vmatprep.subr.bf16.mxu0 0
        %3056 = vmatpush1.bf16.msra.mxu0 %v2590
        %3057 = vmatprep.subr.bf16.mxu0 0
        %3058 = vmatpush1.bf16.msra.mxu0 %v2591
        %3059 = vmatprep.subr.bf16.mxu0 0
        %3060 = vmatpush1.bf16.msra.mxu0 %v2592
        %3061 = vmatprep.subr.bf16.mxu0 0
        %3062 = vmatpush1.bf16.msra.mxu0 %v2593
        %3063 = vmatprep.subr.bf16.mxu0 0
        %3064 = vmatpush1.bf16.msra.mxu0 %v2594
        %3065 = vmatprep.subr.bf16.mxu0 0
        %3066 = vmatpush1.bf16.msra.mxu0 %v2595
        %3067 = vmatprep.subr.bf16.mxu0 0
        %3068 = vmatpush1.bf16.msra.mxu0 %v2596
        %3069 = vmatprep.subr.bf16.mxu0 0
        %3070 = vmatpush1.bf16.msra.mxu0 %v2597
        %3071 = vmatprep.subr.bf16.mxu0 0
        %3072 = vmatpush1.bf16.msra.mxu0 %v2598
        %3073 = vmatprep.subr.bf16.mxu0 0
        %3074 = vmatpush1.bf16.msra.mxu0 %v2599
        %3075 = vmatprep.subr.bf16.mxu0 0
        %3076 = vmatpush1.bf16.msra.mxu0 %v2600
        %3077 = vmatprep.subr.bf16.mxu0 0
        %3078 = vmatpush1.bf16.msra.mxu0 %v2601
        %3079 = vmatprep.subr.bf16.mxu0 0
        %3080 = vmatpush1.bf16.msra.mxu0 %v2602
        %3081 = vmatprep.mubr.bf16.mxu0 %v1330
        %3082 = vmatmul.mubr.bf16.gmra.mrb[0].mxu0 %v1329
        %v3083 = vpop.f32.mrb[0].mxu0
        %v3084 = vadd.f32 0.0, %v3083
        %v3085 = vpop.f32.mrb[0].mxu0
        %v3086 = vpop.f32.mrb[0].mxu0
        %v3087 = vadd.f32 0.0, %v3086
        %v3088 = vpop.f32.mrb[0].mxu0
        %3089 = vdwg.mxu0
        %v3090 = vadd.f32 %v2484, %v3084
        %v3091 = vadd.f32 %v2487, %v3087
        %v3093 = vlaneseq
        %v3094 = vshrl.u32 %v3093, 7
        %v3095 = vsub.s32 0, %v3094
        %v3096 = vrot.slane %v509, %v3095
        %v3098 = vadd.f32 %v2660, %v3096
        %v3099 = vadd.f32 %v2661, %v3096
        %v3100 = vmax.f32 %v3098, 0.0
        %v3101 = vmax.f32 %v3099, 0.0
        %v3102 = vadd.f32 %v2703, %v3096
        %v3103 = vadd.f32 %v2704, %v3096
        %v3104 = vmax.f32 %v3102, 0.0
        %v3105 = vmax.f32 %v3103, 0.0
        %v3106 = vadd.f32 %v2746, %v3096
        %v3107 = vadd.f32 %v2747, %v3096
        %v3108 = vmax.f32 %v3106, 0.0
        %v3109 = vmax.f32 %v3107, 0.0
        %v3110 = vadd.f32 %v2789, %v3096
        %v3111 = vadd.f32 %v2790, %v3096
        %v3112 = vmax.f32 %v3110, 0.0
        %v3113 = vmax.f32 %v3111, 0.0
        %v3114 = vadd.f32 %v2832, %v3096
        %v3115 = vadd.f32 %v2833, %v3096
        %v3116 = vmax.f32 %v3114, 0.0
        %v3117 = vmax.f32 %v3115, 0.0
        %v3118 = vadd.f32 %v2875, %v3096
        %v3119 = vadd.f32 %v2876, %v3096
        %v3120 = vmax.f32 %v3118, 0.0
        %v3121 = vmax.f32 %v3119, 0.0
        %v3122 = vadd.f32 %v2918, %v3096
        %v3123 = vadd.f32 %v2919, %v3096
        %v3124 = vmax.f32 %v3122, 0.0
        %v3125 = vmax.f32 %v3123, 0.0
        %v3126 = vadd.f32 %v2961, %v3096
        %v3127 = vadd.f32 %v2962, %v3096
        %v3128 = vmax.f32 %v3126, 0.0
        %v3129 = vmax.f32 %v3127, 0.0
        %v3130 = vadd.f32 %v3004, %v3096
        %v3131 = vadd.f32 %v3005, %v3096
        %v3132 = vmax.f32 %v3130, 0.0
        %v3133 = vmax.f32 %v3131, 0.0
        %v3134 = vadd.f32 %v3047, %v3096
        %v3135 = vadd.f32 %v3048, %v3096
        %v3136 = vmax.f32 %v3134, 0.0
        %v3137 = vmax.f32 %v3135, 0.0
        %v3138 = vadd.f32 %v3090, %v3096
        %v3139 = vadd.f32 %v3091, %v3096
        %v3140 = vmax.f32 %v3138, 0.0
        %v3141 = vmax.f32 %v3139, 0.0
        %v3142 = vmax.f32 %v3100, %v3104
        %v3143 = vmax.f32 %v3101, %v3105
        %v3144 = vmax.f32 %v3142, %v3108
        %v3145 = vmax.f32 %v3143, %v3109
        %v3146 = vmax.f32 %v3144, %v3112
        %v3147 = vmax.f32 %v3145, %v3113
        %v3148 = vmax.f32 %v3146, %v3116
        %v3149 = vmax.f32 %v3147, %v3117
        %v3150 = vmax.f32 %v3148, %v3120
        %v3151 = vmax.f32 %v3149, %v3121
        %v3152 = vmax.f32 %v3150, %v3124
        %v3153 = vmax.f32 %v3151, %v3125
        %v3154 = vmax.f32 %v3152, %v3128
        %v3155 = vmax.f32 %v3153, %v3129
        %v3156 = vmax.f32 %v3154, %v3132
        %v3157 = vmax.f32 %v3155, %v3133
        %v3158 = vmax.f32 %v3156, %v3136
        %v3159 = vmax.f32 %v3157, %v3137
        %v3160 = vmax.f32 %v3158, %v3140
        %v3161 = vmax.f32 %v3159, %v3141
        %v3162 = vpack.c.bf16 %v3101, %v3100
        %v3163 = vpack.c.bf16 %v3105, %v3104
        %v3164 = vpack.c.bf16 %v3109, %v3108
        %v3165 = vpack.c.bf16 %v3113, %v3112
        %v3166 = vpack.c.bf16 %v3117, %v3116
        %v3167 = vpack.c.bf16 %v3121, %v3120
        %v3168 = vpack.c.bf16 %v3125, %v3124
        %v3169 = vpack.c.bf16 %v3129, %v3128
        %v3170 = vpack.c.bf16 %v3133, %v3132
        %v3171 = vpack.c.bf16 %v3137, %v3136
        %v3172 = vpack.c.bf16 %v3141, %v3140
        %v3173 = vld [vmem:[%s5] sm:$0xf]
        %v3174 = vld [vmem:[%s5 + $0x4] sm:$0xf]
        %v3175 = vld [vmem:[%s5 + $0x8] sm:$0xf]
        %v3176 = vld [vmem:[%s5 + $0xc] sm:$0xf]
        %s3177 = scalar_lea.vmem %s5, 16
        %v3178 = vld [vmem:[%s3177] sm:$0xf]
        %v3179 = vld [vmem:[%s3177 + $0x4] sm:$0xf]
        %v3180 = vld [vmem:[%s3177 + $0x8] sm:$0xf]
        %v3181 = vld [vmem:[%s3177 + $0xc] sm:$0xf]
        %v3186 = vunpack.c.l.b16 %v3178
        %v3187 = vunpack.c.l.b16 %v3179
        %v3188 = vunpack.c.l.b16 %v3180
        %v3189 = vunpack.c.l.b16 %v3181
        %v3190 = vpack.c.b16 %v3187, %v3186
        %v3191 = vpack.c.b16 %v3189, %v3188
        %vm3194 = vcmask 261120
        %v3196 = vsel %vm3194, %v3163, 0
        %3198 = vmatprep.subr.bf16.mxu0 0
        %3199 = vmatpush1.bf16.msra.mxu0 %v3190
        %3200 = vmatprep.subr.bf16.mxu0 0
        %3201 = vmatpush1.bf16.msra.mxu0 %v3191
        %3202 = vmatprep.subr.bf16.mxu0 0
        %3203 = vmatpush1.bf16.msra.mxu0 0
        %3204 = vmatprep.subr.bf16.mxu0 0
        %3205 = vmatpush1.bf16.msra.mxu0 0
        %3206 = vmatprep.subr.bf16.mxu0 0
        %3207 = vmatpush1.bf16.msra.mxu0 0
        %3208 = vmatprep.subr.bf16.mxu0 0
        %3209 = vmatpush1.bf16.msra.mxu0 0
        %3210 = vmatprep.subr.bf16.mxu0 0
        %3211 = vmatpush1.bf16.msra.mxu0 0
        %3212 = vmatprep.subr.bf16.mxu0 0
        %3213 = vmatpush1.bf16.msra.mxu0 0
        %3214 = vmatprep.subr.bf16.mxu0 0
        %3215 = vmatpush1.bf16.msra.mxu0 0
        %3216 = vmatprep.subr.bf16.mxu0 0
        %3217 = vmatpush1.bf16.msra.mxu0 0
        %3218 = vmatprep.subr.bf16.mxu0 0
        %3219 = vmatpush1.bf16.msra.mxu0 0
        %3220 = vmatprep.subr.bf16.mxu0 0
        %3221 = vmatpush1.bf16.msra.mxu0 0
        %3222 = vmatprep.subr.bf16.mxu0 0
        %3223 = vmatpush1.bf16.msra.mxu0 0
        %3224 = vmatprep.subr.bf16.mxu0 0
        %3225 = vmatpush1.bf16.msra.mxu0 0
        %3226 = vmatprep.subr.bf16.mxu0 0
        %3227 = vmatpush1.bf16.msra.mxu0 0
        %3228 = vmatprep.subr.bf16.mxu0 0
        %3229 = vmatpush1.bf16.msra.mxu0 0
        %3230 = vmatprep.mubr.bf16.mxu0 0
        %3231 = vmatmul.mubr.bf16.gmra.mrb[0].mxu0 %v3196
        %v3232 = vpop.f32.mrb[0].mxu0
        %v3233 = vadd.f32 0.0, %v3232
        %v3234 = vpop.f32.mrb[0].mxu0
        %v3235 = vpop.f32.mrb[0].mxu0
        %v3236 = vadd.f32 0.0, %v3235
        %v3237 = vpop.f32.mrb[0].mxu0
        %3238 = vdwg.mxu0
        %v3243 = vunpack.c.l.b16 %v3173
        %v3244 = vunpack.c.l.b16 %v3174
        %v3245 = vunpack.c.l.b16 %v3175
        %v3246 = vunpack.c.l.b16 %v3176
        %v3247 = vpack.c.b16 %v3244, %v3243
        %v3248 = vpack.c.b16 %v3246, %v3245
        %v3252 = vsel %vm3194, %v3162, 0
        %3254 = vmatprep.subr.bf16.mxu0 0
        %3255 = vmatpush1.bf16.msra.mxu0 %v3247
        %3256 = vmatprep.subr.bf16.mxu0 0
        %3257 = vmatpush1.bf16.msra.mxu0 %v3248
        %3258 = vmatprep.subr.bf16.mxu0 0
        %3259 = vmatpush1.bf16.msra.mxu0 0
        %3260 = vmatprep.subr.bf16.mxu0 0
        %3261 = vmatpush1.bf16.msra.mxu0 0
        %3262 = vmatprep.subr.bf16.mxu0 0
        %3263 = vmatpush1.bf16.msra.mxu0 0
        %3264 = vmatprep.subr.bf16.mxu0 0
        %3265 = vmatpush1.bf16.msra.mxu0 0
        %3266 = vmatprep.subr.bf16.mxu0 0
        %3267 = vmatpush1.bf16.msra.mxu0 0
        %3268 = vmatprep.subr.bf16.mxu0 0
        %3269 = vmatpush1.bf16.msra.mxu0 0
        %3270 = vmatprep.subr.bf16.mxu0 0
        %3271 = vmatpush1.bf16.msra.mxu0 0
        %3272 = vmatprep.subr.bf16.mxu0 0
        %3273 = vmatpush1.bf16.msra.mxu0 0
        %3274 = vmatprep.subr.bf16.mxu0 0
        %3275 = vmatpush1.bf16.msra.mxu0 0
        %3276 = vmatprep.subr.bf16.mxu0 0
        %3277 = vmatpush1.bf16.msra.mxu0 0
        %3278 = vmatprep.subr.bf16.mxu0 0
        %3279 = vmatpush1.bf16.msra.mxu0 0
        %3280 = vmatprep.subr.bf16.mxu0 0
        %3281 = vmatpush1.bf16.msra.mxu0 0
        %3282 = vmatprep.subr.bf16.mxu0 0
        %3283 = vmatpush1.bf16.msra.mxu0 0
        %3284 = vmatprep.subr.bf16.mxu0 0
        %3285 = vmatpush1.bf16.msra.mxu0 0
        %3286 = vmatprep.mubr.bf16.mxu0 0
        %3287 = vmatmul.mubr.bf16.gmra.mrb[0].mxu0 %v3252
        %v3288 = vpop.f32.mrb[0].mxu0
        %v3289 = vadd.f32 %v3233, %v3288
        %v3290 = vpop.f32.mrb[0].mxu0
        %v3291 = vpop.f32.mrb[0].mxu0
        %v3292 = vadd.f32 %v3236, %v3291
        %v3293 = vpop.f32.mrb[0].mxu0
        %3294 = vdwg.mxu0
        %v3296 = vsel %vm3194, %v3164, 0
        %3298 = vmatprep.subr.bf16.mxu0 0
        %3299 = vmatpush1.bf16.msra.mxu0 %v3190
        %3300 = vmatprep.subr.bf16.mxu0 0
        %3301 = vmatpush1.bf16.msra.mxu0 %v3191
        %3302 = vmatprep.subr.bf16.mxu0 0
        %3303 = vmatpush1.bf16.msra.mxu0 0
        %3304 = vmatprep.subr.bf16.mxu0 0
        %3305 = vmatpush1.bf16.msra.mxu0 0
        %3306 = vmatprep.subr.bf16.mxu0 0
        %3307 = vmatpush1.bf16.msra.mxu0 0
        %3308 = vmatprep.subr.bf16.mxu0 0
        %3309 = vmatpush1.bf16.msra.mxu0 0
        %3310 = vmatprep.subr.bf16.mxu0 0
        %3311 = vmatpush1.bf16.msra.mxu0 0
        %3312 = vmatprep.subr.bf16.mxu0 0
        %3313 = vmatpush1.bf16.msra.mxu0 0
        %3314 = vmatprep.subr.bf16.mxu0 0
        %3315 = vmatpush1.bf16.msra.mxu0 0
        %3316 = vmatprep.subr.bf16.mxu0 0
        %3317 = vmatpush1.bf16.msra.mxu0 0
        %3318 = vmatprep.subr.bf16.mxu0 0
        %3319 = vmatpush1.bf16.msra.mxu0 0
        %3320 = vmatprep.subr.bf16.mxu0 0
        %3321 = vmatpush1.bf16.msra.mxu0 0
        %3322 = vmatprep.subr.bf16.mxu0 0
        %3323 = vmatpush1.bf16.msra.mxu0 0
        %3324 = vmatprep.subr.bf16.mxu0 0
        %3325 = vmatpush1.bf16.msra.mxu0 0
        %3326 = vmatprep.subr.bf16.mxu0 0
        %3327 = vmatpush1.bf16.msra.mxu0 0
        %3328 = vmatprep.subr.bf16.mxu0 0
        %3329 = vmatpush1.bf16.msra.mxu0 0
        %3330 = vmatprep.mubr.bf16.mxu0 0
        %3331 = vmatmul.mubr.bf16.gmra.mrb[0].mxu0 %v3296
        %v3332 = vpop.f32.mrb[0].mxu0
        %v3333 = vadd.f32 0.0, %v3332
        %v3334 = vpop.f32.mrb[0].mxu0
        %v3335 = vpop.f32.mrb[0].mxu0
        %v3336 = vadd.f32 0.0, %v3335
        %v3337 = vpop.f32.mrb[0].mxu0
        %3338 = vdwg.mxu0
        %3339 = vmatprep.subr.bf16.mxu0 0
        %3340 = vmatpush1.bf16.msra.mxu0 %v3247
        %3341 = vmatprep.subr.bf16.mxu0 0
        %3342 = vmatpush1.bf16.msra.mxu0 %v3248
        %3343 = vmatprep.subr.bf16.mxu0 0
        %3344 = vmatpush1.bf16.msra.mxu0 0
        %3345 = vmatprep.subr.bf16.mxu0 0
        %3346 = vmatpush1.bf16.msra.mxu0 0
        %3347 = vmatprep.subr.bf16.mxu0 0
        %3348 = vmatpush1.bf16.msra.mxu0 0
        %3349 = vmatprep.subr.bf16.mxu0 0
        %3350 = vmatpush1.bf16.msra.mxu0 0
        %3351 = vmatprep.subr.bf16.mxu0 0
        %3352 = vmatpush1.bf16.msra.mxu0 0
        %3353 = vmatprep.subr.bf16.mxu0 0
        %3354 = vmatpush1.bf16.msra.mxu0 0
        %3355 = vmatprep.subr.bf16.mxu0 0
        %3356 = vmatpush1.bf16.msra.mxu0 0
        %3357 = vmatprep.subr.bf16.mxu0 0
        %3358 = vmatpush1.bf16.msra.mxu0 0
        %3359 = vmatprep.subr.bf16.mxu0 0
        %3360 = vmatpush1.bf16.msra.mxu0 0
        %3361 = vmatprep.subr.bf16.mxu0 0
        %3362 = vmatpush1.bf16.msra.mxu0 0
        %3363 = vmatprep.subr.bf16.mxu0 0
        %3364 = vmatpush1.bf16.msra.mxu0 0
        %3365 = vmatprep.subr.bf16.mxu0 0
        %3366 = vmatpush1.bf16.msra.mxu0 0
        %3367 = vmatprep.subr.bf16.mxu0 0
        %3368 = vmatpush1.bf16.msra.mxu0 0
        %3369 = vmatprep.subr.bf16.mxu0 0
        %3370 = vmatpush1.bf16.msra.mxu0 0
        %3371 = vmatprep.mubr.bf16.mxu0 0
        %3372 = vmatmul.mubr.bf16.gmra.mrb[0].mxu0 %v3196
        %v3373 = vpop.f32.mrb[0].mxu0
        %v3374 = vadd.f32 %v3333, %v3373
        %v3375 = vpop.f32.mrb[0].mxu0
        %v3376 = vpop.f32.mrb[0].mxu0
        %v3377 = vadd.f32 %v3336, %v3376
        %v3378 = vpop.f32.mrb[0].mxu0
        %3379 = vdwg.mxu0
        %v3381 = vsel %vm3194, %v3165, 0
        %3383 = vmatprep.subr.bf16.mxu0 0
        %3384 = vmatpush1.bf16.msra.mxu0 %v3190
        %3385 = vmatprep.subr.bf16.mxu0 0
        %3386 = vmatpush1.bf16.msra.mxu0 %v3191
        %3387 = vmatprep.subr.bf16.mxu0 0
        %3388 = vmatpush1.bf16.msra.mxu0 0
        %3389 = vmatprep.subr.bf16.mxu0 0
        %3390 = vmatpush1.bf16.msra.mxu0 0
        %3391 = vmatprep.subr.bf16.mxu0 0
        %3392 = vmatpush1.bf16.msra.mxu0 0
        %3393 = vmatprep.subr.bf16.mxu0 0
        %3394 = vmatpush1.bf16.msra.mxu0 0
        %3395 = vmatprep.subr.bf16.mxu0 0
        %3396 = vmatpush1.bf16.msra.mxu0 0
        %3397 = vmatprep.subr.bf16.mxu0 0
        %3398 = vmatpush1.bf16.msra.mxu0 0
        %3399 = vmatprep.subr.bf16.mxu0 0
        %3400 = vmatpush1.bf16.msra.mxu0 0
        %3401 = vmatprep.subr.bf16.mxu0 0
        %3402 = vmatpush1.bf16.msra.mxu0 0
        %3403 = vmatprep.subr.bf16.mxu0 0
        %3404 = vmatpush1.bf16.msra.mxu0 0
        %3405 = vmatprep.subr.bf16.mxu0 0
        %3406 = vmatpush1.bf16.msra.mxu0 0
        %3407 = vmatprep.subr.bf16.mxu0 0
        %3408 = vmatpush1.bf16.msra.mxu0 0
        %3409 = vmatprep.subr.bf16.mxu0 0
        %3410 = vmatpush1.bf16.msra.mxu0 0
        %3411 = vmatprep.subr.bf16.mxu0 0
        %3412 = vmatpush1.bf16.msra.mxu0 0
        %3413 = vmatprep.subr.bf16.mxu0 0
        %3414 = vmatpush1.bf16.msra.mxu0 0
        %3415 = vmatprep.mubr.bf16.mxu0 0
        %3416 = vmatmul.mubr.bf16.gmra.mrb[0].mxu0 %v3381
        %v3417 = vpop.f32.mrb[0].mxu0
        %v3418 = vadd.f32 0.0, %v3417
        %v3419 = vpop.f32.mrb[0].mxu0
        %v3420 = vpop.f32.mrb[0].mxu0
        %v3421 = vadd.f32 0.0, %v3420
        %v3422 = vpop.f32.mrb[0].mxu0
        %3423 = vdwg.mxu0
        %3424 = vmatprep.subr.bf16.mxu0 0
        %3425 = vmatpush1.bf16.msra.mxu0 %v3247
        %3426 = vmatprep.subr.bf16.mxu0 0
        %3427 = vmatpush1.bf16.msra.mxu0 %v3248
        %3428 = vmatprep.subr.bf16.mxu0 0
        %3429 = vmatpush1.bf16.msra.mxu0 0
        %3430 = vmatprep.subr.bf16.mxu0 0
        %3431 = vmatpush1.bf16.msra.mxu0 0
        %3432 = vmatprep.subr.bf16.mxu0 0
        %3433 = vmatpush1.bf16.msra.mxu0 0
        %3434 = vmatprep.subr.bf16.mxu0 0
        %3435 = vmatpush1.bf16.msra.mxu0 0
        %3436 = vmatprep.subr.bf16.mxu0 0
        %3437 = vmatpush1.bf16.msra.mxu0 0
        %3438 = vmatprep.subr.bf16.mxu0 0
        %3439 = vmatpush1.bf16.msra.mxu0 0
        %3440 = vmatprep.subr.bf16.mxu0 0
        %3441 = vmatpush1.bf16.msra.mxu0 0
        %3442 = vmatprep.subr.bf16.mxu0 0
        %3443 = vmatpush1.bf16.msra.mxu0 0
        %3444 = vmatprep.subr.bf16.mxu0 0
        %3445 = vmatpush1.bf16.msra.mxu0 0
        %3446 = vmatprep.subr.bf16.mxu0 0
        %3447 = vmatpush1.bf16.msra.mxu0 0
        %3448 = vmatprep.subr.bf16.mxu0 0
        %3449 = vmatpush1.bf16.msra.mxu0 0
        %3450 = vmatprep.subr.bf16.mxu0 0
        %3451 = vmatpush1.bf16.msra.mxu0 0
        %3452 = vmatprep.subr.bf16.mxu0 0
        %3453 = vmatpush1.bf16.msra.mxu0 0
        %3454 = vmatprep.subr.bf16.mxu0 0
        %3455 = vmatpush1.bf16.msra.mxu0 0
        %3456 = vmatprep.mubr.bf16.mxu0 0
        %3457 = vmatmul.mubr.bf16.gmra.mrb[0].mxu0 %v3296
        %v3458 = vpop.f32.mrb[0].mxu0
        %v3459 = vadd.f32 %v3418, %v3458
        %v3460 = vpop.f32.mrb[0].mxu0
        %v3461 = vpop.f32.mrb[0].mxu0
        %v3462 = vadd.f32 %v3421, %v3461
        %v3463 = vpop.f32.mrb[0].mxu0
        %3464 = vdwg.mxu0
        %v3466 = vsel %vm3194, %v3166, 0
        %3468 = vmatprep.subr.bf16.mxu0 0
        %3469 = vmatpush1.bf16.msra.mxu0 %v3190
        %3470 = vmatprep.subr.bf16.mxu0 0
        %3471 = vmatpush1.bf16.msra.mxu0 %v3191
        %3472 = vmatprep.subr.bf16.mxu0 0
        %3473 = vmatpush1.bf16.msra.mxu0 0
        %3474 = vmatprep.subr.bf16.mxu0 0
        %3475 = vmatpush1.bf16.msra.mxu0 0
        %3476 = vmatprep.subr.bf16.mxu0 0
        %3477 = vmatpush1.bf16.msra.mxu0 0
        %3478 = vmatprep.subr.bf16.mxu0 0
        %3479 = vmatpush1.bf16.msra.mxu0 0
        %3480 = vmatprep.subr.bf16.mxu0 0
        %3481 = vmatpush1.bf16.msra.mxu0 0
        %3482 = vmatprep.subr.bf16.mxu0 0
        %3483 = vmatpush1.bf16.msra.mxu0 0
        %3484 = vmatprep.subr.bf16.mxu0 0
        %3485 = vmatpush1.bf16.msra.mxu0 0
        %3486 = vmatprep.subr.bf16.mxu0 0
        %3487 = vmatpush1.bf16.msra.mxu0 0
        %3488 = vmatprep.subr.bf16.mxu0 0
        %3489 = vmatpush1.bf16.msra.mxu0 0
        %3490 = vmatprep.subr.bf16.mxu0 0
        %3491 = vmatpush1.bf16.msra.mxu0 0
        %3492 = vmatprep.subr.bf16.mxu0 0
        %3493 = vmatpush1.bf16.msra.mxu0 0
        %3494 = vmatprep.subr.bf16.mxu0 0
        %3495 = vmatpush1.bf16.msra.mxu0 0
        %3496 = vmatprep.subr.bf16.mxu0 0
        %3497 = vmatpush1.bf16.msra.mxu0 0
        %3498 = vmatprep.subr.bf16.mxu0 0
        %3499 = vmatpush1.bf16.msra.mxu0 0
        %3500 = vmatprep.mubr.bf16.mxu0 0
        %3501 = vmatmul.mubr.bf16.gmra.mrb[0].mxu0 %v3466
        %v3502 = vpop.f32.mrb[0].mxu0
        %v3503 = vadd.f32 0.0, %v3502
        %v3504 = vpop.f32.mrb[0].mxu0
        %v3505 = vpop.f32.mrb[0].mxu0
        %v3506 = vadd.f32 0.0, %v3505
        %v3507 = vpop.f32.mrb[0].mxu0
        %3508 = vdwg.mxu0
        %3509 = vmatprep.subr.bf16.mxu0 0
        %3510 = vmatpush1.bf16.msra.mxu0 %v3247
        %3511 = vmatprep.subr.bf16.mxu0 0
        %3512 = vmatpush1.bf16.msra.mxu0 %v3248
        %3513 = vmatprep.subr.bf16.mxu0 0
        %3514 = vmatpush1.bf16.msra.mxu0 0
        %3515 = vmatprep.subr.bf16.mxu0 0
        %3516 = vmatpush1.bf16.msra.mxu0 0
        %3517 = vmatprep.subr.bf16.mxu0 0
        %3518 = vmatpush1.bf16.msra.mxu0 0
        %3519 = vmatprep.subr.bf16.mxu0 0
        %3520 = vmatpush1.bf16.msra.mxu0 0
        %3521 = vmatprep.subr.bf16.mxu0 0
        %3522 = vmatpush1.bf16.msra.mxu0 0
        %3523 = vmatprep.subr.bf16.mxu0 0
        %3524 = vmatpush1.bf16.msra.mxu0 0
        %3525 = vmatprep.subr.bf16.mxu0 0
        %3526 = vmatpush1.bf16.msra.mxu0 0
        %3527 = vmatprep.subr.bf16.mxu0 0
        %3528 = vmatpush1.bf16.msra.mxu0 0
        %3529 = vmatprep.subr.bf16.mxu0 0
        %3530 = vmatpush1.bf16.msra.mxu0 0
        %3531 = vmatprep.subr.bf16.mxu0 0
        %3532 = vmatpush1.bf16.msra.mxu0 0
        %3533 = vmatprep.subr.bf16.mxu0 0
        %3534 = vmatpush1.bf16.msra.mxu0 0
        %3535 = vmatprep.subr.bf16.mxu0 0
        %3536 = vmatpush1.bf16.msra.mxu0 0
        %3537 = vmatprep.subr.bf16.mxu0 0
        %3538 = vmatpush1.bf16.msra.mxu0 0
        %3539 = vmatprep.subr.bf16.mxu0 0
        %3540 = vmatpush1.bf16.msra.mxu0 0
        %3541 = vmatprep.mubr.bf16.mxu0 0
        %3542 = vmatmul.mubr.bf16.gmra.mrb[0].mxu0 %v3381
        %v3543 = vpop.f32.mrb[0].mxu0
        %v3544 = vadd.f32 %v3503, %v3543
        %v3545 = vpop.f32.mrb[0].mxu0
        %v3546 = vpop.f32.mrb[0].mxu0
        %v3547 = vadd.f32 %v3506, %v3546
        %v3548 = vpop.f32.mrb[0].mxu0
        %3549 = vdwg.mxu0
        %v3551 = vsel %vm3194, %v3167, 0
        %3553 = vmatprep.subr.bf16.mxu0 0
        %3554 = vmatpush1.bf16.msra.mxu0 %v3190
        %3555 = vmatprep.subr.bf16.mxu0 0
        %3556 = vmatpush1.bf16.msra.mxu0 %v3191
        %3557 = vmatprep.subr.bf16.mxu0 0
        %3558 = vmatpush1.bf16.msra.mxu0 0
        %3559 = vmatprep.subr.bf16.mxu0 0
        %3560 = vmatpush1.bf16.msra.mxu0 0
        %3561 = vmatprep.subr.bf16.mxu0 0
        %3562 = vmatpush1.bf16.msra.mxu0 0
        %3563 = vmatprep.subr.bf16.mxu0 0
        %3564 = vmatpush1.bf16.msra.mxu0 0
        %3565 = vmatprep.subr.bf16.mxu0 0
        %3566 = vmatpush1.bf16.msra.mxu0 0
        %3567 = vmatprep.subr.bf16.mxu0 0
        %3568 = vmatpush1.bf16.msra.mxu0 0
        %3569 = vmatprep.subr.bf16.mxu0 0
        %3570 = vmatpush1.bf16.msra.mxu0 0
        %3571 = vmatprep.subr.bf16.mxu0 0
        %3572 = vmatpush1.bf16.msra.mxu0 0
        %3573 = vmatprep.subr.bf16.mxu0 0
        %3574 = vmatpush1.bf16.msra.mxu0 0
        %3575 = vmatprep.subr.bf16.mxu0 0
        %3576 = vmatpush1.bf16.msra.mxu0 0
        %3577 = vmatprep.subr.bf16.mxu0 0
        %3578 = vmatpush1.bf16.msra.mxu0 0
        %3579 = vmatprep.subr.bf16.mxu0 0
        %3580 = vmatpush1.bf16.msra.mxu0 0
        %3581 = vmatprep.subr.bf16.mxu0 0
        %3582 = vmatpush1.bf16.msra.mxu0 0
        %3583 = vmatprep.subr.bf16.mxu0 0
        %3584 = vmatpush1.bf16.msra.mxu0 0
        %3585 = vmatprep.mubr.bf16.mxu0 0
        %3586 = vmatmul.mubr.bf16.gmra.mrb[0].mxu0 %v3551
        %v3587 = vpop.f32.mrb[0].mxu0
        %v3588 = vadd.f32 0.0, %v3587
        %v3589 = vpop.f32.mrb[0].mxu0
        %v3590 = vpop.f32.mrb[0].mxu0
        %v3591 = vadd.f32 0.0, %v3590
        %v3592 = vpop.f32.mrb[0].mxu0
        %3593 = vdwg.mxu0
        %3594 = vmatprep.subr.bf16.mxu0 0
        %3595 = vmatpush1.bf16.msra.mxu0 %v3247
        %3596 = vmatprep.subr.bf16.mxu0 0
        %3597 = vmatpush1.bf16.msra.mxu0 %v3248
        %3598 = vmatprep.subr.bf16.mxu0 0
        %3599 = vmatpush1.bf16.msra.mxu0 0
        %3600 = vmatprep.subr.bf16.mxu0 0
        %3601 = vmatpush1.bf16.msra.mxu0 0
        %3602 = vmatprep.subr.bf16.mxu0 0
        %3603 = vmatpush1.bf16.msra.mxu0 0
        %3604 = vmatprep.subr.bf16.mxu0 0
        %3605 = vmatpush1.bf16.msra.mxu0 0
        %3606 = vmatprep.subr.bf16.mxu0 0
        %3607 = vmatpush1.bf16.msra.mxu0 0
        %3608 = vmatprep.subr.bf16.mxu0 0
        %3609 = vmatpush1.bf16.msra.mxu0 0
        %3610 = vmatprep.subr.bf16.mxu0 0
        %3611 = vmatpush1.bf16.msra.mxu0 0
        %3612 = vmatprep.subr.bf16.mxu0 0
        %3613 = vmatpush1.bf16.msra.mxu0 0
        %3614 = vmatprep.subr.bf16.mxu0 0
        %3615 = vmatpush1.bf16.msra.mxu0 0
        %3616 = vmatprep.subr.bf16.mxu0 0
        %3617 = vmatpush1.bf16.msra.mxu0 0
        %3618 = vmatprep.subr.bf16.mxu0 0
        %3619 = vmatpush1.bf16.msra.mxu0 0
        %3620 = vmatprep.subr.bf16.mxu0 0
        %3621 = vmatpush1.bf16.msra.mxu0 0
        %3622 = vmatprep.subr.bf16.mxu0 0
        %3623 = vmatpush1.bf16.msra.mxu0 0
        %3624 = vmatprep.subr.bf16.mxu0 0
        %3625 = vmatpush1.bf16.msra.mxu0 0
        %3626 = vmatprep.mubr.bf16.mxu0 0
        %3627 = vmatmul.mubr.bf16.gmra.mrb[0].mxu0 %v3466
        %v3628 = vpop.f32.mrb[0].mxu0
        %v3629 = vadd.f32 %v3588, %v3628
        %v3630 = vpop.f32.mrb[0].mxu0
        %v3631 = vpop.f32.mrb[0].mxu0
        %v3632 = vadd.f32 %v3591, %v3631
        %v3633 = vpop.f32.mrb[0].mxu0
        %3634 = vdwg.mxu0
        %v3636 = vsel %vm3194, %v3168, 0
        %3638 = vmatprep.subr.bf16.mxu0 0
        %3639 = vmatpush1.bf16.msra.mxu0 %v3190
        %3640 = vmatprep.subr.bf16.mxu0 0
        %3641 = vmatpush1.bf16.msra.mxu0 %v3191
        %3642 = vmatprep.subr.bf16.mxu0 0
        %3643 = vmatpush1.bf16.msra.mxu0 0
        %3644 = vmatprep.subr.bf16.mxu0 0
        %3645 = vmatpush1.bf16.msra.mxu0 0
        %3646 = vmatprep.subr.bf16.mxu0 0
        %3647 = vmatpush1.bf16.msra.mxu0 0
        %3648 = vmatprep.subr.bf16.mxu0 0
        %3649 = vmatpush1.bf16.msra.mxu0 0
        %3650 = vmatprep.subr.bf16.mxu0 0
        %3651 = vmatpush1.bf16.msra.mxu0 0
        %3652 = vmatprep.subr.bf16.mxu0 0
        %3653 = vmatpush1.bf16.msra.mxu0 0
        %3654 = vmatprep.subr.bf16.mxu0 0
        %3655 = vmatpush1.bf16.msra.mxu0 0
        %3656 = vmatprep.subr.bf16.mxu0 0
        %3657 = vmatpush1.bf16.msra.mxu0 0
        %3658 = vmatprep.subr.bf16.mxu0 0
        %3659 = vmatpush1.bf16.msra.mxu0 0
        %3660 = vmatprep.subr.bf16.mxu0 0
        %3661 = vmatpush1.bf16.msra.mxu0 0
        %3662 = vmatprep.subr.bf16.mxu0 0
        %3663 = vmatpush1.bf16.msra.mxu0 0
        %3664 = vmatprep.subr.bf16.mxu0 0
        %3665 = vmatpush1.bf16.msra.mxu0 0
        %3666 = vmatprep.subr.bf16.mxu0 0
        %3667 = vmatpush1.bf16.msra.mxu0 0
        %3668 = vmatprep.subr.bf16.mxu0 0
        %3669 = vmatpush1.bf16.msra.mxu0 0
        %3670 = vmatprep.mubr.bf16.mxu0 0
        %3671 = vmatmul.mubr.bf16.gmra.mrb[0].mxu0 %v3636
        %v3672 = vpop.f32.mrb[0].mxu0
        %v3673 = vadd.f32 0.0, %v3672
        %v3674 = vpop.f32.mrb[0].mxu0
        %v3675 = vpop.f32.mrb[0].mxu0
        %v3676 = vadd.f32 0.0, %v3675
        %v3677 = vpop.f32.mrb[0].mxu0
        %3678 = vdwg.mxu0
        %3679 = vmatprep.subr.bf16.mxu0 0
        %3680 = vmatpush1.bf16.msra.mxu0 %v3247
        %3681 = vmatprep.subr.bf16.mxu0 0
        %3682 = vmatpush1.bf16.msra.mxu0 %v3248
        %3683 = vmatprep.subr.bf16.mxu0 0
        %3684 = vmatpush1.bf16.msra.mxu0 0
        %3685 = vmatprep.subr.bf16.mxu0 0
        %3686 = vmatpush1.bf16.msra.mxu0 0
        %3687 = vmatprep.subr.bf16.mxu0 0
        %3688 = vmatpush1.bf16.msra.mxu0 0
        %3689 = vmatprep.subr.bf16.mxu0 0
        %3690 = vmatpush1.bf16.msra.mxu0 0
        %3691 = vmatprep.subr.bf16.mxu0 0
        %3692 = vmatpush1.bf16.msra.mxu0 0
        %3693 = vmatprep.subr.bf16.mxu0 0
        %3694 = vmatpush1.bf16.msra.mxu0 0
        %3695 = vmatprep.subr.bf16.mxu0 0
        %3696 = vmatpush1.bf16.msra.mxu0 0
        %3697 = vmatprep.subr.bf16.mxu0 0
        %3698 = vmatpush1.bf16.msra.mxu0 0
        %3699 = vmatprep.subr.bf16.mxu0 0
        %3700 = vmatpush1.bf16.msra.mxu0 0
        %3701 = vmatprep.subr.bf16.mxu0 0
        %3702 = vmatpush1.bf16.msra.mxu0 0
        %3703 = vmatprep.subr.bf16.mxu0 0
        %3704 = vmatpush1.bf16.msra.mxu0 0
        %3705 = vmatprep.subr.bf16.mxu0 0
        %3706 = vmatpush1.bf16.msra.mxu0 0
        %3707 = vmatprep.subr.bf16.mxu0 0
        %3708 = vmatpush1.bf16.msra.mxu0 0
        %3709 = vmatprep.subr.bf16.mxu0 0
        %3710 = vmatpush1.bf16.msra.mxu0 0
        %3711 = vmatprep.mubr.bf16.mxu0 0
        %3712 = vmatmul.mubr.bf16.gmra.mrb[0].mxu0 %v3551
        %v3713 = vpop.f32.mrb[0].mxu0
        %v3714 = vadd.f32 %v3673, %v3713
        %v3715 = vpop.f32.mrb[0].mxu0
        %v3716 = vpop.f32.mrb[0].mxu0
        %v3717 = vadd.f32 %v3676, %v3716
        %v3718 = vpop.f32.mrb[0].mxu0
        %3719 = vdwg.mxu0
        %v3721 = vsel %vm3194, %v3169, 0
        %3723 = vmatprep.subr.bf16.mxu0 0
        %3724 = vmatpush1.bf16.msra.mxu0 %v3190
        %3725 = vmatprep.subr.bf16.mxu0 0
        %3726 = vmatpush1.bf16.msra.mxu0 %v3191
        %3727 = vmatprep.subr.bf16.mxu0 0
        %3728 = vmatpush1.bf16.msra.mxu0 0
        %3729 = vmatprep.subr.bf16.mxu0 0
        %3730 = vmatpush1.bf16.msra.mxu0 0
        %3731 = vmatprep.subr.bf16.mxu0 0
        %3732 = vmatpush1.bf16.msra.mxu0 0
        %3733 = vmatprep.subr.bf16.mxu0 0
        %3734 = vmatpush1.bf16.msra.mxu0 0
        %3735 = vmatprep.subr.bf16.mxu0 0
        %3736 = vmatpush1.bf16.msra.mxu0 0
        %3737 = vmatprep.subr.bf16.mxu0 0
        %3738 = vmatpush1.bf16.msra.mxu0 0
        %3739 = vmatprep.subr.bf16.mxu0 0
        %3740 = vmatpush1.bf16.msra.mxu0 0
        %3741 = vmatprep.subr.bf16.mxu0 0
        %3742 = vmatpush1.bf16.msra.mxu0 0
        %3743 = vmatprep.subr.bf16.mxu0 0
        %3744 = vmatpush1.bf16.msra.mxu0 0
        %3745 = vmatprep.subr.bf16.mxu0 0
        %3746 = vmatpush1.bf16.msra.mxu0 0
        %3747 = vmatprep.subr.bf16.mxu0 0
        %3748 = vmatpush1.bf16.msra.mxu0 0
        %3749 = vmatprep.subr.bf16.mxu0 0
        %3750 = vmatpush1.bf16.msra.mxu0 0
        %3751 = vmatprep.subr.bf16.mxu0 0
        %3752 = vmatpush1.bf16.msra.mxu0 0
        %3753 = vmatprep.subr.bf16.mxu0 0
        %3754 = vmatpush1.bf16.msra.mxu0 0
        %3755 = vmatprep.mubr.bf16.mxu0 0
        %3756 = vmatmul.mubr.bf16.gmra.mrb[0].mxu0 %v3721
        %v3757 = vpop.f32.mrb[0].mxu0
        %v3758 = vadd.f32 0.0, %v3757
        %v3759 = vpop.f32.mrb[0].mxu0
        %v3760 = vpop.f32.mrb[0].mxu0
        %v3761 = vadd.f32 0.0, %v3760
        %v3762 = vpop.f32.mrb[0].mxu0
        %3763 = vdwg.mxu0
        %3764 = vmatprep.subr.bf16.mxu0 0
        %3765 = vmatpush1.bf16.msra.mxu0 %v3247
        %3766 = vmatprep.subr.bf16.mxu0 0
        %3767 = vmatpush1.bf16.msra.mxu0 %v3248
        %3768 = vmatprep.subr.bf16.mxu0 0
        %3769 = vmatpush1.bf16.msra.mxu0 0
        %3770 = vmatprep.subr.bf16.mxu0 0
        %3771 = vmatpush1.bf16.msra.mxu0 0
        %3772 = vmatprep.subr.bf16.mxu0 0
        %3773 = vmatpush1.bf16.msra.mxu0 0
        %3774 = vmatprep.subr.bf16.mxu0 0
        %3775 = vmatpush1.bf16.msra.mxu0 0
        %3776 = vmatprep.subr.bf16.mxu0 0
        %3777 = vmatpush1.bf16.msra.mxu0 0
        %3778 = vmatprep.subr.bf16.mxu0 0
        %3779 = vmatpush1.bf16.msra.mxu0 0
        %3780 = vmatprep.subr.bf16.mxu0 0
        %3781 = vmatpush1.bf16.msra.mxu0 0
        %3782 = vmatprep.subr.bf16.mxu0 0
        %3783 = vmatpush1.bf16.msra.mxu0 0
        %3784 = vmatprep.subr.bf16.mxu0 0
        %3785 = vmatpush1.bf16.msra.mxu0 0
        %3786 = vmatprep.subr.bf16.mxu0 0
        %3787 = vmatpush1.bf16.msra.mxu0 0
        %3788 = vmatprep.subr.bf16.mxu0 0
        %3789 = vmatpush1.bf16.msra.mxu0 0
        %3790 = vmatprep.subr.bf16.mxu0 0
        %3791 = vmatpush1.bf16.msra.mxu0 0
        %3792 = vmatprep.subr.bf16.mxu0 0
        %3793 = vmatpush1.bf16.msra.mxu0 0
        %3794 = vmatprep.subr.bf16.mxu0 0
        %3795 = vmatpush1.bf16.msra.mxu0 0
        %3796 = vmatprep.mubr.bf16.mxu0 0
        %3797 = vmatmul.mubr.bf16.gmra.mrb[0].mxu0 %v3636
        %v3798 = vpop.f32.mrb[0].mxu0
        %v3799 = vadd.f32 %v3758, %v3798
        %v3800 = vpop.f32.mrb[0].mxu0
        %v3801 = vpop.f32.mrb[0].mxu0
        %v3802 = vadd.f32 %v3761, %v3801
        %v3803 = vpop.f32.mrb[0].mxu0
        %3804 = vdwg.mxu0
        %v3806 = vsel %vm3194, %v3170, 0
        %3808 = vmatprep.subr.bf16.mxu0 0
        %3809 = vmatpush1.bf16.msra.mxu0 %v3190
        %3810 = vmatprep.subr.bf16.mxu0 0
        %3811 = vmatpush1.bf16.msra.mxu0 %v3191
        %3812 = vmatprep.subr.bf16.mxu0 0
        %3813 = vmatpush1.bf16.msra.mxu0 0
        %3814 = vmatprep.subr.bf16.mxu0 0
        %3815 = vmatpush1.bf16.msra.mxu0 0
        %3816 = vmatprep.subr.bf16.mxu0 0
        %3817 = vmatpush1.bf16.msra.mxu0 0
        %3818 = vmatprep.subr.bf16.mxu0 0
        %3819 = vmatpush1.bf16.msra.mxu0 0
        %3820 = vmatprep.subr.bf16.mxu0 0
        %3821 = vmatpush1.bf16.msra.mxu0 0
        %3822 = vmatprep.subr.bf16.mxu0 0
        %3823 = vmatpush1.bf16.msra.mxu0 0
        %3824 = vmatprep.subr.bf16.mxu0 0
        %3825 = vmatpush1.bf16.msra.mxu0 0
        %3826 = vmatprep.subr.bf16.mxu0 0
        %3827 = vmatpush1.bf16.msra.mxu0 0
        %3828 = vmatprep.subr.bf16.mxu0 0
        %3829 = vmatpush1.bf16.msra.mxu0 0
        %3830 = vmatprep.subr.bf16.mxu0 0
        %3831 = vmatpush1.bf16.msra.mxu0 0
        %3832 = vmatprep.subr.bf16.mxu0 0
        %3833 = vmatpush1.bf16.msra.mxu0 0
        %3834 = vmatprep.subr.bf16.mxu0 0
        %3835 = vmatpush1.bf16.msra.mxu0 0
        %3836 = vmatprep.subr.bf16.mxu0 0
        %3837 = vmatpush1.bf16.msra.mxu0 0
        %3838 = vmatprep.subr.bf16.mxu0 0
        %3839 = vmatpush1.bf16.msra.mxu0 0
        %3840 = vmatprep.mubr.bf16.mxu0 0
        %3841 = vmatmul.mubr.bf16.gmra.mrb[0].mxu0 %v3806
        %v3842 = vpop.f32.mrb[0].mxu0
        %v3843 = vadd.f32 0.0, %v3842
        %v3844 = vpop.f32.mrb[0].mxu0
        %v3845 = vpop.f32.mrb[0].mxu0
        %v3846 = vadd.f32 0.0, %v3845
        %v3847 = vpop.f32.mrb[0].mxu0
        %3848 = vdwg.mxu0
        %3849 = vmatprep.subr.bf16.mxu0 0
        %3850 = vmatpush1.bf16.msra.mxu0 %v3247
        %3851 = vmatprep.subr.bf16.mxu0 0
        %3852 = vmatpush1.bf16.msra.mxu0 %v3248
        %3853 = vmatprep.subr.bf16.mxu0 0
        %3854 = vmatpush1.bf16.msra.mxu0 0
        %3855 = vmatprep.subr.bf16.mxu0 0
        %3856 = vmatpush1.bf16.msra.mxu0 0
        %3857 = vmatprep.subr.bf16.mxu0 0
        %3858 = vmatpush1.bf16.msra.mxu0 0
        %3859 = vmatprep.subr.bf16.mxu0 0
        %3860 = vmatpush1.bf16.msra.mxu0 0
        %3861 = vmatprep.subr.bf16.mxu0 0
        %3862 = vmatpush1.bf16.msra.mxu0 0
        %3863 = vmatprep.subr.bf16.mxu0 0
        %3864 = vmatpush1.bf16.msra.mxu0 0
        %3865 = vmatprep.subr.bf16.mxu0 0
        %3866 = vmatpush1.bf16.msra.mxu0 0
        %3867 = vmatprep.subr.bf16.mxu0 0
        %3868 = vmatpush1.bf16.msra.mxu0 0
        %3869 = vmatprep.subr.bf16.mxu0 0
        %3870 = vmatpush1.bf16.msra.mxu0 0
        %3871 = vmatprep.subr.bf16.mxu0 0
        %3872 = vmatpush1.bf16.msra.mxu0 0
        %3873 = vmatprep.subr.bf16.mxu0 0
        %3874 = vmatpush1.bf16.msra.mxu0 0
        %3875 = vmatprep.subr.bf16.mxu0 0
        %3876 = vmatpush1.bf16.msra.mxu0 0
        %3877 = vmatprep.subr.bf16.mxu0 0
        %3878 = vmatpush1.bf16.msra.mxu0 0
        %3879 = vmatprep.subr.bf16.mxu0 0
        %3880 = vmatpush1.bf16.msra.mxu0 0
        %3881 = vmatprep.mubr.bf16.mxu0 0
        %3882 = vmatmul.mubr.bf16.gmra.mrb[0].mxu0 %v3721
        %v3883 = vpop.f32.mrb[0].mxu0
        %v3884 = vadd.f32 %v3843, %v3883
        %v3885 = vpop.f32.mrb[0].mxu0
        %v3886 = vpop.f32.mrb[0].mxu0
        %v3887 = vadd.f32 %v3846, %v3886
        %v3888 = vpop.f32.mrb[0].mxu0
        %3889 = vdwg.mxu0
        %v3891 = vsel %vm3194, %v3171, 0
        %3893 = vmatprep.subr.bf16.mxu0 0
        %3894 = vmatpush1.bf16.msra.mxu0 %v3190
        %3895 = vmatprep.subr.bf16.mxu0 0
        %3896 = vmatpush1.bf16.msra.mxu0 %v3191
        %3897 = vmatprep.subr.bf16.mxu0 0
        %3898 = vmatpush1.bf16.msra.mxu0 0
        %3899 = vmatprep.subr.bf16.mxu0 0
        %3900 = vmatpush1.bf16.msra.mxu0 0
        %3901 = vmatprep.subr.bf16.mxu0 0
        %3902 = vmatpush1.bf16.msra.mxu0 0
        %3903 = vmatprep.subr.bf16.mxu0 0
        %3904 = vmatpush1.bf16.msra.mxu0 0
        %3905 = vmatprep.subr.bf16.mxu0 0
        %3906 = vmatpush1.bf16.msra.mxu0 0
        %3907 = vmatprep.subr.bf16.mxu0 0
        %3908 = vmatpush1.bf16.msra.mxu0 0
        %3909 = vmatprep.subr.bf16.mxu0 0
        %3910 = vmatpush1.bf16.msra.mxu0 0
        %3911 = vmatprep.subr.bf16.mxu0 0
        %3912 = vmatpush1.bf16.msra.mxu0 0
        %3913 = vmatprep.subr.bf16.mxu0 0
        %3914 = vmatpush1.bf16.msra.mxu0 0
        %3915 = vmatprep.subr.bf16.mxu0 0
        %3916 = vmatpush1.bf16.msra.mxu0 0
        %3917 = vmatprep.subr.bf16.mxu0 0
        %3918 = vmatpush1.bf16.msra.mxu0 0
        %3919 = vmatprep.subr.bf16.mxu0 0
        %3920 = vmatpush1.bf16.msra.mxu0 0
        %3921 = vmatprep.subr.bf16.mxu0 0
        %3922 = vmatpush1.bf16.msra.mxu0 0
        %3923 = vmatprep.subr.bf16.mxu0 0
        %3924 = vmatpush1.bf16.msra.mxu0 0
        %3925 = vmatprep.mubr.bf16.mxu0 0
        %3926 = vmatmul.mubr.bf16.gmra.mrb[0].mxu0 %v3891
        %v3927 = vpop.f32.mrb[0].mxu0
        %v3928 = vadd.f32 0.0, %v3927
        %v3929 = vpop.f32.mrb[0].mxu0
        %v3930 = vpop.f32.mrb[0].mxu0
        %v3931 = vadd.f32 0.0, %v3930
        %v3932 = vpop.f32.mrb[0].mxu0
        %3933 = vdwg.mxu0
        %3934 = vmatprep.subr.bf16.mxu0 0
        %3935 = vmatpush1.bf16.msra.mxu0 %v3247
        %3936 = vmatprep.subr.bf16.mxu0 0
        %3937 = vmatpush1.bf16.msra.mxu0 %v3248
        %3938 = vmatprep.subr.bf16.mxu0 0
        %3939 = vmatpush1.bf16.msra.mxu0 0
        %3940 = vmatprep.subr.bf16.mxu0 0
        %3941 = vmatpush1.bf16.msra.mxu0 0
        %3942 = vmatprep.subr.bf16.mxu0 0
        %3943 = vmatpush1.bf16.msra.mxu0 0
        %3944 = vmatprep.subr.bf16.mxu0 0
        %3945 = vmatpush1.bf16.msra.mxu0 0
        %3946 = vmatprep.subr.bf16.mxu0 0
        %3947 = vmatpush1.bf16.msra.mxu0 0
        %3948 = vmatprep.subr.bf16.mxu0 0
        %3949 = vmatpush1.bf16.msra.mxu0 0
        %3950 = vmatprep.subr.bf16.mxu0 0
        %3951 = vmatpush1.bf16.msra.mxu0 0
        %3952 = vmatprep.subr.bf16.mxu0 0
        %3953 = vmatpush1.bf16.msra.mxu0 0
        %3954 = vmatprep.subr.bf16.mxu0 0
        %3955 = vmatpush1.bf16.msra.mxu0 0
        %3956 = vmatprep.subr.bf16.mxu0 0
        %3957 = vmatpush1.bf16.msra.mxu0 0
        %3958 = vmatprep.subr.bf16.mxu0 0
        %3959 = vmatpush1.bf16.msra.mxu0 0
        %3960 = vmatprep.subr.bf16.mxu0 0
        %3961 = vmatpush1.bf16.msra.mxu0 0
        %3962 = vmatprep.subr.bf16.mxu0 0
        %3963 = vmatpush1.bf16.msra.mxu0 0
        %3964 = vmatprep.subr.bf16.mxu0 0
        %3965 = vmatpush1.bf16.msra.mxu0 0
        %3966 = vmatprep.mubr.bf16.mxu0 0
        %3967 = vmatmul.mubr.bf16.gmra.mrb[0].mxu0 %v3806
        %v3968 = vpop.f32.mrb[0].mxu0
        %v3969 = vadd.f32 %v3928, %v3968
        %v3970 = vpop.f32.mrb[0].mxu0
        %v3971 = vpop.f32.mrb[0].mxu0
        %v3972 = vadd.f32 %v3931, %v3971
        %v3973 = vpop.f32.mrb[0].mxu0
        %3974 = vdwg.mxu0
        %s3975 = scalar_lea.vmem %s5, 32
        %v3976 = vld [vmem:[%s3975] sm:$0xf]
        %v3977 = vld [vmem:[%s3975 + $0x4] sm:$0xf]
        %v3978 = vld [vmem:[%s3975 + $0x8] sm:$0xf]
        %v3979 = vld [vmem:[%s3975 + $0xc] sm:$0xf]
        %v3984 = vunpack.c.l.b16 %v3976
        %v3985 = vunpack.c.l.b16 %v3977
        %v3986 = vunpack.c.l.b16 %v3978
        %v3987 = vunpack.c.l.b16 %v3979
        %v3988 = vpack.c.b16 %v3985, %v3984
        %v3989 = vpack.c.b16 %v3987, %v3986
        %3992 = vmatprep.subr.bf16.mxu0 0
        %3993 = vmatpush1.bf16.msra.mxu0 %v3988
        %3994 = vmatprep.subr.bf16.mxu0 0
        %3995 = vmatpush1.bf16.msra.mxu0 %v3989
        %3996 = vmatprep.subr.bf16.mxu0 0
        %3997 = vmatpush1.bf16.msra.mxu0 0
        %3998 = vmatprep.subr.bf16.mxu0 0
        %3999 = vmatpush1.bf16.msra.mxu0 0
        %4000 = vmatprep.subr.bf16.mxu0 0
        %4001 = vmatpush1.bf16.msra.mxu0 0
        %4002 = vmatprep.subr.bf16.mxu0 0
        %4003 = vmatpush1.bf16.msra.mxu0 0
        %4004 = vmatprep.subr.bf16.mxu0 0
        %4005 = vmatpush1.bf16.msra.mxu0 0
        %4006 = vmatprep.subr.bf16.mxu0 0
        %4007 = vmatpush1.bf16.msra.mxu0 0
        %4008 = vmatprep.subr.bf16.mxu0 0
        %4009 = vmatpush1.bf16.msra.mxu0 0
        %4010 = vmatprep.subr.bf16.mxu0 0
        %4011 = vmatpush1.bf16.msra.mxu0 0
        %4012 = vmatprep.subr.bf16.mxu0 0
        %4013 = vmatpush1.bf16.msra.mxu0 0
        %4014 = vmatprep.subr.bf16.mxu0 0
        %4015 = vmatpush1.bf16.msra.mxu0 0
        %4016 = vmatprep.subr.bf16.mxu0 0
        %4017 = vmatpush1.bf16.msra.mxu0 0
        %4018 = vmatprep.subr.bf16.mxu0 0
        %4019 = vmatpush1.bf16.msra.mxu0 0
        %4020 = vmatprep.subr.bf16.mxu0 0
        %4021 = vmatpush1.bf16.msra.mxu0 0
        %4022 = vmatprep.subr.bf16.mxu0 0
        %4023 = vmatpush1.bf16.msra.mxu0 0
        %4024 = vmatprep.mubr.bf16.mxu0 0
        %4025 = vmatmul.mubr.bf16.gmra.mrb[0].mxu0 %v3296
        %v4026 = vpop.f32.mrb[0].mxu0
        %v4027 = vadd.f32 0.0, %v4026
        %v4028 = vpop.f32.mrb[0].mxu0
        %v4029 = vpop.f32.mrb[0].mxu0
        %v4030 = vadd.f32 0.0, %v4029
        %v4031 = vpop.f32.mrb[0].mxu0
        %4032 = vdwg.mxu0
        %v4033 = vadd.f32 %v3289, %v4027
        %v4034 = vadd.f32 %v3292, %v4030
        %4035 = vmatprep.subr.bf16.mxu0 0
        %4036 = vmatpush1.bf16.msra.mxu0 %v3988
        %4037 = vmatprep.subr.bf16.mxu0 0
        %4038 = vmatpush1.bf16.msra.mxu0 %v3989
        %4039 = vmatprep.subr.bf16.mxu0 0
        %4040 = vmatpush1.bf16.msra.mxu0 0
        %4041 = vmatprep.subr.bf16.mxu0 0
        %4042 = vmatpush1.bf16.msra.mxu0 0
        %4043 = vmatprep.subr.bf16.mxu0 0
        %4044 = vmatpush1.bf16.msra.mxu0 0
        %4045 = vmatprep.subr.bf16.mxu0 0
        %4046 = vmatpush1.bf16.msra.mxu0 0
        %4047 = vmatprep.subr.bf16.mxu0 0
        %4048 = vmatpush1.bf16.msra.mxu0 0
        %4049 = vmatprep.subr.bf16.mxu0 0
        %4050 = vmatpush1.bf16.msra.mxu0 0
        %4051 = vmatprep.subr.bf16.mxu0 0
        %4052 = vmatpush1.bf16.msra.mxu0 0
        %4053 = vmatprep.subr.bf16.mxu0 0
        %4054 = vmatpush1.bf16.msra.mxu0 0
        %4055 = vmatprep.subr.bf16.mxu0 0
        %4056 = vmatpush1.bf16.msra.mxu0 0
        %4057 = vmatprep.subr.bf16.mxu0 0
        %4058 = vmatpush1.bf16.msra.mxu0 0
        %4059 = vmatprep.subr.bf16.mxu0 0
        %4060 = vmatpush1.bf16.msra.mxu0 0
        %4061 = vmatprep.subr.bf16.mxu0 0
        %4062 = vmatpush1.bf16.msra.mxu0 0
        %4063 = vmatprep.subr.bf16.mxu0 0
        %4064 = vmatpush1.bf16.msra.mxu0 0
        %4065 = vmatprep.subr.bf16.mxu0 0
        %4066 = vmatpush1.bf16.msra.mxu0 0
        %4067 = vmatprep.mubr.bf16.mxu0 0
        %4068 = vmatmul.mubr.bf16.gmra.mrb[0].mxu0 %v3381
        %v4069 = vpop.f32.mrb[0].mxu0
        %v4070 = vadd.f32 0.0, %v4069
        %v4071 = vpop.f32.mrb[0].mxu0
        %v4072 = vpop.f32.mrb[0].mxu0
        %v4073 = vadd.f32 0.0, %v4072
        %v4074 = vpop.f32.mrb[0].mxu0
        %4075 = vdwg.mxu0
        %v4076 = vadd.f32 %v3374, %v4070
        %v4077 = vadd.f32 %v3377, %v4073
        %4078 = vmatprep.subr.bf16.mxu0 0
        %4079 = vmatpush1.bf16.msra.mxu0 %v3988
        %4080 = vmatprep.subr.bf16.mxu0 0
        %4081 = vmatpush1.bf16.msra.mxu0 %v3989
        %4082 = vmatprep.subr.bf16.mxu0 0
        %4083 = vmatpush1.bf16.msra.mxu0 0
        %4084 = vmatprep.subr.bf16.mxu0 0
        %4085 = vmatpush1.bf16.msra.mxu0 0
        %4086 = vmatprep.subr.bf16.mxu0 0
        %4087 = vmatpush1.bf16.msra.mxu0 0
        %4088 = vmatprep.subr.bf16.mxu0 0
        %4089 = vmatpush1.bf16.msra.mxu0 0
        %4090 = vmatprep.subr.bf16.mxu0 0
        %4091 = vmatpush1.bf16.msra.mxu0 0
        %4092 = vmatprep.subr.bf16.mxu0 0
        %4093 = vmatpush1.bf16.msra.mxu0 0
        %4094 = vmatprep.subr.bf16.mxu0 0
        %4095 = vmatpush1.bf16.msra.mxu0 0
        %4096 = vmatprep.subr.bf16.mxu0 0
        %4097 = vmatpush1.bf16.msra.mxu0 0
        %4098 = vmatprep.subr.bf16.mxu0 0
        %4099 = vmatpush1.bf16.msra.mxu0 0
        %4100 = vmatprep.subr.bf16.mxu0 0
        %4101 = vmatpush1.bf16.msra.mxu0 0
        %4102 = vmatprep.subr.bf16.mxu0 0
        %4103 = vmatpush1.bf16.msra.mxu0 0
        %4104 = vmatprep.subr.bf16.mxu0 0
        %4105 = vmatpush1.bf16.msra.mxu0 0
        %4106 = vmatprep.subr.bf16.mxu0 0
        %4107 = vmatpush1.bf16.msra.mxu0 0
        %4108 = vmatprep.subr.bf16.mxu0 0
        %4109 = vmatpush1.bf16.msra.mxu0 0
        %4110 = vmatprep.mubr.bf16.mxu0 0
        %4111 = vmatmul.mubr.bf16.gmra.mrb[0].mxu0 %v3466
        %v4112 = vpop.f32.mrb[0].mxu0
        %v4113 = vadd.f32 0.0, %v4112
        %v4114 = vpop.f32.mrb[0].mxu0
        %v4115 = vpop.f32.mrb[0].mxu0
        %v4116 = vadd.f32 0.0, %v4115
        %v4117 = vpop.f32.mrb[0].mxu0
        %4118 = vdwg.mxu0
        %v4119 = vadd.f32 %v3459, %v4113
        %v4120 = vadd.f32 %v3462, %v4116
        %4121 = vmatprep.subr.bf16.mxu0 0
        %4122 = vmatpush1.bf16.msra.mxu0 %v3988
        %4123 = vmatprep.subr.bf16.mxu0 0
        %4124 = vmatpush1.bf16.msra.mxu0 %v3989
        %4125 = vmatprep.subr.bf16.mxu0 0
        %4126 = vmatpush1.bf16.msra.mxu0 0
        %4127 = vmatprep.subr.bf16.mxu0 0
        %4128 = vmatpush1.bf16.msra.mxu0 0
        %4129 = vmatprep.subr.bf16.mxu0 0
        %4130 = vmatpush1.bf16.msra.mxu0 0
        %4131 = vmatprep.subr.bf16.mxu0 0
        %4132 = vmatpush1.bf16.msra.mxu0 0
        %4133 = vmatprep.subr.bf16.mxu0 0
        %4134 = vmatpush1.bf16.msra.mxu0 0
        %4135 = vmatprep.subr.bf16.mxu0 0
        %4136 = vmatpush1.bf16.msra.mxu0 0
        %4137 = vmatprep.subr.bf16.mxu0 0
        %4138 = vmatpush1.bf16.msra.mxu0 0
        %4139 = vmatprep.subr.bf16.mxu0 0
        %4140 = vmatpush1.bf16.msra.mxu0 0
        %4141 = vmatprep.subr.bf16.mxu0 0
        %4142 = vmatpush1.bf16.msra.mxu0 0
        %4143 = vmatprep.subr.bf16.mxu0 0
        %4144 = vmatpush1.bf16.msra.mxu0 0
        %4145 = vmatprep.subr.bf16.mxu0 0
        %4146 = vmatpush1.bf16.msra.mxu0 0
        %4147 = vmatprep.subr.bf16.mxu0 0
        %4148 = vmatpush1.bf16.msra.mxu0 0
        %4149 = vmatprep.subr.bf16.mxu0 0
        %4150 = vmatpush1.bf16.msra.mxu0 0
        %4151 = vmatprep.subr.bf16.mxu0 0
        %4152 = vmatpush1.bf16.msra.mxu0 0
        %4153 = vmatprep.mubr.bf16.mxu0 0
        %4154 = vmatmul.mubr.bf16.gmra.mrb[0].mxu0 %v3551
        %v4155 = vpop.f32.mrb[0].mxu0
        %v4156 = vadd.f32 0.0, %v4155
        %v4157 = vpop.f32.mrb[0].mxu0
        %v4158 = vpop.f32.mrb[0].mxu0
        %v4159 = vadd.f32 0.0, %v4158
        %v4160 = vpop.f32.mrb[0].mxu0
        %4161 = vdwg.mxu0
        %v4162 = vadd.f32 %v3544, %v4156
        %v4163 = vadd.f32 %v3547, %v4159
        %4164 = vmatprep.subr.bf16.mxu0 0
        %4165 = vmatpush1.bf16.msra.mxu0 %v3988
        %4166 = vmatprep.subr.bf16.mxu0 0
        %4167 = vmatpush1.bf16.msra.mxu0 %v3989
        %4168 = vmatprep.subr.bf16.mxu0 0
        %4169 = vmatpush1.bf16.msra.mxu0 0
        %4170 = vmatprep.subr.bf16.mxu0 0
        %4171 = vmatpush1.bf16.msra.mxu0 0
        %4172 = vmatprep.subr.bf16.mxu0 0
        %4173 = vmatpush1.bf16.msra.mxu0 0
        %4174 = vmatprep.subr.bf16.mxu0 0
        %4175 = vmatpush1.bf16.msra.mxu0 0
        %4176 = vmatprep.subr.bf16.mxu0 0
        %4177 = vmatpush1.bf16.msra.mxu0 0
        %4178 = vmatprep.subr.bf16.mxu0 0
        %4179 = vmatpush1.bf16.msra.mxu0 0
        %4180 = vmatprep.subr.bf16.mxu0 0
        %4181 = vmatpush1.bf16.msra.mxu0 0
        %4182 = vmatprep.subr.bf16.mxu0 0
        %4183 = vmatpush1.bf16.msra.mxu0 0
        %4184 = vmatprep.subr.bf16.mxu0 0
        %4185 = vmatpush1.bf16.msra.mxu0 0
        %4186 = vmatprep.subr.bf16.mxu0 0
        %4187 = vmatpush1.bf16.msra.mxu0 0
        %4188 = vmatprep.subr.bf16.mxu0 0
        %4189 = vmatpush1.bf16.msra.mxu0 0
        %4190 = vmatprep.subr.bf16.mxu0 0
        %4191 = vmatpush1.bf16.msra.mxu0 0
        %4192 = vmatprep.subr.bf16.mxu0 0
        %4193 = vmatpush1.bf16.msra.mxu0 0
        %4194 = vmatprep.subr.bf16.mxu0 0
        %4195 = vmatpush1.bf16.msra.mxu0 0
        %4196 = vmatprep.mubr.bf16.mxu0 0
        %4197 = vmatmul.mubr.bf16.gmra.mrb[0].mxu0 %v3636
        %v4198 = vpop.f32.mrb[0].mxu0
        %v4199 = vadd.f32 0.0, %v4198
        %v4200 = vpop.f32.mrb[0].mxu0
        %v4201 = vpop.f32.mrb[0].mxu0
        %v4202 = vadd.f32 0.0, %v4201
        %v4203 = vpop.f32.mrb[0].mxu0
        %4204 = vdwg.mxu0
        %v4205 = vadd.f32 %v3629, %v4199
        %v4206 = vadd.f32 %v3632, %v4202
        %4207 = vmatprep.subr.bf16.mxu0 0
        %4208 = vmatpush1.bf16.msra.mxu0 %v3988
        %4209 = vmatprep.subr.bf16.mxu0 0
        %4210 = vmatpush1.bf16.msra.mxu0 %v3989
        %4211 = vmatprep.subr.bf16.mxu0 0
        %4212 = vmatpush1.bf16.msra.mxu0 0
        %4213 = vmatprep.subr.bf16.mxu0 0
        %4214 = vmatpush1.bf16.msra.mxu0 0
        %4215 = vmatprep.subr.bf16.mxu0 0
        %4216 = vmatpush1.bf16.msra.mxu0 0
        %4217 = vmatprep.subr.bf16.mxu0 0
        %4218 = vmatpush1.bf16.msra.mxu0 0
        %4219 = vmatprep.subr.bf16.mxu0 0
        %4220 = vmatpush1.bf16.msra.mxu0 0
        %4221 = vmatprep.subr.bf16.mxu0 0
        %4222 = vmatpush1.bf16.msra.mxu0 0
        %4223 = vmatprep.subr.bf16.mxu0 0
        %4224 = vmatpush1.bf16.msra.mxu0 0
        %4225 = vmatprep.subr.bf16.mxu0 0
        %4226 = vmatpush1.bf16.msra.mxu0 0
        %4227 = vmatprep.subr.bf16.mxu0 0
        %4228 = vmatpush1.bf16.msra.mxu0 0
        %4229 = vmatprep.subr.bf16.mxu0 0
        %4230 = vmatpush1.bf16.msra.mxu0 0
        %4231 = vmatprep.subr.bf16.mxu0 0
        %4232 = vmatpush1.bf16.msra.mxu0 0
        %4233 = vmatprep.subr.bf16.mxu0 0
        %4234 = vmatpush1.bf16.msra.mxu0 0
        %4235 = vmatprep.subr.bf16.mxu0 0
        %4236 = vmatpush1.bf16.msra.mxu0 0
        %4237 = vmatprep.subr.bf16.mxu0 0
        %4238 = vmatpush1.bf16.msra.mxu0 0
        %4239 = vmatprep.mubr.bf16.mxu0 0
        %4240 = vmatmul.mubr.bf16.gmra.mrb[0].mxu0 %v3721
        %v4241 = vpop.f32.mrb[0].mxu0
        %v4242 = vadd.f32 0.0, %v4241
        %v4243 = vpop.f32.mrb[0].mxu0
        %v4244 = vpop.f32.mrb[0].mxu0
        %v4245 = vadd.f32 0.0, %v4244
        %v4246 = vpop.f32.mrb[0].mxu0
        %4247 = vdwg.mxu0
        %v4248 = vadd.f32 %v3714, %v4242
        %v4249 = vadd.f32 %v3717, %v4245
        %4250 = vmatprep.subr.bf16.mxu0 0
        %4251 = vmatpush1.bf16.msra.mxu0 %v3988
        %4252 = vmatprep.subr.bf16.mxu0 0
        %4253 = vmatpush1.bf16.msra.mxu0 %v3989
        %4254 = vmatprep.subr.bf16.mxu0 0
        %4255 = vmatpush1.bf16.msra.mxu0 0
        %4256 = vmatprep.subr.bf16.mxu0 0
        %4257 = vmatpush1.bf16.msra.mxu0 0
        %4258 = vmatprep.subr.bf16.mxu0 0
        %4259 = vmatpush1.bf16.msra.mxu0 0
        %4260 = vmatprep.subr.bf16.mxu0 0
        %4261 = vmatpush1.bf16.msra.mxu0 0
        %4262 = vmatprep.subr.bf16.mxu0 0
        %4263 = vmatpush1.bf16.msra.mxu0 0
        %4264 = vmatprep.subr.bf16.mxu0 0
        %4265 = vmatpush1.bf16.msra.mxu0 0
        %4266 = vmatprep.subr.bf16.mxu0 0
        %4267 = vmatpush1.bf16.msra.mxu0 0
        %4268 = vmatprep.subr.bf16.mxu0 0
        %4269 = vmatpush1.bf16.msra.mxu0 0
        %4270 = vmatprep.subr.bf16.mxu0 0
        %4271 = vmatpush1.bf16.msra.mxu0 0
        %4272 = vmatprep.subr.bf16.mxu0 0
        %4273 = vmatpush1.bf16.msra.mxu0 0
        %4274 = vmatprep.subr.bf16.mxu0 0
        %4275 = vmatpush1.bf16.msra.mxu0 0
        %4276 = vmatprep.subr.bf16.mxu0 0
        %4277 = vmatpush1.bf16.msra.mxu0 0
        %4278 = vmatprep.subr.bf16.mxu0 0
        %4279 = vmatpush1.bf16.msra.mxu0 0
        %4280 = vmatprep.subr.bf16.mxu0 0
        %4281 = vmatpush1.bf16.msra.mxu0 0
        %4282 = vmatprep.mubr.bf16.mxu0 0
        %4283 = vmatmul.mubr.bf16.gmra.mrb[0].mxu0 %v3806
        %v4284 = vpop.f32.mrb[0].mxu0
        %v4285 = vadd.f32 0.0, %v4284
        %v4286 = vpop.f32.mrb[0].mxu0
        %v4287 = vpop.f32.mrb[0].mxu0
        %v4288 = vadd.f32 0.0, %v4287
        %v4289 = vpop.f32.mrb[0].mxu0
        %4290 = vdwg.mxu0
        %v4291 = vadd.f32 %v3799, %v4285
        %v4292 = vadd.f32 %v3802, %v4288
        %4293 = vmatprep.subr.bf16.mxu0 0
        %4294 = vmatpush1.bf16.msra.mxu0 %v3988
        %4295 = vmatprep.subr.bf16.mxu0 0
        %4296 = vmatpush1.bf16.msra.mxu0 %v3989
        %4297 = vmatprep.subr.bf16.mxu0 0
        %4298 = vmatpush1.bf16.msra.mxu0 0
        %4299 = vmatprep.subr.bf16.mxu0 0
        %4300 = vmatpush1.bf16.msra.mxu0 0
        %4301 = vmatprep.subr.bf16.mxu0 0
        %4302 = vmatpush1.bf16.msra.mxu0 0
        %4303 = vmatprep.subr.bf16.mxu0 0
        %4304 = vmatpush1.bf16.msra.mxu0 0
        %4305 = vmatprep.subr.bf16.mxu0 0
        %4306 = vmatpush1.bf16.msra.mxu0 0
        %4307 = vmatprep.subr.bf16.mxu0 0
        %4308 = vmatpush1.bf16.msra.mxu0 0
        %4309 = vmatprep.subr.bf16.mxu0 0
        %4310 = vmatpush1.bf16.msra.mxu0 0
        %4311 = vmatprep.subr.bf16.mxu0 0
        %4312 = vmatpush1.bf16.msra.mxu0 0
        %4313 = vmatprep.subr.bf16.mxu0 0
        %4314 = vmatpush1.bf16.msra.mxu0 0
        %4315 = vmatprep.subr.bf16.mxu0 0
        %4316 = vmatpush1.bf16.msra.mxu0 0
        %4317 = vmatprep.subr.bf16.mxu0 0
        %4318 = vmatpush1.bf16.msra.mxu0 0
        %4319 = vmatprep.subr.bf16.mxu0 0
        %4320 = vmatpush1.bf16.msra.mxu0 0
        %4321 = vmatprep.subr.bf16.mxu0 0
        %4322 = vmatpush1.bf16.msra.mxu0 0
        %4323 = vmatprep.subr.bf16.mxu0 0
        %4324 = vmatpush1.bf16.msra.mxu0 0
        %4325 = vmatprep.mubr.bf16.mxu0 0
        %4326 = vmatmul.mubr.bf16.gmra.mrb[0].mxu0 %v3891
        %v4327 = vpop.f32.mrb[0].mxu0
        %v4328 = vadd.f32 0.0, %v4327
        %v4329 = vpop.f32.mrb[0].mxu0
        %v4330 = vpop.f32.mrb[0].mxu0
        %v4331 = vadd.f32 0.0, %v4330
        %v4332 = vpop.f32.mrb[0].mxu0
        %4333 = vdwg.mxu0
        %v4334 = vadd.f32 %v3884, %v4328
        %v4335 = vadd.f32 %v3887, %v4331
        %v4337 = vsel %vm3194, %v3172, 0
        %4339 = vmatprep.subr.bf16.mxu0 0
        %4340 = vmatpush1.bf16.msra.mxu0 %v3988
        %4341 = vmatprep.subr.bf16.mxu0 0
        %4342 = vmatpush1.bf16.msra.mxu0 %v3989
        %4343 = vmatprep.subr.bf16.mxu0 0
        %4344 = vmatpush1.bf16.msra.mxu0 0
        %4345 = vmatprep.subr.bf16.mxu0 0
        %4346 = vmatpush1.bf16.msra.mxu0 0
        %4347 = vmatprep.subr.bf16.mxu0 0
        %4348 = vmatpush1.bf16.msra.mxu0 0
        %4349 = vmatprep.subr.bf16.mxu0 0
        %4350 = vmatpush1.bf16.msra.mxu0 0
        %4351 = vmatprep.subr.bf16.mxu0 0
        %4352 = vmatpush1.bf16.msra.mxu0 0
        %4353 = vmatprep.subr.bf16.mxu0 0
        %4354 = vmatpush1.bf16.msra.mxu0 0
        %4355 = vmatprep.subr.bf16.mxu0 0
        %4356 = vmatpush1.bf16.msra.mxu0 0
        %4357 = vmatprep.subr.bf16.mxu0 0
        %4358 = vmatpush1.bf16.msra.mxu0 0
        %4359 = vmatprep.subr.bf16.mxu0 0
        %4360 = vmatpush1.bf16.msra.mxu0 0
        %4361 = vmatprep.subr.bf16.mxu0 0
        %4362 = vmatpush1.bf16.msra.mxu0 0
        %4363 = vmatprep.subr.bf16.mxu0 0
        %4364 = vmatpush1.bf16.msra.mxu0 0
        %4365 = vmatprep.subr.bf16.mxu0 0
        %4366 = vmatpush1.bf16.msra.mxu0 0
        %4367 = vmatprep.subr.bf16.mxu0 0
        %4368 = vmatpush1.bf16.msra.mxu0 0
        %4369 = vmatprep.subr.bf16.mxu0 0
        %4370 = vmatpush1.bf16.msra.mxu0 0
        %4371 = vmatprep.mubr.bf16.mxu0 0
        %4372 = vmatmul.mubr.bf16.gmra.mrb[0].mxu0 %v4337
        %v4373 = vpop.f32.mrb[0].mxu0
        %v4374 = vadd.f32 0.0, %v4373
        %v4375 = vpop.f32.mrb[0].mxu0
        %v4376 = vpop.f32.mrb[0].mxu0
        %v4377 = vadd.f32 0.0, %v4376
        %v4378 = vpop.f32.mrb[0].mxu0
        %4379 = vdwg.mxu0
        %v4380 = vadd.f32 %v3969, %v4374
        %v4381 = vadd.f32 %v3972, %v4377
        %v4383 = vlaneseq
        %v4384 = vshrl.u32 %v4383, 7
        %v4385 = vsub.s32 0, %v4384
        %v4386 = vrot.slane %v510, %v4385
        %v4388 = vadd.f32 %v4033, %v4386
        %v4389 = vadd.f32 %v4034, %v4386
        %v4390 = vmax.f32 %v4388, 0.0
        %v4391 = vmax.f32 %v4389, 0.0
        %v4392 = vadd.f32 %v4076, %v4386
        %v4393 = vadd.f32 %v4077, %v4386
        %v4394 = vmax.f32 %v4392, 0.0
        %v4395 = vmax.f32 %v4393, 0.0
        %v4396 = vadd.f32 %v4119, %v4386
        %v4397 = vadd.f32 %v4120, %v4386
        %v4398 = vmax.f32 %v4396, 0.0
        %v4399 = vmax.f32 %v4397, 0.0
        %v4400 = vadd.f32 %v4162, %v4386
        %v4401 = vadd.f32 %v4163, %v4386
        %v4402 = vmax.f32 %v4400, 0.0
        %v4403 = vmax.f32 %v4401, 0.0
        %v4404 = vadd.f32 %v4205, %v4386
        %v4405 = vadd.f32 %v4206, %v4386
        %v4406 = vmax.f32 %v4404, 0.0
        %v4407 = vmax.f32 %v4405, 0.0
        %v4408 = vadd.f32 %v4248, %v4386
        %v4409 = vadd.f32 %v4249, %v4386
        %v4410 = vmax.f32 %v4408, 0.0
        %v4411 = vmax.f32 %v4409, 0.0
        %v4412 = vadd.f32 %v4291, %v4386
        %v4413 = vadd.f32 %v4292, %v4386
        %v4414 = vmax.f32 %v4412, 0.0
        %v4415 = vmax.f32 %v4413, 0.0
        %v4416 = vadd.f32 %v4334, %v4386
        %v4417 = vadd.f32 %v4335, %v4386
        %v4418 = vmax.f32 %v4416, 0.0
        %v4419 = vmax.f32 %v4417, 0.0
        %v4420 = vadd.f32 %v4380, %v4386
        %v4421 = vadd.f32 %v4381, %v4386
        %v4422 = vmax.f32 %v4420, 0.0
        %v4423 = vmax.f32 %v4421, 0.0
        %v4424 = vmax.f32 %v4390, %v4394
        %v4425 = vmax.f32 %v4391, %v4395
        %v4426 = vmax.f32 %v4424, %v4398
        %v4427 = vmax.f32 %v4425, %v4399
        %v4428 = vmax.f32 %v4426, %v4402
        %v4429 = vmax.f32 %v4427, %v4403
        %v4430 = vmax.f32 %v4428, %v4406
        %v4431 = vmax.f32 %v4429, %v4407
        %v4432 = vmax.f32 %v4430, %v4410
        %v4433 = vmax.f32 %v4431, %v4411
        %v4434 = vmax.f32 %v4432, %v4414
        %v4435 = vmax.f32 %v4433, %v4415
        %v4436 = vmax.f32 %v4434, %v4418
        %v4437 = vmax.f32 %v4435, %v4419
        %v4438 = vmax.f32 %v4436, %v4422
        %v4439 = vmax.f32 %v4437, %v4423
        %v4440 = vpack.c.bf16 %v3161, %v3160
        %v4441 = vpack.c.bf16 %v4439, %v4438
        %v4444 = vunpack.c.l.b16 %v515
        %v4445 = vunpack.c.l.b16 %v516
        %v4446 = vpack.c.b16 %v4445, %v4444
        %vm4448 = vcmask 130048
        %v4450 = vsel %vm4448, %v4441, 0
        %4452 = vmatprep.subr.bf16.mxu0 0
        %4453 = vmatpush1.bf16.msra.mxu0 %v4446
        %4454 = vmatprep.subr.bf16.mxu0 0
        %4455 = vmatpush1.bf16.msra.mxu0 0
        %4456 = vmatprep.subr.bf16.mxu0 0
        %4457 = vmatpush1.bf16.msra.mxu0 0
        %4458 = vmatprep.subr.bf16.mxu0 0
        %4459 = vmatpush1.bf16.msra.mxu0 0
        %4460 = vmatprep.subr.bf16.mxu0 0
        %4461 = vmatpush1.bf16.msra.mxu0 0
        %4462 = vmatprep.subr.bf16.mxu0 0
        %4463 = vmatpush1.bf16.msra.mxu0 0
        %4464 = vmatprep.subr.bf16.mxu0 0
        %4465 = vmatpush1.bf16.msra.mxu0 0
        %4466 = vmatprep.subr.bf16.mxu0 0
        %4467 = vmatpush1.bf16.msra.mxu0 0
        %4468 = vmatprep.subr.bf16.mxu0 0
        %4469 = vmatpush1.bf16.msra.mxu0 0
        %4470 = vmatprep.subr.bf16.mxu0 0
        %4471 = vmatpush1.bf16.msra.mxu0 0
        %4472 = vmatprep.subr.bf16.mxu0 0
        %4473 = vmatpush1.bf16.msra.mxu0 0
        %4474 = vmatprep.subr.bf16.mxu0 0
        %4475 = vmatpush1.bf16.msra.mxu0 0
        %4476 = vmatprep.subr.bf16.mxu0 0
        %4477 = vmatpush1.bf16.msra.mxu0 0
        %4478 = vmatprep.subr.bf16.mxu0 0
        %4479 = vmatpush1.bf16.msra.mxu0 0
        %4480 = vmatprep.subr.bf16.mxu0 0
        %4481 = vmatpush1.bf16.msra.mxu0 0
        %4482 = vmatprep.subr.bf16.mxu0 0
        %4483 = vmatpush1.bf16.msra.mxu0 0
        %4484 = vmatprep.mubr.bf16.mxu0 0
        %4485 = vmatmul.mubr.bf16.gmra.mrb[0].mxu0 %v4450
        %v4486 = vpop.f32.mrb[0].mxu0
        %v4487 = vadd.f32 0.0, %v4486
        %v4488 = vpop.f32.mrb[0].mxu0
        %v4489 = vpop.f32.mrb[0].mxu0
        %v4490 = vadd.f32 0.0, %v4489
        %v4491 = vpop.f32.mrb[0].mxu0
        %4492 = vdwg.mxu0
        %v4497 = vunpack.c.l.b16 %v511
        %v4498 = vunpack.c.l.b16 %v512
        %v4499 = vunpack.c.l.b16 %v513
        %v4500 = vunpack.c.l.b16 %v514
        %v4501 = vpack.c.b16 %v4498, %v4497
        %v4502 = vpack.c.b16 %v4500, %v4499
        %v4506 = vsel %vm3194, %v4440, 0
        %4508 = vmatprep.subr.bf16.mxu0 0
        %4509 = vmatpush1.bf16.msra.mxu0 %v4501
        %4510 = vmatprep.subr.bf16.mxu0 0
        %4511 = vmatpush1.bf16.msra.mxu0 %v4502
        %4512 = vmatprep.subr.bf16.mxu0 0
        %4513 = vmatpush1.bf16.msra.mxu0 0
        %4514 = vmatprep.subr.bf16.mxu0 0
        %4515 = vmatpush1.bf16.msra.mxu0 0
        %4516 = vmatprep.subr.bf16.mxu0 0
        %4517 = vmatpush1.bf16.msra.mxu0 0
        %4518 = vmatprep.subr.bf16.mxu0 0
        %4519 = vmatpush1.bf16.msra.mxu0 0
        %4520 = vmatprep.subr.bf16.mxu0 0
        %4521 = vmatpush1.bf16.msra.mxu0 0
        %4522 = vmatprep.subr.bf16.mxu0 0
        %4523 = vmatpush1.bf16.msra.mxu0 0
        %4524 = vmatprep.subr.bf16.mxu0 0
        %4525 = vmatpush1.bf16.msra.mxu0 0
        %4526 = vmatprep.subr.bf16.mxu0 0
        %4527 = vmatpush1.bf16.msra.mxu0 0
        %4528 = vmatprep.subr.bf16.mxu0 0
        %4529 = vmatpush1.bf16.msra.mxu0 0
        %4530 = vmatprep.subr.bf16.mxu0 0
        %4531 = vmatpush1.bf16.msra.mxu0 0
        %4532 = vmatprep.subr.bf16.mxu0 0
        %4533 = vmatpush1.bf16.msra.mxu0 0
        %4534 = vmatprep.subr.bf16.mxu0 0
        %4535 = vmatpush1.bf16.msra.mxu0 0
        %4536 = vmatprep.subr.bf16.mxu0 0
        %4537 = vmatpush1.bf16.msra.mxu0 0
        %4538 = vmatprep.subr.bf16.mxu0 0
        %4539 = vmatpush1.bf16.msra.mxu0 0
        %4540 = vmatprep.mubr.bf16.mxu0 0
        %4541 = vmatmul.mubr.bf16.gmra.mrb[0].mxu0 %v4506
        %v4542 = vpop.f32.mrb[0].mxu0
        %v4543 = vadd.f32 %v4487, %v4542
        %v4544 = vpop.f32.mrb[0].mxu0
        %v4545 = vpop.f32.mrb[0].mxu0
        %v4546 = vadd.f32 %v4490, %v4545
        %v4547 = vpop.f32.mrb[0].mxu0
        %4548 = vdwg.mxu0
        %v4550 = vlaneseq
        %v4551 = vshrl.u32 %v4550, 7
        %v4552 = vsub.s32 0, %v4551
        %v4553 = vrot.slane %v517, %v4552
        %v4555 = vadd.f32 %v4543, %v4553
        %v4556 = vadd.f32 %v4546, %v4553
        %vm4557 = vcmask 15360
        %4558 = vst.msk [vmem:[%s502] sm:$0xff] %vm4557, %v4555
        %4559 = vst.msk [vmem:[%s502 + $0x8] sm:$0xff] %vm4557, %v4556
        %s4560 = smul.u32 2, %s21
        %p4561 = scmp.lt.s32.totalorder %s4560, 7
        %s4562 = scalar_select %p4561, %s4560, 7
        %s4563 = smul.addr %s4562, 8
        %s4564 = scalar_lea.vmem %s10, %s4563
        // Predicated region
        $region102: #{tpu_custom_call.1} parent=96 // pred_check
          %p4565 = pneg %p254
        $region103: #{tpu_custom_call.1} parent=96 // pred_check_branch
          %4567 = sbr.rel (%p4565) target = $region105
        $region104: #{tpu_custom_call.1} parent=96 // pred_region
          %s4568 = smul.u32 2, %s21
        $region105: #{tpu_custom_call.1} parent=96 // pred_fallthru
          _
      $region97: #{tpu_custom_call.1} parent=5 // pred_fallthru
        _
      %p4569 = scmp.le.s32.totalorder 2, %s16
      // Predicated region
      $region106: #{tpu_custom_call.1} parent=5 // pred_check
        %p4570 = pneg %p4569
      $region107: #{tpu_custom_call.1} parent=5 // pred_check_branch
        %4572 = sbr.rel (%p4570) target = $region109
      $region108: #{tpu_custom_call.1} parent=5 // pred_region
        %s4573 = ssub.s32 %s16, 2
        // Predicated region
        $region110: #{tpu_custom_call.1} parent=108 // pred_check
          %p4574 = pneg %p260
        $region111: #{tpu_custom_call.1} parent=108 // pred_check_branch
          %4576 = sbr.rel (%p4574) target = $region113
        $region112: #{tpu_custom_call.1} parent=108 // pred_region
          %s4577 = smul.u32 2, %s22
          %p4578 = scmp.lt.s32.totalorder %s4577, 7
          %s4579 = scalar_select %p4578, %s4577, 7
          %s4580 = smul.addr %s4579, 8
          %s4581 = scalar_lea.vmem %s10, %s4580
        $region113: #{tpu_custom_call.1} parent=108 // pred_fallthru
          _
      $region109: #{tpu_custom_call.1} parent=5 // pred_fallthru
        _
    $region6: #{tpu_custom_call.1} parent=1 // loop_footer
      %s20 = sadd.s32 1, %s16
    $region7: #{tpu_custom_call.1} parent=1 // loop_footer_branch
      %15 = sbr.rel target = $region3
    $region8: #{tpu_custom_call.1} parent=1 // loop_exit
      _

</llo_original>
